<compile_context>
chip_gen: v5e
topology: v5e:2x2
jax: 0.10.0
libtpu: 0.0.40
codegen_flags: <defaults>
</compile_context>

<pallas_src>
import functools

import jax
import jax.numpy as jnp
from jax.experimental import pallas as pl
from jax.experimental.pallas import tpu as pltpu


# ----------------------------------------------------------------------------
# Pallas kernel 1: matmul + bias + (optional) LeakyReLU  -> conv hot path
# ----------------------------------------------------------------------------
def _matmul_bias_act_kernel(x_ref, w_ref, b_ref, o_ref, *, slope):
    # bf16 x bf16 -> f32 accumulate on the MXU; epilogue in f32 on the VPU.
    y = jnp.dot(x_ref[...], w_ref[...], preferred_element_type=jnp.float32)
    y = y + b_ref[...]
    if slope is not None:
        y = jnp.where(y >= 0.0, y, slope * y)
    o_ref[...] = y.astype(o_ref.dtype)


def _pick_tile(m, tm_max):
    """Largest divisor of m that is <= tm_max and sublane-friendly."""
    if m <= tm_max:
        return m
    for tm in range(tm_max, 0, -1):
        if m % tm == 0 and tm % 8 == 0:
            return tm
    return m  # fall back to a single grid step


def matmul_bias_act(x, w, b, slope=None, out_dtype=jnp.float32, tm_max=1024):
    """y = act(x @ w + b); x:(M,K) bf16, w:(K,N) bf16, b:(N,) f32 -> (M,N)."""
    M, K = x.shape
    _, N = w.shape
    tm = _pick_tile(M, tm_max)
    kernel = functools.partial(_matmul_bias_act_kernel, slope=slope)
    return pl.pallas_call(
        kernel,
        out_shape=jax.ShapeDtypeStruct((M, N), out_dtype),
        grid=(M // tm,),
        in_specs=[
            pl.BlockSpec((tm, K), lambda i: (i, 0)),
            pl.BlockSpec((K, N), lambda i: (0, 0)),
            pl.BlockSpec((1, N), lambda i: (0, 0)),
        ],
        out_specs=pl.BlockSpec((tm, N), lambda i: (i, 0)),
        compiler_params=pltpu.CompilerParams(dimension_semantics=("parallel",)),
    )(x, w, b.reshape(1, N).astype(jnp.float32))


def conv2d_nhwc_pallas(x, w, b, stride, pad, slope, out_dtype=jnp.bfloat16):
    """Conv2d on NHWC activations with PyTorch OIHW weights + LeakyReLU.

    im2col in NHWC layout (pure reshape after the strided-slice stack, no
    transpose copies) + Pallas bf16 matmul kernel."""
    Nb, H, W, C = x.shape
    Co, Ci, kh, kw = w.shape
    assert Ci == C
    xp = jnp.pad(x, ((0, 0), (pad, pad), (pad, pad), (0, 0)))
    Ho = (H + 2 * pad - kh) // stride + 1
    Wo = (W + 2 * pad - kw) // stride + 1
    cols = []
    for i in range(kh):
        for j in range(kw):
            cols.append(xp[:, i:i + stride * Ho:stride, j:j + stride * Wo:stride, :])
    patches = jnp.stack(cols, axis=3)                          # (Nb,Ho,Wo,kh*kw,C)
    patches = patches.reshape(Nb * Ho * Wo, kh * kw * C)       # row-major, no copy
    patches = patches.astype(jnp.bfloat16)
    # weight K-order must match patch K-order: (kh, kw, ci)
    w2 = w.transpose(2, 3, 1, 0).reshape(kh * kw * C, Co).astype(jnp.bfloat16)
    y = matmul_bias_act(patches, w2, b, slope=slope, out_dtype=out_dtype)
    return y.reshape(Nb, Ho, Wo, Co)                           # stay NHWC


# ----------------------------------------------------------------------------
# Pallas kernel 2: SAGAN self-attention block (per-batch grid step)
#   - fused [q|k|v] projection (single MXU dot)
#   - transpose-free softmax: scores are computed key-major so
#     r[j, i] = <q_i, k_j> = S[i, j]; softmax over the lane axis (i) gives
#     exactly attention_map[j, i], stored with no NxN transpose, and
#     o = attention_map @ v directly.
#   - optionally fuses the final 4x4 stride-1 conv ("last") as an epilogue
#     VPU reduction over (tokens, channels).
# ----------------------------------------------------------------------------
def _self_attention_kernel(x_ref, wqkv_ref, bqkv_ref, g_ref, *rest,
                           cq, fuse_last):
    if fuse_last:
        w5_ref, b5_ref, out_ref, attn_ref = rest
    else:
        out_ref, attn_ref = rest

    x = x_ref[0]                                                        # (N, C) bf16
    qkv = jnp.dot(x, wqkv_ref[...], preferred_element_type=jnp.float32)
    qkv = qkv + bqkv_ref[...]                                           # f32 epilogue
    q = qkv[:, :cq]
    k = qkv[:, cq:2 * cq]
    v = qkv[:, 2 * cq:]

    # r[j, i] = <q_i, k_j>  (key-major scores); softmax over i (lane axis).
    r = jax.lax.dot_general(k.astype(jnp.bfloat16), q.astype(jnp.bfloat16),
                            (((1,), (1,)), ((), ())),
                            preferred_element_type=jnp.float32)         # (N, N)
    r = r - jnp.max(r, axis=-1, keepdims=True)
    e = jnp.exp(r)
    a = e * pl.reciprocal(jnp.sum(e, axis=-1, keepdims=True), approx=True)
    attn_ref[0] = a                                                     # attention_map

    # o[j, c] = sum_i attention_map[j, i] * v[i, c]
    o = jnp.dot(a.astype(jnp.bfloat16), v.astype(jnp.bfloat16),
                preferred_element_type=jnp.float32)                      # (N, C)
    out = x.astype(jnp.float32) + g_ref[0] * o

    if fuse_last:
        # last conv: full-map 4x4 kernel == elementwise mul + full reduction.
        z = out * w5_ref[...].astype(jnp.float32)                        # (N, C)
        s = jnp.sum(z, axis=1, keepdims=True)                            # (N, 1)
        s = jnp.sum(s, axis=0, keepdims=True)                            # (1, 1)
        out_ref[0] = s + b5_ref[0]
    else:
        out_ref[0] = out.astype(out_ref.dtype)


def self_attention_pallas(x_nhwc, wq, bq, wk, bk, wv, bv, gamma,
                          last_w=None, last_b=None):
    """x_nhwc: (B, H, W, C).

    Returns (out (B,H,W,C) bf16, attention_map (B,N,N) f32), or, when the
    final conv is fused (last_w/last_b given), ((B,1,1) f32, attention_map)."""
    B, H, W, C = x_nhwc.shape
    N = H * W
    Cq = wq.shape[0]
    xf = x_nhwc.reshape(B, N, C).astype(jnp.bfloat16)        # tokens, no transpose

    # 1x1 convs are matmuls over C; fuse the three projections.
    wqkv = jnp.concatenate(
        [wq.reshape(Cq, C).T, wk.reshape(Cq, C).T, wv.reshape(C, C).T],
        axis=1).astype(jnp.bfloat16)                          # (C, 2*Cq + C)
    bqkv = jnp.concatenate([bq, bk, bv]).reshape(1, 2 * Cq + C).astype(jnp.float32)

    fuse_last = last_w is not None
    kernel = functools.partial(_self_attention_kernel, cq=Cq, fuse_last=fuse_last)

    in_specs = [
        pl.BlockSpec((1, N, C), lambda b: (b, 0, 0)),
        pl.BlockSpec((C, 2 * Cq + C), lambda b: (0, 0)),
        pl.BlockSpec((1, 2 * Cq + C), lambda b: (0, 0)),
        pl.BlockSpec(memory_space=pltpu.MemorySpace.SMEM),    # gamma scalar
    ]
    inputs = [xf, wqkv, bqkv, gamma.astype(jnp.float32)]

    if fuse_last:
        assert last_w.shape == (1, C, H, W), (last_w.shape, (1, C, H, W))
        # token-major layout of the 4x4 conv weight: w5_tok[j=h*W+w, c]
        w5_tok = last_w.transpose(0, 2, 3, 1).reshape(N, C).astype(jnp.bfloat16)
        in_specs += [pl.BlockSpec((N, C), lambda b: (0, 0)),
                     pl.BlockSpec(memory_space=pltpu.MemorySpace.SMEM)]
        inputs += [w5_tok, last_b.astype(jnp.float32)]
        out_shape = (jax.ShapeDtypeStruct((B, 1, 1), jnp.float32),
                     jax.ShapeDtypeStruct((B, N, N), jnp.float32))
        out_specs = (pl.BlockSpec((1, 1, 1), lambda b: (b, 0, 0)),
                     pl.BlockSpec((1, N, N), lambda b: (b, 0, 0)))
    else:
        out_shape = (jax.ShapeDtypeStruct((B, N, C), jnp.bfloat16),
                     jax.ShapeDtypeStruct((B, N, N), jnp.float32))
        out_specs = (pl.BlockSpec((1, N, C), lambda b: (b, 0, 0)),
                     pl.BlockSpec((1, N, N), lambda b: (b, 0, 0)))

    out, amap = pl.pallas_call(
        kernel,
        out_shape=out_shape,
        grid=(B,),
        in_specs=in_specs,
        out_specs=out_specs,
        compiler_params=pltpu.CompilerParams(dimension_semantics=("parallel",)),
    )(*inputs)

    if fuse_last:
        return out, amap                                      # (B, 1, 1)
    return out.reshape(B, H, W, C), amap


# ----------------------------------------------------------------------------
# Parameter setup (plain JAX glue)
# ----------------------------------------------------------------------------
def spectral_normalize(w, key, n_iter=1, eps=1e-12):
    """One step of power iteration (same math as nn.utils.spectral_norm)."""
    co = w.shape[0]
    w2 = w.reshape(co, -1)
    u = jax.random.normal(key, (co,), jnp.float32)
    u = u / (jnp.linalg.norm(u) + eps)
    v = None
    for _ in range(n_iter):
        v = w2.T @ u
        v = v / (jnp.linalg.norm(v) + eps)
        u = w2 @ v
        u = u / (jnp.linalg.norm(u) + eps)
    sigma = u @ (w2 @ v)
    return w / sigma


def init_params(key, image_size):
    keys = iter(jax.random.split(key, 40))

    def conv_init(co, ci, kh, kw):
        k1, k2 = next(keys), next(keys)
        fan_in = ci * kh * kw
        w = jax.random.normal(k1, (co, ci, kh, kw), jnp.float32) / jnp.sqrt(fan_in)
        b = 0.05 * jax.random.normal(k2, (co,), jnp.float32)
        return w, b

    c1, c2, c3, c4 = image_size, image_size * 2, image_size * 4, image_size * 8
    P = {}
    for name, (co, ci) in zip(("1", "2", "3", "4"),
                              ((c1, 1), (c2, c1), (c3, c2), (c4, c3))):
        w, b = conv_init(co, ci, 4, 4)
        P["w" + name] = spectral_normalize(w, next(keys))   # spectral_norm layers
        P["b" + name] = b
    for tag, c in (("a1", c3), ("a2", c4)):
        P[tag + "_wq"], P[tag + "_bq"] = conv_init(c // 8, c, 1, 1)
        P[tag + "_wk"], P[tag + "_bk"] = conv_init(c // 8, c, 1, 1)
        P[tag + "_wv"], P[tag + "_bv"] = conv_init(c, c, 1, 1)
        # torch init is zeros; use a nonzero deterministic value so the
        # attention residual branch is actually exercised.
        P[tag + "_gamma"] = jnp.full((1,), 0.1, jnp.float32)
    P["w5"], P["b5"] = conv_init(1, c4, 4, 4)               # `last` (no spectral norm)
    return P


# ----------------------------------------------------------------------------
# Forward pass (Pallas) and pure-JAX reference
# ----------------------------------------------------------------------------
def discriminator_forward(x, P):
    # x is NCHW (torch convention); convert once, stay NHWC end-to-end.
    h = x.transpose(0, 2, 3, 1)
    h = conv2d_nhwc_pallas(h, P["w1"], P["b1"], 2, 1, 0.1)
    h = conv2d_nhwc_pallas(h, P["w2"], P["b2"], 2, 1, 0.1)
    h = conv2d_nhwc_pallas(h, P["w3"], P["b3"], 2, 1, 0.1)
    h, a1 = self_attention_pallas(h, P["a1_wq"], P["a1_bq"], P["a1_wk"],
                                  P["a1_bk"], P["a1_wv"], P["a1_bv"],
                                  P["a1_gamma"])
    h = conv2d_nhwc_pallas(h, P["w4"], P["b4"], 2, 1, 0.1)
    # second attention with the final 4x4 conv fused into its epilogue
    out, a2 = self_attention_pallas(h, P["a2_wq"], P["a2_bq"], P["a2_wk"],
                                    P["a2_bk"], P["a2_wv"], P["a2_bv"],
                                    P["a2_gamma"],
                                    last_w=P["w5"], last_b=P["b5"])
    out = out.reshape(out.shape[0], 1, 1, 1)
    return out, a1, a2


def _ref_conv(x, w, b, stride, pad):
    y = jax.lax.conv_general_dilated(
        x, w, (stride, stride), [(pad, pad), (pad, pad)],
        dimension_numbers=("NCHW", "OIHW", "NCHW"))
    return y + b[None, :, None, None]


def _ref_attn(x, wq, bq, wk, bk, wv, bv, gamma):
    B, C, H, W = x.shape
    N = H * W
    q = _ref_conv(x, wq, bq, 1, 0).reshape(B, -1, N).transpose(0, 2, 1)
    k = _ref_conv(x, wk, bk, 1, 0).reshape(B, -1, N)
    s = jnp.einsum("bnc,bcm->bnm", q, k)
    a_t = jax.nn.softmax(s, axis=-2)
    amap = a_t.transpose(0, 2, 1)
    v = _ref_conv(x, wv, bv, 1, 0).reshape(B, -1, N)
    o = jnp.einsum("bci,bij->bcj", v, a_t).reshape(B, C, H, W)
    return x + gamma * o, amap


def ref_forward(x, P):
    lrelu = lambda y: jnp.where(y >= 0, y, 0.1 * y)
    out = lrelu(_ref_conv(x, P["w1"], P["b1"], 2, 1))
    out = lrelu(_ref_conv(out, P["w2"], P["b2"], 2, 1))
    out = lrelu(_ref_conv(out, P["w3"], P["b3"], 2, 1))
    out, a1 = _ref_attn(out, P["a1_wq"], P["a1_bq"], P["a1_wk"], P["a1_bk"],
                        P["a1_wv"], P["a1_bv"], P["a1_gamma"])
    out = lrelu(_ref_conv(out, P["w4"], P["b4"], 2, 1))
    out, a2 = _ref_attn(out, P["a2_wq"], P["a2_bq"], P["a2_wk"], P["a2_bk"],
                        P["a2_wv"], P["a2_bv"], P["a2_gamma"])
    out = _ref_conv(out, P["w5"], P["b5"], 1, 0)
    return out, a1, a2


if __name__ == "__main__":
    key = jax.random.PRNGKey(0)
    # Small config: image_size=8 -> channels 8/16/32/64.  Input spatial must
    # be 64 so that the final 4x4 stride-1 conv sees a 4x4 feature map.
    image_size = 8
    B = 2
    x = jax.random.normal(jax.random.fold_in(key, 999), (B, 1, 64, 64), jnp.float32)
    P = init_params(key, image_size)

    fwd = jax.jit(discriminator_forward)
    out, a1, a2 = fwd(x, P)
    jax.block_until_ready((out, a1, a2))

    assert out.shape == (B, 1, 1, 1)
    assert a1.shape == (B, 64, 64)
    assert a2.shape == (B, 16, 16)

    ro, r1, r2 = ref_forward(x, P)
    for got, want in ((out, ro), (a1, r1), (a2, r2)):
        got = got.astype(jnp.float32)
        assert bool(jnp.all(jnp.isfinite(got)))
        assert float(jnp.max(jnp.abs(got - want))) < 0.1, "mismatch vs reference"

    print("KERNEL_OK")
</pallas_src>

<mosaic_0001>
module attributes {stable_mosaic.version = 11 : i64} {
  func.func @_matmul_bias_act_kernel(%arg0: i32, %arg1: memref<1024x16xbf16, #tpu.memory_space<vmem>>, %arg2: memref<16x8xbf16, #tpu.memory_space<vmem>>, %arg3: memref<1x8xf32, #tpu.memory_space<vmem>>, %arg4: memref<1024x8xbf16, #tpu.memory_space<vmem>>) attributes {dimension_semantics = [#tpu.dimension_semantics<parallel>], iteration_bounds = array<i64: 2>, scalar_prefetch = 0 : i64, scratch_operands = 0 : i64, tpu.core_type = #tpu.core_type<tc>, window_params = [{transform_indices = @transform_0, window_bounds = array<i64: 1024, 16>}, {pipeline_mode = #tpu.pipeline_mode<synchronous>, transform_indices = @transform_1, window_bounds = array<i64: 16, 8>}, {pipeline_mode = #tpu.pipeline_mode<synchronous>, transform_indices = @transform_2, window_bounds = array<i64: 1, 8>}, {transform_indices = @transform_3, window_bounds = array<i64: 1024, 8>}]} {
    %c0 = arith.constant 0 : index
    %c0_0 = arith.constant 0 : index
    %0 = vector.load %arg1[%c0, %c0_0] : memref<1024x16xbf16, #tpu.memory_space<vmem>>, vector<1024x16xbf16>
    %c0_1 = arith.constant 0 : index
    %c0_2 = arith.constant 0 : index
    %1 = vector.load %arg2[%c0_1, %c0_2] : memref<16x8xbf16, #tpu.memory_space<vmem>>, vector<16x8xbf16>
    %cst = arith.constant dense<0.000000e+00> : vector<1024x8xf32>
    %2 = tpu.matmul %0, %1, %cst {dimension_numbers = #tpu.dot_dimension_numbers<[1], [0], [0], [1], [0, 0, 1, 1], [], []>} : vector<1024x16xbf16>, vector<16x8xbf16>, vector<1024x8xf32> -> vector<1024x8xf32>
    %c0_3 = arith.constant 0 : index
    %c0_4 = arith.constant 0 : index
    %3 = vector.load %arg3[%c0_3, %c0_4] : memref<1x8xf32, #tpu.memory_space<vmem>>, vector<1x8xf32>
    %4 = vector.broadcast %3 : vector<1x8xf32> to vector<1024x8xf32>
    %5 = arith.addf %2, %4 : vector<1024x8xf32>
    %cst_5 = arith.constant 0.000000e+00 : f32
    %6 = vector.broadcast %cst_5 : f32 to vector<1024x8xf32>
    %7 = arith.cmpf oge, %5, %6 : vector<1024x8xf32>
    %cst_6 = arith.constant 1.000000e-01 : f32
    %8 = vector.broadcast %cst_6 : f32 to vector<1024x8xf32>
    %9 = arith.mulf %8, %5 : vector<1024x8xf32>
    %10 = arith.select %7, %5, %9 : vector<1024x8xi1>, vector<1024x8xf32>
    %11 = arith.truncf %10 : vector<1024x8xf32> to vector<1024x8xbf16>
    %c0_7 = arith.constant 0 : index
    %c0_8 = arith.constant 0 : index
    %12 = vector.load %arg4[%c0_7, %c0_8] : memref<1024x8xbf16, #tpu.memory_space<vmem>>, vector<1024x8xbf16>
    tpu.vector_store %arg4[%c0_7, %c0_8], %11 {strides = array<i32>} : memref<1024x8xbf16, #tpu.memory_space<vmem>>, vector<1024x8xbf16>,
    return
  }
  func.func @transform_0(%arg0: i32) -> (i32, i32) {
    %c0_i32 = arith.constant 0 : i32
    %c0_i32_0 = arith.constant 0 : i32
    return %arg0, %c0_i32 : i32, i32
  }
  func.func @transform_1(%arg0: i32) -> (i32, i32) {
    %c0_i32 = arith.constant 0 : i32
    %c0_i32_0 = arith.constant 0 : i32
    %c0_i32_1 = arith.constant 0 : i32
    return %c0_i32, %c0_i32_0 : i32, i32
  }
  func.func @transform_2(%arg0: i32) -> (i32, i32) {
    %c0_i32 = arith.constant 0 : i32
    %c0_i32_0 = arith.constant 0 : i32
    %c0_i32_1 = arith.constant 0 : i32
    return %c0_i32, %c0_i32_0 : i32, i32
  }
  func.func @transform_3(%arg0: i32) -> (i32, i32) {
    %c0_i32 = arith.constant 0 : i32
    %c0_i32_0 = arith.constant 0 : i32
    return %arg0, %c0_i32 : i32, i32
  }
}

module attributes {stable_mosaic.version = 11 : i64} {
  func.func @_matmul_bias_act_kernel(%arg0: i32, %arg1: memref<512x128xbf16, #tpu.memory_space<vmem>>, %arg2: memref<128x16xbf16, #tpu.memory_space<vmem>>, %arg3: memref<1x16xf32, #tpu.memory_space<vmem>>, %arg4: memref<512x16xbf16, #tpu.memory_space<vmem>>) attributes {dimension_semantics = [#tpu.dimension_semantics<parallel>], iteration_bounds = array<i64: 1>, scalar_prefetch = 0 : i64, scratch_operands = 0 : i64, tpu.core_type = #tpu.core_type<tc>, window_params = [{transform_indices = @transform_0, window_bounds = array<i64: 512, 128>}, {pipeline_mode = #tpu.pipeline_mode<synchronous>, transform_indices = @transform_1, window_bounds = array<i64: 128, 16>}, {pipeline_mode = #tpu.pipeline_mode<synchronous>, transform_indices = @transform_2, window_bounds = array<i64: 1, 16>}, {transform_indices = @transform_3, window_bounds = array<i64: 512, 16>}]} {
    %c0 = arith.constant 0 : index
    %c0_0 = arith.constant 0 : index
    %0 = vector.load %arg1[%c0, %c0_0] : memref<512x128xbf16, #tpu.memory_space<vmem>>, vector<512x128xbf16>
    %c0_1 = arith.constant 0 : index
    %c0_2 = arith.constant 0 : index
    %1 = vector.load %arg2[%c0_1, %c0_2] : memref<128x16xbf16, #tpu.memory_space<vmem>>, vector<128x16xbf16>
    %cst = arith.constant dense<0.000000e+00> : vector<512x16xf32>
    %2 = tpu.matmul %0, %1, %cst {dimension_numbers = #tpu.dot_dimension_numbers<[1], [0], [0], [1], [0, 0, 1, 1], [], []>} : vector<512x128xbf16>, vector<128x16xbf16>, vector<512x16xf32> -> vector<512x16xf32>
    %c0_3 = arith.constant 0 : index
    %c0_4 = arith.constant 0 : index
    %3 = vector.load %arg3[%c0_3, %c0_4] : memref<1x16xf32, #tpu.memory_space<vmem>>, vector<1x16xf32>
    %4 = vector.broadcast %3 : vector<1x16xf32> to vector<512x16xf32>
    %5 = arith.addf %2, %4 : vector<512x16xf32>
    %cst_5 = arith.constant 0.000000e+00 : f32
    %6 = vector.broadcast %cst_5 : f32 to vector<512x16xf32>
    %7 = arith.cmpf oge, %5, %6 : vector<512x16xf32>
    %cst_6 = arith.constant 1.000000e-01 : f32
    %8 = vector.broadcast %cst_6 : f32 to vector<512x16xf32>
    %9 = arith.mulf %8, %5 : vector<512x16xf32>
    %10 = arith.select %7, %5, %9 : vector<512x16xi1>, vector<512x16xf32>
    %11 = arith.truncf %10 : vector<512x16xf32> to vector<512x16xbf16>
    %c0_7 = arith.constant 0 : index
    %c0_8 = arith.constant 0 : index
    %12 = vector.load %arg4[%c0_7, %c0_8] : memref<512x16xbf16, #tpu.memory_space<vmem>>, vector<512x16xbf16>
    tpu.vector_store %arg4[%c0_7, %c0_8], %11 {strides = array<i32>} : memref<512x16xbf16, #tpu.memory_space<vmem>>, vector<512x16xbf16>,
    return
  }
  func.func @transform_0(%arg0: i32) -> (i32, i32) {
    %c0_i32 = arith.constant 0 : i32
    %c0_i32_0 = arith.constant 0 : i32
    return %arg0, %c0_i32 : i32, i32
  }
  func.func @transform_1(%arg0: i32) -> (i32, i32) {
    %c0_i32 = arith.constant 0 : i32
    %c0_i32_0 = arith.constant 0 : i32
    %c0_i32_1 = arith.constant 0 : i32
    return %c0_i32, %c0_i32_0 : i32, i32
  }
  func.func @transform_2(%arg0: i32) -> (i32, i32) {
    %c0_i32 = arith.constant 0 : i32
    %c0_i32_0 = arith.constant 0 : i32
    %c0_i32_1 = arith.constant 0 : i32
    return %c0_i32, %c0_i32_0 : i32, i32
  }
  func.func @transform_3(%arg0: i32) -> (i32, i32) {
    %c0_i32 = arith.constant 0 : i32
    %c0_i32_0 = arith.constant 0 : i32
    return %arg0, %c0_i32 : i32, i32
  }
}

module attributes {stable_mosaic.version = 11 : i64} {
  func.func @_matmul_bias_act_kernel(%arg0: i32, %arg1: memref<128x256xbf16, #tpu.memory_space<vmem>>, %arg2: memref<256x32xbf16, #tpu.memory_space<vmem>>, %arg3: memref<1x32xf32, #tpu.memory_space<vmem>>, %arg4: memref<128x32xbf16, #tpu.memory_space<vmem>>) attributes {dimension_semantics = [#tpu.dimension_semantics<parallel>], iteration_bounds = array<i64: 1>, scalar_prefetch = 0 : i64, scratch_operands = 0 : i64, tpu.core_type = #tpu.core_type<tc>, window_params = [{transform_indices = @transform_0, window_bounds = array<i64: 128, 256>}, {pipeline_mode = #tpu.pipeline_mode<synchronous>, transform_indices = @transform_1, window_bounds = array<i64: 256, 32>}, {pipeline_mode = #tpu.pipeline_mode<synchronous>, transform_indices = @transform_2, window_bounds = array<i64: 1, 32>}, {transform_indices = @transform_3, window_bounds = array<i64: 128, 32>}]} {
    %c0 = arith.constant 0 : index
    %c0_0 = arith.constant 0 : index
    %0 = vector.load %arg1[%c0, %c0_0] : memref<128x256xbf16, #tpu.memory_space<vmem>>, vector<128x256xbf16>
    %c0_1 = arith.constant 0 : index
    %c0_2 = arith.constant 0 : index
    %1 = vector.load %arg2[%c0_1, %c0_2] : memref<256x32xbf16, #tpu.memory_space<vmem>>, vector<256x32xbf16>
    %cst = arith.constant dense<0.000000e+00> : vector<128x32xf32>
    %2 = tpu.matmul %0, %1, %cst {dimension_numbers = #tpu.dot_dimension_numbers<[1], [0], [0], [1], [0, 0, 1, 1], [], []>} : vector<128x256xbf16>, vector<256x32xbf16>, vector<128x32xf32> -> vector<128x32xf32>
    %c0_3 = arith.constant 0 : index
    %c0_4 = arith.constant 0 : index
    %3 = vector.load %arg3[%c0_3, %c0_4] : memref<1x32xf32, #tpu.memory_space<vmem>>, vector<1x32xf32>
    %4 = vector.broadcast %3 : vector<1x32xf32> to vector<128x32xf32>
    %5 = arith.addf %2, %4 : vector<128x32xf32>
    %cst_5 = arith.constant 0.000000e+00 : f32
    %6 = vector.broadcast %cst_5 : f32 to vector<128x32xf32>
    %7 = arith.cmpf oge, %5, %6 : vector<128x32xf32>
    %cst_6 = arith.constant 1.000000e-01 : f32
    %8 = vector.broadcast %cst_6 : f32 to vector<128x32xf32>
    %9 = arith.mulf %8, %5 : vector<128x32xf32>
    %10 = arith.select %7, %5, %9 : vector<128x32xi1>, vector<128x32xf32>
    %11 = arith.truncf %10 : vector<128x32xf32> to vector<128x32xbf16>
    %c0_7 = arith.constant 0 : index
    %c0_8 = arith.constant 0 : index
    %12 = vector.load %arg4[%c0_7, %c0_8] : memref<128x32xbf16, #tpu.memory_space<vmem>>, vector<128x32xbf16>
    tpu.vector_store %arg4[%c0_7, %c0_8], %11 {strides = array<i32>} : memref<128x32xbf16, #tpu.memory_space<vmem>>, vector<128x32xbf16>,
    return
  }
  func.func @transform_0(%arg0: i32) -> (i32, i32) {
    %c0_i32 = arith.constant 0 : i32
    %c0_i32_0 = arith.constant 0 : i32
    return %arg0, %c0_i32 : i32, i32
  }
  func.func @transform_1(%arg0: i32) -> (i32, i32) {
    %c0_i32 = arith.constant 0 : i32
    %c0_i32_0 = arith.constant 0 : i32
    %c0_i32_1 = arith.constant 0 : i32
    return %c0_i32, %c0_i32_0 : i32, i32
  }
  func.func @transform_2(%arg0: i32) -> (i32, i32) {
    %c0_i32 = arith.constant 0 : i32
    %c0_i32_0 = arith.constant 0 : i32
    %c0_i32_1 = arith.constant 0 : i32
    return %c0_i32, %c0_i32_0 : i32, i32
  }
  func.func @transform_3(%arg0: i32) -> (i32, i32) {
    %c0_i32 = arith.constant 0 : i32
    %c0_i32_0 = arith.constant 0 : i32
    return %arg0, %c0_i32 : i32, i32
  }
}

module attributes {stable_mosaic.version = 11 : i64} {
  func.func @_self_attention_kernel(%arg0: i32, %arg1: memref<1x64x32xbf16, #tpu.memory_space<vmem>>, %arg2: memref<32x40xbf16, #tpu.memory_space<vmem>>, %arg3: memref<1x40xf32, #tpu.memory_space<vmem>>, %arg4: memref<1xf32, #tpu.memory_space<smem>>, %arg5: memref<1x64x32xbf16, #tpu.memory_space<vmem>>, %arg6: memref<1x64x64xf32, #tpu.memory_space<vmem>>) attributes {dimension_semantics = [#tpu.dimension_semantics<parallel>], iteration_bounds = array<i64: 2>, scalar_prefetch = 0 : i64, scratch_operands = 0 : i64, tpu.core_type = #tpu.core_type<tc>, window_params = [{transform_indices = @transform_0, window_bounds = array<i64: 1, 64, 32>}, {pipeline_mode = #tpu.pipeline_mode<synchronous>, transform_indices = @transform_1, window_bounds = array<i64: 32, 40>}, {pipeline_mode = #tpu.pipeline_mode<synchronous>, transform_indices = @transform_2, window_bounds = array<i64: 1, 40>}, {transform_indices = @transform_3, window_bounds = array<i64: 1>}, {transform_indices = @transform_4, window_bounds = array<i64: 1, 64, 32>}, {transform_indices = @transform_5, window_bounds = array<i64: 1, 64, 64>}]} {
    %c0 = arith.constant 0 : index
    %c0_0 = arith.constant 0 : index
    %c0_1 = arith.constant 0 : index
    %0 = vector.load %arg1[%c0, %c0_0, %c0_1] : memref<1x64x32xbf16, #tpu.memory_space<vmem>>, vector<1x64x32xbf16>
    %1 = vector.shape_cast %0 : vector<1x64x32xbf16> to vector<64x32xbf16>
    %c0_2 = arith.constant 0 : index
    %c0_3 = arith.constant 0 : index
    %2 = vector.load %arg2[%c0_2, %c0_3] : memref<32x40xbf16, #tpu.memory_space<vmem>>, vector<32x40xbf16>
    %cst = arith.constant dense<0.000000e+00> : vector<64x40xf32>
    %3 = tpu.matmul %1, %2, %cst {dimension_numbers = #tpu.dot_dimension_numbers<[1], [0], [0], [1], [0, 0, 1, 1], [], []>} : vector<64x32xbf16>, vector<32x40xbf16>, vector<64x40xf32> -> vector<64x40xf32>
    %c0_4 = arith.constant 0 : index
    %c0_5 = arith.constant 0 : index
    %4 = vector.load %arg3[%c0_4, %c0_5] : memref<1x40xf32, #tpu.memory_space<vmem>>, vector<1x40xf32>
    %5 = vector.broadcast %4 : vector<1x40xf32> to vector<64x40xf32>
    %6 = arith.addf %3, %5 : vector<64x40xf32>
    %7 = vector.extract_strided_slice %6 {offsets = [0, 0], sizes = [64, 4], strides = [1, 1]} : vector<64x40xf32> to vector<64x4xf32>
    %8 = vector.extract_strided_slice %6 {offsets = [0, 4], sizes = [64, 4], strides = [1, 1]} : vector<64x40xf32> to vector<64x4xf32>
    %9 = vector.extract_strided_slice %6 {offsets = [0, 8], sizes = [64, 32], strides = [1, 1]} : vector<64x40xf32> to vector<64x32xf32>
    %10 = arith.truncf %8 : vector<64x4xf32> to vector<64x4xbf16>
    %11 = arith.truncf %7 : vector<64x4xf32> to vector<64x4xbf16>
    %cst_6 = arith.constant dense<0.000000e+00> : vector<64x64xf32>
    %12 = tpu.matmul %10, %11, %cst_6 {dimension_numbers = #tpu.dot_dimension_numbers<[1], [1], [0], [0], [0, 0, 1, 0], [], []>} : vector<64x4xbf16>, vector<64x4xbf16>, vector<64x64xf32> -> vector<64x64xf32>
    %cst_7 = arith.constant dense<0xFF800000> : vector<64xf32>
    %13 = vector.multi_reduction <maximumf>, %12, %cst_7 [1] : vector<64x64xf32> to vector<64xf32>
    %14 = vector.shape_cast %13 : vector<64xf32> to vector<64x1xf32>
    %15 = vector.broadcast %14 : vector<64x1xf32> to vector<64x64xf32>
    %16 = arith.subf %12, %15 : vector<64x64xf32>
    %17 = math.exp %16 : vector<64x64xf32>
    %cst_8 = arith.constant dense<0.000000e+00> : vector<64xf32>
    %18 = vector.multi_reduction <add>, %17, %cst_8 [1] : vector<64x64xf32> to vector<64xf32>
    %19 = vector.shape_cast %18 : vector<64xf32> to vector<64x1xf32>
    %20 = tpu.reciprocal %19 {approx = true} : vector<64x1xf32> -> vector<64x1xf32>
    %21 = vector.broadcast %20 : vector<64x1xf32> to vector<64x64xf32>
    %22 = arith.mulf %17, %21 : vector<64x64xf32>
    %c0_9 = arith.constant 0 : index
    %c0_10 = arith.constant 0 : index
    %c0_11 = arith.constant 0 : index
    %23 = vector.load %arg6[%c0_9, %c0_10, %c0_11] : memref<1x64x64xf32, #tpu.memory_space<vmem>>, vector<1x64x64xf32>
    %24 = vector.shape_cast %23 : vector<1x64x64xf32> to vector<64x64xf32>
    %25 = vector.shape_cast %22 : vector<64x64xf32> to vector<1x64x64xf32>
    tpu.vector_store %arg6[%c0_9, %c0_10, %c0_11], %25 {strides = array<i32>} : memref<1x64x64xf32, #tpu.memory_space<vmem>>, vector<1x64x64xf32>,
    %26 = arith.truncf %22 : vector<64x64xf32> to vector<64x64xbf16>
    %27 = arith.truncf %9 : vector<64x32xf32> to vector<64x32xbf16>
    %cst_12 = arith.constant dense<0.000000e+00> : vector<64x32xf32>
    %28 = tpu.matmul %26, %27, %cst_12 {dimension_numbers = #tpu.dot_dimension_numbers<[1], [0], [0], [1], [0, 0, 1, 1], [], []>} : vector<64x64xbf16>, vector<64x32xbf16>, vector<64x32xf32> -> vector<64x32xf32>
    %29 = arith.extf %1 : vector<64x32xbf16> to vector<64x32xf32>
    %c0_13 = arith.constant 0 : index
    %30 = memref.load %arg4[%c0_13] : memref<1xf32, #tpu.memory_space<smem>>
    %31 = vector.broadcast %30 : f32 to vector<64x32xf32>
    %32 = arith.mulf %31, %28 : vector<64x32xf32>
    %33 = arith.addf %29, %32 : vector<64x32xf32>
    %34 = arith.truncf %33 : vector<64x32xf32> to vector<64x32xbf16>
    %c0_14 = arith.constant 0 : index
    %c0_15 = arith.constant 0 : index
    %c0_16 = arith.constant 0 : index
    %35 = vector.load %arg5[%c0_14, %c0_15, %c0_16] : memref<1x64x32xbf16, #tpu.memory_space<vmem>>, vector<1x64x32xbf16>
    %36 = vector.shape_cast %35 : vector<1x64x32xbf16> to vector<64x32xbf16>
    %37 = vector.shape_cast %34 : vector<64x32xbf16> to vector<1x64x32xbf16>
    tpu.vector_store %arg5[%c0_14, %c0_15, %c0_16], %37 {strides = array<i32>} : memref<1x64x32xbf16, #tpu.memory_space<vmem>>, vector<1x64x32xbf16>,
    return
  }
  func.func @transform_0(%arg0: i32) -> (i32, i32, i32) {
    %c0_i32 = arith.constant 0 : i32
    %c0_i32_0 = arith.constant 0 : i32
    %c0_i32_1 = arith.constant 0 : i32
    return %arg0, %c0_i32, %c0_i32_0 : i32, i32, i32
  }
  func.func @transform_1(%arg0: i32) -> (i32, i32) {
    %c0_i32 = arith.constant 0 : i32
    %c0_i32_0 = arith.constant 0 : i32
    %c0_i32_1 = arith.constant 0 : i32
    return %c0_i32, %c0_i32_0 : i32, i32
  }
  func.func @transform_2(%arg0: i32) -> (i32, i32) {
    %c0_i32 = arith.constant 0 : i32
    %c0_i32_0 = arith.constant 0 : i32
    %c0_i32_1 = arith.constant 0 : i32
    return %c0_i32, %c0_i32_0 : i32, i32
  }
  func.func @transform_3(%arg0: i32) -> i32 {
    %c0_i32 = arith.constant 0 : i32
    %c0_i32_0 = arith.constant 0 : i32
    return %c0_i32 : i32
  }
  func.func @transform_4(%arg0: i32) -> (i32, i32, i32) {
    %c0_i32 = arith.constant 0 : i32
    %c0_i32_0 = arith.constant 0 : i32
    %c0_i32_1 = arith.constant 0 : i32
    return %arg0, %c0_i32, %c0_i32_0 : i32, i32, i32
  }
  func.func @transform_5(%arg0: i32) -> (i32, i32, i32) {
    %c0_i32 = arith.constant 0 : i32
    %c0_i32_0 = arith.constant 0 : i32
    %c0_i32_1 = arith.constant 0 : i32
    return %arg0, %c0_i32, %c0_i32_0 : i32, i32, i32
  }
}

module attributes {stable_mosaic.version = 11 : i64} {
  func.func @_matmul_bias_act_kernel(%arg0: i32, %arg1: memref<32x512xbf16, #tpu.memory_space<vmem>>, %arg2: memref<512x64xbf16, #tpu.memory_space<vmem>>, %arg3: memref<1x64xf32, #tpu.memory_space<vmem>>, %arg4: memref<32x64xbf16, #tpu.memory_space<vmem>>) attributes {dimension_semantics = [#tpu.dimension_semantics<parallel>], iteration_bounds = array<i64: 1>, scalar_prefetch = 0 : i64, scratch_operands = 0 : i64, tpu.core_type = #tpu.core_type<tc>, window_params = [{transform_indices = @transform_0, window_bounds = array<i64: 32, 512>}, {pipeline_mode = #tpu.pipeline_mode<synchronous>, transform_indices = @transform_1, window_bounds = array<i64: 512, 64>}, {pipeline_mode = #tpu.pipeline_mode<synchronous>, transform_indices = @transform_2, window_bounds = array<i64: 1, 64>}, {transform_indices = @transform_3, window_bounds = array<i64: 32, 64>}]} {
    %c0 = arith.constant 0 : index
    %c0_0 = arith.constant 0 : index
    %0 = vector.load %arg1[%c0, %c0_0] : memref<32x512xbf16, #tpu.memory_space<vmem>>, vector<32x512xbf16>
    %c0_1 = arith.constant 0 : index
    %c0_2 = arith.constant 0 : index
    %1 = vector.load %arg2[%c0_1, %c0_2] : memref<512x64xbf16, #tpu.memory_space<vmem>>, vector<512x64xbf16>
    %cst = arith.constant dense<0.000000e+00> : vector<32x64xf32>
    %2 = tpu.matmul %0, %1, %cst {dimension_numbers = #tpu.dot_dimension_numbers<[1], [0], [0], [1], [0, 0, 1, 1], [], []>} : vector<32x512xbf16>, vector<512x64xbf16>, vector<32x64xf32> -> vector<32x64xf32>
    %c0_3 = arith.constant 0 : index
    %c0_4 = arith.constant 0 : index
    %3 = vector.load %arg3[%c0_3, %c0_4] : memref<1x64xf32, #tpu.memory_space<vmem>>, vector<1x64xf32>
    %4 = vector.broadcast %3 : vector<1x64xf32> to vector<32x64xf32>
    %5 = arith.addf %2, %4 : vector<32x64xf32>
    %cst_5 = arith.constant 0.000000e+00 : f32
    %6 = vector.broadcast %cst_5 : f32 to vector<32x64xf32>
    %7 = arith.cmpf oge, %5, %6 : vector<32x64xf32>
    %cst_6 = arith.constant 1.000000e-01 : f32
    %8 = vector.broadcast %cst_6 : f32 to vector<32x64xf32>
    %9 = arith.mulf %8, %5 : vector<32x64xf32>
    %10 = arith.select %7, %5, %9 : vector<32x64xi1>, vector<32x64xf32>
    %11 = arith.truncf %10 : vector<32x64xf32> to vector<32x64xbf16>
    %c0_7 = arith.constant 0 : index
    %c0_8 = arith.constant 0 : index
    %12 = vector.load %arg4[%c0_7, %c0_8] : memref<32x64xbf16, #tpu.memory_space<vmem>>, vector<32x64xbf16>
    tpu.vector_store %arg4[%c0_7, %c0_8], %11 {strides = array<i32>} : memref<32x64xbf16, #tpu.memory_space<vmem>>, vector<32x64xbf16>,
    return
  }
  func.func @transform_0(%arg0: i32) -> (i32, i32) {
    %c0_i32 = arith.constant 0 : i32
    %c0_i32_0 = arith.constant 0 : i32
    return %arg0, %c0_i32 : i32, i32
  }
  func.func @transform_1(%arg0: i32) -> (i32, i32) {
    %c0_i32 = arith.constant 0 : i32
    %c0_i32_0 = arith.constant 0 : i32
    %c0_i32_1 = arith.constant 0 : i32
    return %c0_i32, %c0_i32_0 : i32, i32
  }
  func.func @transform_2(%arg0: i32) -> (i32, i32) {
    %c0_i32 = arith.constant 0 : i32
    %c0_i32_0 = arith.constant 0 : i32
    %c0_i32_1 = arith.constant 0 : i32
    return %c0_i32, %c0_i32_0 : i32, i32
  }
  func.func @transform_3(%arg0: i32) -> (i32, i32) {
    %c0_i32 = arith.constant 0 : i32
    %c0_i32_0 = arith.constant 0 : i32
    return %arg0, %c0_i32 : i32, i32
  }
}

module attributes {stable_mosaic.version = 11 : i64} {
  func.func @_self_attention_kernel(%arg0: i32, %arg1: memref<1x16x64xbf16, #tpu.memory_space<vmem>>, %arg2: memref<64x80xbf16, #tpu.memory_space<vmem>>, %arg3: memref<1x80xf32, #tpu.memory_space<vmem>>, %arg4: memref<1xf32, #tpu.memory_space<smem>>, %arg5: memref<16x64xbf16, #tpu.memory_space<vmem>>, %arg6: memref<1xf32, #tpu.memory_space<smem>>, %arg7: memref<1x1x1xf32, #tpu.memory_space<vmem>>, %arg8: memref<1x16x16xf32, #tpu.memory_space<vmem>>) attributes {dimension_semantics = [#tpu.dimension_semantics<parallel>], iteration_bounds = array<i64: 2>, scalar_prefetch = 0 : i64, scratch_operands = 0 : i64, tpu.core_type = #tpu.core_type<tc>, window_params = [{transform_indices = @transform_0, window_bounds = array<i64: 1, 16, 64>}, {pipeline_mode = #tpu.pipeline_mode<synchronous>, transform_indices = @transform_1, window_bounds = array<i64: 64, 80>}, {pipeline_mode = #tpu.pipeline_mode<synchronous>, transform_indices = @transform_2, window_bounds = array<i64: 1, 80>}, {transform_indices = @transform_3, window_bounds = array<i64: 1>}, {pipeline_mode = #tpu.pipeline_mode<synchronous>, transform_indices = @transform_4, window_bounds = array<i64: 16, 64>}, {transform_indices = @transform_5, window_bounds = array<i64: 1>}, {transform_indices = @transform_6, window_bounds = array<i64: 1, 1, 1>}, {transform_indices = @transform_7, window_bounds = array<i64: 1, 16, 16>}]} {
    %c0 = arith.constant 0 : index
    %c0_0 = arith.constant 0 : index
    %c0_1 = arith.constant 0 : index
    %0 = vector.load %arg1[%c0, %c0_0, %c0_1] : memref<1x16x64xbf16, #tpu.memory_space<vmem>>, vector<1x16x64xbf16>
    %1 = vector.shape_cast %0 : vector<1x16x64xbf16> to vector<16x64xbf16>
    %c0_2 = arith.constant 0 : index
    %c0_3 = arith.constant 0 : index
    %2 = vector.load %arg2[%c0_2, %c0_3] : memref<64x80xbf16, #tpu.memory_space<vmem>>, vector<64x80xbf16>
    %cst = arith.constant dense<0.000000e+00> : vector<16x80xf32>
    %3 = tpu.matmul %1, %2, %cst {dimension_numbers = #tpu.dot_dimension_numbers<[1], [0], [0], [1], [0, 0, 1, 1], [], []>} : vector<16x64xbf16>, vector<64x80xbf16>, vector<16x80xf32> -> vector<16x80xf32>
    %c0_4 = arith.constant 0 : index
    %c0_5 = arith.constant 0 : index
    %4 = vector.load %arg3[%c0_4, %c0_5] : memref<1x80xf32, #tpu.memory_space<vmem>>, vector<1x80xf32>
    %5 = vector.broadcast %4 : vector<1x80xf32> to vector<16x80xf32>
    %6 = arith.addf %3, %5 : vector<16x80xf32>
    %7 = vector.extract_strided_slice %6 {offsets = [0, 0], sizes = [16, 8], strides = [1, 1]} : vector<16x80xf32> to vector<16x8xf32>
    %8 = vector.extract_strided_slice %6 {offsets = [0, 8], sizes = [16, 8], strides = [1, 1]} : vector<16x80xf32> to vector<16x8xf32>
    %9 = vector.extract_strided_slice %6 {offsets = [0, 16], sizes = [16, 64], strides = [1, 1]} : vector<16x80xf32> to vector<16x64xf32>
    %10 = arith.truncf %8 : vector<16x8xf32> to vector<16x8xbf16>
    %11 = arith.truncf %7 : vector<16x8xf32> to vector<16x8xbf16>
    %cst_6 = arith.constant dense<0.000000e+00> : vector<16x16xf32>
    %12 = tpu.matmul %10, %11, %cst_6 {dimension_numbers = #tpu.dot_dimension_numbers<[1], [1], [0], [0], [0, 0, 1, 0], [], []>} : vector<16x8xbf16>, vector<16x8xbf16>, vector<16x16xf32> -> vector<16x16xf32>
    %cst_7 = arith.constant dense<0xFF800000> : vector<16xf32>
    %13 = vector.multi_reduction <maximumf>, %12, %cst_7 [1] : vector<16x16xf32> to vector<16xf32>
    %14 = vector.shape_cast %13 : vector<16xf32> to vector<16x1xf32>
    %15 = vector.broadcast %14 : vector<16x1xf32> to vector<16x16xf32>
    %16 = arith.subf %12, %15 : vector<16x16xf32>
    %17 = math.exp %16 : vector<16x16xf32>
    %cst_8 = arith.constant dense<0.000000e+00> : vector<16xf32>
    %18 = vector.multi_reduction <add>, %17, %cst_8 [1] : vector<16x16xf32> to vector<16xf32>
    %19 = vector.shape_cast %18 : vector<16xf32> to vector<16x1xf32>
    %20 = tpu.reciprocal %19 {approx = true} : vector<16x1xf32> -> vector<16x1xf32>
    %21 = vector.broadcast %20 : vector<16x1xf32> to vector<16x16xf32>
    %22 = arith.mulf %17, %21 : vector<16x16xf32>
    %c0_9 = arith.constant 0 : index
    %c0_10 = arith.constant 0 : index
    %c0_11 = arith.constant 0 : index
    %23 = vector.load %arg8[%c0_9, %c0_10, %c0_11] : memref<1x16x16xf32, #tpu.memory_space<vmem>>, vector<1x16x16xf32>
    %24 = vector.shape_cast %23 : vector<1x16x16xf32> to vector<16x16xf32>
    %25 = vector.shape_cast %22 : vector<16x16xf32> to vector<1x16x16xf32>
    tpu.vector_store %arg8[%c0_9, %c0_10, %c0_11], %25 {strides = array<i32>} : memref<1x16x16xf32, #tpu.memory_space<vmem>>, vector<1x16x16xf32>,
    %26 = arith.truncf %22 : vector<16x16xf32> to vector<16x16xbf16>
    %27 = arith.truncf %9 : vector<16x64xf32> to vector<16x64xbf16>
    %cst_12 = arith.constant dense<0.000000e+00> : vector<16x64xf32>
    %28 = tpu.matmul %26, %27, %cst_12 {dimension_numbers = #tpu.dot_dimension_numbers<[1], [0], [0], [1], [0, 0, 1, 1], [], []>} : vector<16x16xbf16>, vector<16x64xbf16>, vector<16x64xf32> -> vector<16x64xf32>
    %29 = arith.extf %1 : vector<16x64xbf16> to vector<16x64xf32>
    %c0_13 = arith.constant 0 : index
    %30 = memref.load %arg4[%c0_13] : memref<1xf32, #tpu.memory_space<smem>>
    %31 = vector.broadcast %30 : f32 to vector<16x64xf32>
    %32 = arith.mulf %31, %28 : vector<16x64xf32>
    %33 = arith.addf %29, %32 : vector<16x64xf32>
    %c0_14 = arith.constant 0 : index
    %c0_15 = arith.constant 0 : index
    %34 = vector.load %arg5[%c0_14, %c0_15] : memref<16x64xbf16, #tpu.memory_space<vmem>>, vector<16x64xbf16>
    %35 = arith.extf %34 : vector<16x64xbf16> to vector<16x64xf32>
    %36 = arith.mulf %33, %35 : vector<16x64xf32>
    %cst_16 = arith.constant dense<0.000000e+00> : vector<16xf32>
    %37 = vector.multi_reduction <add>, %36, %cst_16 [1] : vector<16x64xf32> to vector<16xf32>
    %38 = vector.shape_cast %37 : vector<16xf32> to vector<16x1xf32>
    %cst_17 = arith.constant dense<0.000000e+00> : vector<1xf32>
    %39 = vector.multi_reduction <add>, %38, %cst_17 [0] : vector<16x1xf32> to vector<1xf32>
    %40 = vector.shape_cast %39 : vector<1xf32> to vector<1x1xf32>
    %c0_18 = arith.constant 0 : index
    %41 = memref.load %arg6[%c0_18] : memref<1xf32, #tpu.memory_space<smem>>
    %42 = vector.broadcast %41 : f32 to vector<1x1xf32>
    %43 = arith.addf %40, %42 : vector<1x1xf32>
    %c0_19 = arith.constant 0 : index
    %c0_20 = arith.constant 0 : index
    %c0_21 = arith.constant 0 : index
    %44 = vector.load %arg7[%c0_19, %c0_20, %c0_21] : memref<1x1x1xf32, #tpu.memory_space<vmem>>, vector<1x1x1xf32>
    %45 = vector.shape_cast %44 : vector<1x1x1xf32> to vector<1x1xf32>
    %46 = vector.shape_cast %43 : vector<1x1xf32> to vector<1x1x1xf32>
    tpu.vector_store %arg7[%c0_19, %c0_20, %c0_21], %46 {strides = array<i32>} : memref<1x1x1xf32, #tpu.memory_space<vmem>>, vector<1x1x1xf32>,
    return
  }
  func.func @transform_0(%arg0: i32) -> (i32, i32, i32) {
    %c0_i32 = arith.constant 0 : i32
    %c0_i32_0 = arith.constant 0 : i32
    %c0_i32_1 = arith.constant 0 : i32
    return %arg0, %c0_i32, %c0_i32_0 : i32, i32, i32
  }
  func.func @transform_1(%arg0: i32) -> (i32, i32) {
    %c0_i32 = arith.constant 0 : i32
    %c0_i32_0 = arith.constant 0 : i32
    %c0_i32_1 = arith.constant 0 : i32
    return %c0_i32, %c0_i32_0 : i32, i32
  }
  func.func @transform_2(%arg0: i32) -> (i32, i32) {
    %c0_i32 = arith.constant 0 : i32
    %c0_i32_0 = arith.constant 0 : i32
    %c0_i32_1 = arith.constant 0 : i32
    return %c0_i32, %c0_i32_0 : i32, i32
  }
  func.func @transform_3(%arg0: i32) -> i32 {
    %c0_i32 = arith.constant 0 : i32
    %c0_i32_0 = arith.constant 0 : i32
    return %c0_i32 : i32
  }
  func.func @transform_4(%arg0: i32) -> (i32, i32) {
    %c0_i32 = arith.constant 0 : i32
    %c0_i32_0 = arith.constant 0 : i32
    %c0_i32_1 = arith.constant 0 : i32
    return %c0_i32, %c0_i32_0 : i32, i32
  }
  func.func @transform_5(%arg0: i32) -> i32 {
    %c0_i32 = arith.constant 0 : i32
    %c0_i32_0 = arith.constant 0 : i32
    return %c0_i32 : i32
  }
  func.func @transform_6(%arg0: i32) -> (i32, i32, i32) {
    %c0_i32 = arith.constant 0 : i32
    %c0_i32_0 = arith.constant 0 : i32
    %c0_i32_1 = arith.constant 0 : i32
    return %arg0, %c0_i32, %c0_i32_0 : i32, i32, i32
  }
  func.func @transform_7(%arg0: i32) -> (i32, i32, i32) {
    %c0_i32 = arith.constant 0 : i32
    %c0_i32_0 = arith.constant 0 : i32
    %c0_i32_1 = arith.constant 0 : i32
    return %arg0, %c0_i32, %c0_i32_0 : i32, i32, i32
  }
}

</mosaic_0001>

<llo_original>
// kernel: discriminator_forward.6
$region0: #{discriminator_forward.6}
  #allocation0 [shape = 'u32[]', space=smem, size = 0x4, offset = 0x4, fixed_abs, tag = 'smem constant byte address 0x4 - core index']
  #allocation1 [shape = 'u32[72,128]{1,0:T(1,128)}', space=vmem, size = 0x9000, scoped, tag = 'internal scratch']
  %s0 = inlined_call_operand.vmem [shape: bf16[2048,16], index: 0, kind: input, shape index: {}]
  %s1 = inlined_call_operand.vmem [shape: bf16[16,8], index: 1, kind: input, shape index: {}]
  %s2 = inlined_call_operand.vmem [shape: f32[1,8], index: 2, kind: input, shape index: {}]
  %s3 = inlined_call_operand.vmem [shape: bf16[2048,8], index: 3, kind: output, shape index: {}]
  %s4 = sld [smem:[#allocation0]]
  $region45: #{discriminator_forward.6} parent=0
    _
  %s6 = ssub.s32 1, %s4
  %s7 = scalar_select 0, %s6, %s4
  loop: start=0, step=1, limit=4
  $region2: #{discriminator_forward.6} parent=0 // loop_pre_header
    _
  $region3: #{discriminator_forward.6} parent=0 // loop_header
    %s9 = sphi 0, %s13
    %p10 = scmp.ge.s32.totalorder %s9, 4
    %s19 = sphi 0, %s21
    %s22 = sphi 0, %s19
    %s23 = sphi 0, %s22
    %s39 = sphi 0, %s23
    %s43 = sphi 0, %s43
    %s45 = sphi 0, %s43
    %s46 = sphi 0, %s45
    %s60 = sphi 0, %s46
    %s64 = sphi 0, %s64
    %s66 = sphi 0, %s64
    %s67 = sphi 0, %s66
    %s81 = sphi 0, %s67
    %s87 = sphi 0, %s89
    %s90 = sphi 0, %s87
    %s91 = sphi 0, %s90
    %s107 = sphi 0, %s91
  $region4: #{discriminator_forward.6} parent=0 // loop_header_branch
    %12 = sbr.rel (%p10) target = $region8
  $region5: #{discriminator_forward.6} parent=0 // loop_body
    %s14 = ssub.s32 %s9, 1
    %s15 = ssub.s32 %s9, 2
    %s16 = sadd.s32 %s9, 1
    %s17 = ssub.s32 %s9, %s16
    %p18 = scmp.eq.s32.totalorder %s17, 0
    %s20 = sadd.s32 %s19, 1
    %s21 = scalar_select %p18, %s19, %s20
    %p24 = pneg %p18
    %p25 = scmp.eq.s32.totalorder %s9, 1
    %p26 = por %p24, %p25
    %p27 = scmp.ne.s32.totalorder %s19, %s22
    %p28 = scmp.eq.s32.totalorder %s9, 0
    %p29 = por %p27, %p28
    %p30 = scmp.ne.s32.totalorder %s19, %s22
    %p31 = scmp.eq.s32.totalorder %s14, 1
    %p32 = por %p30, %p31
    %p33 = scmp.ne.s32.totalorder %s22, %s23
    %p34 = scmp.eq.s32.totalorder %s14, 0
    %p35 = por %p33, %p34
    %p36 = scmp.ne.s32.totalorder %s22, %s23
    %p37 = scmp.eq.s32.totalorder %s15, 1
    %p38 = por %p36, %p37
    %p40 = scmp.ne.s32.totalorder %s23, %s39
    %p41 = scmp.eq.s32.totalorder %s15, 0
    %p42 = por %p40, %p41
    %s44 = sadd.s32 %s43, 1
    %p47 = scmp.eq.s32.totalorder %s9, 1
    %p48 = scmp.ne.s32.totalorder %s43, %s45
    %p49 = scmp.eq.s32.totalorder %s9, 0
    %p50 = por %p48, %p49
    %p51 = scmp.ne.s32.totalorder %s43, %s45
    %p52 = scmp.eq.s32.totalorder %s14, 1
    %p53 = por %p51, %p52
    %p54 = scmp.ne.s32.totalorder %s45, %s46
    %p55 = scmp.eq.s32.totalorder %s14, 0
    %p56 = por %p54, %p55
    %p57 = scmp.ne.s32.totalorder %s45, %s46
    %p58 = scmp.eq.s32.totalorder %s15, 1
    %p59 = por %p57, %p58
    %p61 = scmp.ne.s32.totalorder %s46, %s60
    %p62 = scmp.eq.s32.totalorder %s15, 0
    %p63 = por %p61, %p62
    %s65 = sadd.s32 %s64, 1
    %p68 = scmp.eq.s32.totalorder %s9, 1
    %p69 = scmp.ne.s32.totalorder %s64, %s66
    %p70 = scmp.eq.s32.totalorder %s9, 0
    %p71 = por %p69, %p70
    %p72 = scmp.ne.s32.totalorder %s64, %s66
    %p73 = scmp.eq.s32.totalorder %s14, 1
    %p74 = por %p72, %p73
    %p75 = scmp.ne.s32.totalorder %s66, %s67
    %p76 = scmp.eq.s32.totalorder %s14, 0
    %p77 = por %p75, %p76
    %p78 = scmp.ne.s32.totalorder %s66, %s67
    %p79 = scmp.eq.s32.totalorder %s15, 1
    %p80 = por %p78, %p79
    %p82 = scmp.ne.s32.totalorder %s67, %s81
    %p83 = scmp.eq.s32.totalorder %s15, 0
    %p84 = por %p82, %p83
    %s85 = ssub.s32 %s9, %s16
    %p86 = scmp.eq.s32.totalorder %s85, 0
    %s88 = sadd.s32 %s87, 1
    %s89 = scalar_select %p86, %s87, %s88
    %p92 = pneg %p86
    %p93 = scmp.eq.s32.totalorder %s9, 1
    %p94 = por %p92, %p93
    %p95 = scmp.ne.s32.totalorder %s87, %s90
    %p96 = scmp.eq.s32.totalorder %s9, 0
    %p97 = por %p95, %p96
    %p98 = scmp.ne.s32.totalorder %s87, %s90
    %p99 = scmp.eq.s32.totalorder %s14, 1
    %p100 = por %p98, %p99
    %p101 = scmp.ne.s32.totalorder %s90, %s91
    %p102 = scmp.eq.s32.totalorder %s14, 0
    %p103 = por %p101, %p102
    %p104 = scmp.ne.s32.totalorder %s90, %s91
    %p105 = scmp.eq.s32.totalorder %s15, 1
    %p106 = por %p104, %p105
    %p108 = scmp.ne.s32.totalorder %s91, %s107
    %p109 = scmp.eq.s32.totalorder %s15, 0
    %p110 = por %p108, %p109
    %p111 = scmp.le.s32.totalorder 1, %s9
    %p112 = scmp.lt.s32.totalorder %s9, 3
    %p113 = pnand %p111, %p112
    %p114 = pneg %p113
    // Predicated region
    $region9: #{discriminator_forward.6} parent=5 // pred_check
      _
    $region10: #{discriminator_forward.6} parent=5 // pred_check_branch
      %116 = sbr.rel (%p113) target = $region12
    $region11: #{discriminator_forward.6} parent=5 // pred_region
      %s117 = ssub.s32 %s9, 1
      // Predicated region
      $region13: #{discriminator_forward.6} parent=11 // pred_check
        %p118 = pneg %p56
      $region14: #{discriminator_forward.6} parent=11 // pred_check_branch
        %120 = sbr.rel (%p118) target = $region16
      $region15: #{discriminator_forward.6} parent=11 // pred_region
        _
      $region16: #{discriminator_forward.6} parent=11 // pred_fallthru
        _
      // Predicated region
      $region17: #{discriminator_forward.6} parent=11 // pred_check
        %p121 = pneg %p77
      $region18: #{discriminator_forward.6} parent=11 // pred_check_branch
        %123 = sbr.rel (%p121) target = $region20
      $region19: #{discriminator_forward.6} parent=11 // pred_region
        _
      $region20: #{discriminator_forward.6} parent=11 // pred_fallthru
        _
    $region12: #{discriminator_forward.6} parent=5 // pred_fallthru
      _
    %p124 = scmp.lt.s32.totalorder %s9, 2
    // Predicated region
    $region21: #{discriminator_forward.6} parent=5 // pred_check
      %p125 = pneg %p124
    $region22: #{discriminator_forward.6} parent=5 // pred_check_branch
      %127 = sbr.rel (%p125) target = $region24
    $region23: #{discriminator_forward.6} parent=5 // pred_region
      // Predicated region
      $region25: #{discriminator_forward.6} parent=23 // pred_check
        %p128 = pneg %p29
      $region26: #{discriminator_forward.6} parent=23 // pred_check_branch
        %130 = sbr.rel (%p128) target = $region28
      $region27: #{discriminator_forward.6} parent=23 // pred_region
        %s131 = smul.u32 128, %s9
        %p132 = scmp.lt.s32.totalorder %s131, 255
        %s133 = scalar_select %p132, %s131, 255
        %s134 = smul.addr %s133, 4
        %s135 = scalar_lea.vmem %s0, %s134
        %s136 = smul.u32 128, %s9
      $region28: #{discriminator_forward.6} parent=23 // pred_fallthru
        _
    $region24: #{discriminator_forward.6} parent=5 // pred_fallthru
      _
    %p137 = scmp.le.s32.totalorder 1, %s9
    %p138 = scmp.lt.s32.totalorder %s9, 3
    %p139 = pnand %p137, %p138
    %p140 = pneg %p139
    // Predicated region
    $region29: #{discriminator_forward.6} parent=5 // pred_check
      _
    $region30: #{discriminator_forward.6} parent=5 // pred_check_branch
      %142 = sbr.rel (%p139) target = $region32
    $region31: #{discriminator_forward.6} parent=5 // pred_region
      %s143 = ssub.s32 %s9, 1
      %s144 = smul.u32 128, %s14
      %p145 = scmp.lt.s32.totalorder %s144, 255
      %s146 = scalar_select %p145, %s144, 255
      %s147 = smul.addr %s146, 4
      %s148 = scalar_lea.vmem %s0, %s147
      %p149 = pneg %p35
      %p150 = pneg %p32
      %p151 = pneg %p56
      %p152 = pneg %p53
      %p153 = pneg %p77
      %p154 = pneg %p74
      %p155 = pneg %p103
      %p156 = pneg %p100
      %s157 = smul.u32 128, %s14
      %p158 = scmp.lt.s32.totalorder %s157, 255
      %s159 = scalar_select %p158, %s157, 255
      %s160 = smul.addr %s159, 4
      %s161 = scalar_lea.vmem %s3, %s160
      %s162 = smul.u32 128, %s14
      %p163 = scmp.lt.s32.totalorder %s162, 255
      %s164 = scalar_select %p163, %s162, 255
      %s165 = smul.addr %s164, 4
      %s166 = scalar_lea.vmem %s0, %s165
      %s167 = smul.u32 128, %s14
      %s168 = smul.u32 128, %s14
      %p169 = scmp.lt.s32.totalorder %s168, 255
      %s170 = scalar_select %p169, %s168, 255
      %s171 = smul.addr %s170, 4
      %s172 = scalar_lea.vmem %s3, %s171
      %s173 = smul.u32 128, %s14
      %v175 = vld [vmem:[%s166] sm:$0xf]
      %v176 = vld [vmem:[%s166 + $0x4] sm:$0xf]
      %v177 = vld [vmem:[%s166 + $0x8] sm:$0xf]
      %v178 = vld [vmem:[%s166 + $0xc] sm:$0xf]
      %v179 = vld [vmem:[%s166 + $0x10] sm:$0xf]
      %v180 = vld [vmem:[%s166 + $0x14] sm:$0xf]
      %v181 = vld [vmem:[%s166 + $0x18] sm:$0xf]
      %v182 = vld [vmem:[%s166 + $0x1c] sm:$0xf]
      %v183 = vld [vmem:[%s166 + $0x20] sm:$0xf]
      %v184 = vld [vmem:[%s166 + $0x24] sm:$0xf]
      %v185 = vld [vmem:[%s166 + $0x28] sm:$0xf]
      %v186 = vld [vmem:[%s166 + $0x2c] sm:$0xf]
      %v187 = vld [vmem:[%s166 + $0x30] sm:$0xf]
      %v188 = vld [vmem:[%s166 + $0x34] sm:$0xf]
      %v189 = vld [vmem:[%s166 + $0x38] sm:$0xf]
      %v190 = vld [vmem:[%s166 + $0x3c] sm:$0xf]
      %v191 = vld [vmem:[%s166 + $0x40] sm:$0xf]
      %v192 = vld [vmem:[%s166 + $0x44] sm:$0xf]
      %v193 = vld [vmem:[%s166 + $0x48] sm:$0xf]
      %v194 = vld [vmem:[%s166 + $0x4c] sm:$0xf]
      %v195 = vld [vmem:[%s166 + $0x50] sm:$0xf]
      %v196 = vld [vmem:[%s166 + $0x54] sm:$0xf]
      %v197 = vld [vmem:[%s166 + $0x58] sm:$0xf]
      %v198 = vld [vmem:[%s166 + $0x5c] sm:$0xf]
      %v199 = vld [vmem:[%s166 + $0x60] sm:$0xf]
      %v200 = vld [vmem:[%s166 + $0x64] sm:$0xf]
      %v201 = vld [vmem:[%s166 + $0x68] sm:$0xf]
      %v202 = vld [vmem:[%s166 + $0x6c] sm:$0xf]
      %v203 = vld [vmem:[%s166 + $0x70] sm:$0xf]
      %v204 = vld [vmem:[%s166 + $0x74] sm:$0xf]
      %v205 = vld [vmem:[%s166 + $0x78] sm:$0xf]
      %v206 = vld [vmem:[%s166 + $0x7c] sm:$0xf]
      %v207 = vld [vmem:[%s166 + $0x80] sm:$0xf]
      %v208 = vld [vmem:[%s166 + $0x84] sm:$0xf]
      %v209 = vld [vmem:[%s166 + $0x88] sm:$0xf]
      %v210 = vld [vmem:[%s166 + $0x8c] sm:$0xf]
      %v211 = vld [vmem:[%s166 + $0x90] sm:$0xf]
      %v212 = vld [vmem:[%s166 + $0x94] sm:$0xf]
      %v213 = vld [vmem:[%s166 + $0x98] sm:$0xf]
      %v214 = vld [vmem:[%s166 + $0x9c] sm:$0xf]
      %v215 = vld [vmem:[%s166 + $0xa0] sm:$0xf]
      %v216 = vld [vmem:[%s166 + $0xa4] sm:$0xf]
      %v217 = vld [vmem:[%s166 + $0xa8] sm:$0xf]
      %v218 = vld [vmem:[%s166 + $0xac] sm:$0xf]
      %v219 = vld [vmem:[%s166 + $0xb0] sm:$0xf]
      %v220 = vld [vmem:[%s166 + $0xb4] sm:$0xf]
      %v221 = vld [vmem:[%s166 + $0xb8] sm:$0xf]
      %v222 = vld [vmem:[%s166 + $0xbc] sm:$0xf]
      %v223 = vld [vmem:[%s166 + $0xc0] sm:$0xf]
      %v224 = vld [vmem:[%s166 + $0xc4] sm:$0xf]
      %v225 = vld [vmem:[%s166 + $0xc8] sm:$0xf]
      %v226 = vld [vmem:[%s166 + $0xcc] sm:$0xf]
      %v227 = vld [vmem:[%s166 + $0xd0] sm:$0xf]
      %v228 = vld [vmem:[%s166 + $0xd4] sm:$0xf]
      %v229 = vld [vmem:[%s166 + $0xd8] sm:$0xf]
      %v230 = vld [vmem:[%s166 + $0xdc] sm:$0xf]
      %v231 = vld [vmem:[%s166 + $0xe0] sm:$0xf]
      %v232 = vld [vmem:[%s166 + $0xe4] sm:$0xf]
      %v233 = vld [vmem:[%s166 + $0xe8] sm:$0xf]
      %v234 = vld [vmem:[%s166 + $0xec] sm:$0xf]
      %v235 = vld [vmem:[%s166 + $0xf0] sm:$0xf]
      %v236 = vld [vmem:[%s166 + $0xf4] sm:$0xf]
      %v237 = vld [vmem:[%s166 + $0xf8] sm:$0xf]
      %v238 = vld [vmem:[%s166 + $0xfc] sm:$0xf]
      %v239 = vld [vmem:[%s166 + $0x100] sm:$0xf]
      %v240 = vld [vmem:[%s166 + $0x104] sm:$0xf]
      %v241 = vld [vmem:[%s166 + $0x108] sm:$0xf]
      %v242 = vld [vmem:[%s166 + $0x10c] sm:$0xf]
      %v243 = vld [vmem:[%s166 + $0x110] sm:$0xf]
      %v244 = vld [vmem:[%s166 + $0x114] sm:$0xf]
      %v245 = vld [vmem:[%s166 + $0x118] sm:$0xf]
      %v246 = vld [vmem:[%s166 + $0x11c] sm:$0xf]
      %v247 = vld [vmem:[%s166 + $0x120] sm:$0xf]
      %v248 = vld [vmem:[%s166 + $0x124] sm:$0xf]
      %v249 = vld [vmem:[%s166 + $0x128] sm:$0xf]
      %v250 = vld [vmem:[%s166 + $0x12c] sm:$0xf]
      %v251 = vld [vmem:[%s166 + $0x130] sm:$0xf]
      %v252 = vld [vmem:[%s166 + $0x134] sm:$0xf]
      %v253 = vld [vmem:[%s166 + $0x138] sm:$0xf]
      %v254 = vld [vmem:[%s166 + $0x13c] sm:$0xf]
      %v255 = vld [vmem:[%s166 + $0x140] sm:$0xf]
      %v256 = vld [vmem:[%s166 + $0x144] sm:$0xf]
      %v257 = vld [vmem:[%s166 + $0x148] sm:$0xf]
      %v258 = vld [vmem:[%s166 + $0x14c] sm:$0xf]
      %v259 = vld [vmem:[%s166 + $0x150] sm:$0xf]
      %v260 = vld [vmem:[%s166 + $0x154] sm:$0xf]
      %v261 = vld [vmem:[%s166 + $0x158] sm:$0xf]
      %v262 = vld [vmem:[%s166 + $0x15c] sm:$0xf]
      %v263 = vld [vmem:[%s166 + $0x160] sm:$0xf]
      %v264 = vld [vmem:[%s166 + $0x164] sm:$0xf]
      %v265 = vld [vmem:[%s166 + $0x168] sm:$0xf]
      %v266 = vld [vmem:[%s166 + $0x16c] sm:$0xf]
      %v267 = vld [vmem:[%s166 + $0x170] sm:$0xf]
      %v268 = vld [vmem:[%s166 + $0x174] sm:$0xf]
      %v269 = vld [vmem:[%s166 + $0x178] sm:$0xf]
      %v270 = vld [vmem:[%s166 + $0x17c] sm:$0xf]
      %v271 = vld [vmem:[%s166 + $0x180] sm:$0xf]
      %v272 = vld [vmem:[%s166 + $0x184] sm:$0xf]
      %v273 = vld [vmem:[%s166 + $0x188] sm:$0xf]
      %v274 = vld [vmem:[%s166 + $0x18c] sm:$0xf]
      %v275 = vld [vmem:[%s166 + $0x190] sm:$0xf]
      %v276 = vld [vmem:[%s166 + $0x194] sm:$0xf]
      %v277 = vld [vmem:[%s166 + $0x198] sm:$0xf]
      %v278 = vld [vmem:[%s166 + $0x19c] sm:$0xf]
      %v279 = vld [vmem:[%s166 + $0x1a0] sm:$0xf]
      %v280 = vld [vmem:[%s166 + $0x1a4] sm:$0xf]
      %v281 = vld [vmem:[%s166 + $0x1a8] sm:$0xf]
      %v282 = vld [vmem:[%s166 + $0x1ac] sm:$0xf]
      %v283 = vld [vmem:[%s166 + $0x1b0] sm:$0xf]
      %v284 = vld [vmem:[%s166 + $0x1b4] sm:$0xf]
      %v285 = vld [vmem:[%s166 + $0x1b8] sm:$0xf]
      %v286 = vld [vmem:[%s166 + $0x1bc] sm:$0xf]
      %v287 = vld [vmem:[%s166 + $0x1c0] sm:$0xf]
      %v288 = vld [vmem:[%s166 + $0x1c4] sm:$0xf]
      %v289 = vld [vmem:[%s166 + $0x1c8] sm:$0xf]
      %v290 = vld [vmem:[%s166 + $0x1cc] sm:$0xf]
      %v291 = vld [vmem:[%s166 + $0x1d0] sm:$0xf]
      %v292 = vld [vmem:[%s166 + $0x1d4] sm:$0xf]
      %v293 = vld [vmem:[%s166 + $0x1d8] sm:$0xf]
      %v294 = vld [vmem:[%s166 + $0x1dc] sm:$0xf]
      %v295 = vld [vmem:[%s166 + $0x1e0] sm:$0xf]
      %v296 = vld [vmem:[%s166 + $0x1e4] sm:$0xf]
      %v297 = vld [vmem:[%s166 + $0x1e8] sm:$0xf]
      %v298 = vld [vmem:[%s166 + $0x1ec] sm:$0xf]
      %v299 = vld [vmem:[%s166 + $0x1f0] sm:$0xf]
      %v300 = vld [vmem:[%s166 + $0x1f4] sm:$0xf]
      %v301 = vld [vmem:[%s166 + $0x1f8] sm:$0xf]
      %v302 = vld [vmem:[%s166 + $0x1fc] sm:$0xf]
      %v303 = vld [vmem:[%s1] sm:$0xf]
      %v304 = vld [vmem:[%s1 + $0x4] sm:$0xf]
      %v305 = vld [vmem:[%s2] sm:$0x1]
      %v307 = vperm.slane %v305, 0
      %v437 = vunpack.c.l.b16 %v175
      %v438 = vunpack.c.l.b16 %v176
      %v439 = vunpack.c.l.b16 %v177
      %v440 = vunpack.c.l.b16 %v178
      %v441 = vunpack.c.l.b16 %v179
      %v442 = vunpack.c.l.b16 %v180
      %v443 = vunpack.c.l.b16 %v181
      %v444 = vunpack.c.l.b16 %v182
      %v445 = vunpack.c.l.b16 %v183
      %v446 = vunpack.c.l.b16 %v184
      %v447 = vunpack.c.l.b16 %v185
      %v448 = vunpack.c.l.b16 %v186
      %v449 = vunpack.c.l.b16 %v187
      %v450 = vunpack.c.l.b16 %v188
      %v451 = vunpack.c.l.b16 %v189
      %v452 = vunpack.c.l.b16 %v190
      %v453 = vunpack.c.l.b16 %v191
      %v454 = vunpack.c.l.b16 %v192
      %v455 = vunpack.c.l.b16 %v193
      %v456 = vunpack.c.l.b16 %v194
      %v457 = vunpack.c.l.b16 %v195
      %v458 = vunpack.c.l.b16 %v196
      %v459 = vunpack.c.l.b16 %v197
      %v460 = vunpack.c.l.b16 %v198
      %v461 = vunpack.c.l.b16 %v199
      %v462 = vunpack.c.l.b16 %v200
      %v463 = vunpack.c.l.b16 %v201
      %v464 = vunpack.c.l.b16 %v202
      %v465 = vunpack.c.l.b16 %v203
      %v466 = vunpack.c.l.b16 %v204
      %v467 = vunpack.c.l.b16 %v205
      %v468 = vunpack.c.l.b16 %v206
      %v469 = vunpack.c.l.b16 %v207
      %v470 = vunpack.c.l.b16 %v208
      %v471 = vunpack.c.l.b16 %v209
      %v472 = vunpack.c.l.b16 %v210
      %v473 = vunpack.c.l.b16 %v211
      %v474 = vunpack.c.l.b16 %v212
      %v475 = vunpack.c.l.b16 %v213
      %v476 = vunpack.c.l.b16 %v214
      %v477 = vunpack.c.l.b16 %v215
      %v478 = vunpack.c.l.b16 %v216
      %v479 = vunpack.c.l.b16 %v217
      %v480 = vunpack.c.l.b16 %v218
      %v481 = vunpack.c.l.b16 %v219
      %v482 = vunpack.c.l.b16 %v220
      %v483 = vunpack.c.l.b16 %v221
      %v484 = vunpack.c.l.b16 %v222
      %v485 = vunpack.c.l.b16 %v223
      %v486 = vunpack.c.l.b16 %v224
      %v487 = vunpack.c.l.b16 %v225
      %v488 = vunpack.c.l.b16 %v226
      %v489 = vunpack.c.l.b16 %v227
      %v490 = vunpack.c.l.b16 %v228
      %v491 = vunpack.c.l.b16 %v229
      %v492 = vunpack.c.l.b16 %v230
      %v493 = vunpack.c.l.b16 %v231
      %v494 = vunpack.c.l.b16 %v232
      %v495 = vunpack.c.l.b16 %v233
      %v496 = vunpack.c.l.b16 %v234
      %v497 = vunpack.c.l.b16 %v235
      %v498 = vunpack.c.l.b16 %v236
      %v499 = vunpack.c.l.b16 %v237
      %v500 = vunpack.c.l.b16 %v238
      %v501 = vunpack.c.l.b16 %v239
      %v502 = vunpack.c.l.b16 %v240
      %v503 = vunpack.c.l.b16 %v241
      %v504 = vunpack.c.l.b16 %v242
      %v505 = vunpack.c.l.b16 %v243
      %v506 = vunpack.c.l.b16 %v244
      %v507 = vunpack.c.l.b16 %v245
      %v508 = vunpack.c.l.b16 %v246
      %v509 = vunpack.c.l.b16 %v247
      %v510 = vunpack.c.l.b16 %v248
      %v511 = vunpack.c.l.b16 %v249
      %v512 = vunpack.c.l.b16 %v250
      %v513 = vunpack.c.l.b16 %v251
      %v514 = vunpack.c.l.b16 %v252
      %v515 = vunpack.c.l.b16 %v253
      %v516 = vunpack.c.l.b16 %v254
      %v517 = vunpack.c.l.b16 %v255
      %v518 = vunpack.c.l.b16 %v256
      %v519 = vunpack.c.l.b16 %v257
      %v520 = vunpack.c.l.b16 %v258
      %v521 = vunpack.c.l.b16 %v259
      %v522 = vunpack.c.l.b16 %v260
      %v523 = vunpack.c.l.b16 %v261
      %v524 = vunpack.c.l.b16 %v262
      %v525 = vunpack.c.l.b16 %v263
      %v526 = vunpack.c.l.b16 %v264
      %v527 = vunpack.c.l.b16 %v265
      %v528 = vunpack.c.l.b16 %v266
      %v529 = vunpack.c.l.b16 %v267
      %v530 = vunpack.c.l.b16 %v268
      %v531 = vunpack.c.l.b16 %v269
      %v532 = vunpack.c.l.b16 %v270
      %v533 = vunpack.c.l.b16 %v271
      %v534 = vunpack.c.l.b16 %v272
      %v535 = vunpack.c.l.b16 %v273
      %v536 = vunpack.c.l.b16 %v274
      %v537 = vunpack.c.l.b16 %v275
      %v538 = vunpack.c.l.b16 %v276
      %v539 = vunpack.c.l.b16 %v277
      %v540 = vunpack.c.l.b16 %v278
      %v541 = vunpack.c.l.b16 %v279
      %v542 = vunpack.c.l.b16 %v280
      %v543 = vunpack.c.l.b16 %v281
      %v544 = vunpack.c.l.b16 %v282
      %v545 = vunpack.c.l.b16 %v283
      %v546 = vunpack.c.l.b16 %v284
      %v547 = vunpack.c.l.b16 %v285
      %v548 = vunpack.c.l.b16 %v286
      %v549 = vunpack.c.l.b16 %v287
      %v550 = vunpack.c.l.b16 %v288
      %v551 = vunpack.c.l.b16 %v289
      %v552 = vunpack.c.l.b16 %v290
      %v553 = vunpack.c.l.b16 %v291
      %v554 = vunpack.c.l.b16 %v292
      %v555 = vunpack.c.l.b16 %v293
      %v556 = vunpack.c.l.b16 %v294
      %v557 = vunpack.c.l.b16 %v295
      %v558 = vunpack.c.l.b16 %v296
      %v559 = vunpack.c.l.b16 %v297
      %v560 = vunpack.c.l.b16 %v298
      %v561 = vunpack.c.l.b16 %v299
      %v562 = vunpack.c.l.b16 %v300
      %v563 = vunpack.c.l.b16 %v301
      %v564 = vunpack.c.l.b16 %v302
      %v565 = vpack.c.b16 %v438, %v437
      %v566 = vpack.c.b16 %v440, %v439
      %v567 = vpack.c.b16 %v442, %v441
      %v568 = vpack.c.b16 %v444, %v443
      %v569 = vpack.c.b16 %v446, %v445
      %v570 = vpack.c.b16 %v448, %v447
      %v571 = vpack.c.b16 %v450, %v449
      %v572 = vpack.c.b16 %v452, %v451
      %v573 = vpack.c.b16 %v454, %v453
      %v574 = vpack.c.b16 %v456, %v455
      %v575 = vpack.c.b16 %v458, %v457
      %v576 = vpack.c.b16 %v460, %v459
      %v577 = vpack.c.b16 %v462, %v461
      %v578 = vpack.c.b16 %v464, %v463
      %v579 = vpack.c.b16 %v466, %v465
      %v580 = vpack.c.b16 %v468, %v467
      %v581 = vpack.c.b16 %v470, %v469
      %v582 = vpack.c.b16 %v472, %v471
      %v583 = vpack.c.b16 %v474, %v473
      %v584 = vpack.c.b16 %v476, %v475
      %v585 = vpack.c.b16 %v478, %v477
      %v586 = vpack.c.b16 %v480, %v479
      %v587 = vpack.c.b16 %v482, %v481
      %v588 = vpack.c.b16 %v484, %v483
      %v589 = vpack.c.b16 %v486, %v485
      %v590 = vpack.c.b16 %v488, %v487
      %v591 = vpack.c.b16 %v490, %v489
      %v592 = vpack.c.b16 %v492, %v491
      %v593 = vpack.c.b16 %v494, %v493
      %v594 = vpack.c.b16 %v496, %v495
      %v595 = vpack.c.b16 %v498, %v497
      %v596 = vpack.c.b16 %v500, %v499
      %v597 = vpack.c.b16 %v502, %v501
      %v598 = vpack.c.b16 %v504, %v503
      %v599 = vpack.c.b16 %v506, %v505
      %v600 = vpack.c.b16 %v508, %v507
      %v601 = vpack.c.b16 %v510, %v509
      %v602 = vpack.c.b16 %v512, %v511
      %v603 = vpack.c.b16 %v514, %v513
      %v604 = vpack.c.b16 %v516, %v515
      %v605 = vpack.c.b16 %v518, %v517
      %v606 = vpack.c.b16 %v520, %v519
      %v607 = vpack.c.b16 %v522, %v521
      %v608 = vpack.c.b16 %v524, %v523
      %v609 = vpack.c.b16 %v526, %v525
      %v610 = vpack.c.b16 %v528, %v527
      %v611 = vpack.c.b16 %v530, %v529
      %v612 = vpack.c.b16 %v532, %v531
      %v613 = vpack.c.b16 %v534, %v533
      %v614 = vpack.c.b16 %v536, %v535
      %v615 = vpack.c.b16 %v538, %v537
      %v616 = vpack.c.b16 %v540, %v539
      %v617 = vpack.c.b16 %v542, %v541
      %v618 = vpack.c.b16 %v544, %v543
      %v619 = vpack.c.b16 %v546, %v545
      %v620 = vpack.c.b16 %v548, %v547
      %v621 = vpack.c.b16 %v550, %v549
      %v622 = vpack.c.b16 %v552, %v551
      %v623 = vpack.c.b16 %v554, %v553
      %v624 = vpack.c.b16 %v556, %v555
      %v625 = vpack.c.b16 %v558, %v557
      %v626 = vpack.c.b16 %v560, %v559
      %v627 = vpack.c.b16 %v562, %v561
      %v628 = vpack.c.b16 %v564, %v563
      %v631 = vunpack.c.l.b16 %v303
      %v632 = vunpack.c.l.b16 %v304
      %v633 = vpack.c.b16 %v632, %v631
      %vm635 = vcmask 130048
      %v637 = vsel %vm635, %v565, 0
      %v640 = vsel %vm635, %v566, 0
      %v643 = vsel %vm635, %v567, 0
      %v646 = vsel %vm635, %v568, 0
      %v649 = vsel %vm635, %v569, 0
      %v652 = vsel %vm635, %v570, 0
      %v655 = vsel %vm635, %v571, 0
      %v658 = vsel %vm635, %v572, 0
      %v661 = vsel %vm635, %v573, 0
      %v664 = vsel %vm635, %v574, 0
      %v667 = vsel %vm635, %v575, 0
      %v670 = vsel %vm635, %v576, 0
      %v673 = vsel %vm635, %v577, 0
      %v676 = vsel %vm635, %v578, 0
      %v679 = vsel %vm635, %v579, 0
      %v682 = vsel %vm635, %v580, 0
      %v685 = vsel %vm635, %v581, 0
      %v688 = vsel %vm635, %v582, 0
      %v691 = vsel %vm635, %v583, 0
      %v694 = vsel %vm635, %v584, 0
      %v697 = vsel %vm635, %v585, 0
      %v700 = vsel %vm635, %v586, 0
      %v703 = vsel %vm635, %v587, 0
      %v706 = vsel %vm635, %v588, 0
      %v709 = vsel %vm635, %v589, 0
      %v712 = vsel %vm635, %v590, 0
      %v715 = vsel %vm635, %v591, 0
      %v718 = vsel %vm635, %v592, 0
      %v721 = vsel %vm635, %v593, 0
      %v724 = vsel %vm635, %v594, 0
      %v727 = vsel %vm635, %v595, 0
      %v730 = vsel %vm635, %v596, 0
      %v733 = vsel %vm635, %v597, 0
      %v736 = vsel %vm635, %v598, 0
      %v739 = vsel %vm635, %v599, 0
      %v742 = vsel %vm635, %v600, 0
      %v745 = vsel %vm635, %v601, 0
      %v748 = vsel %vm635, %v602, 0
      %v751 = vsel %vm635, %v603, 0
      %v754 = vsel %vm635, %v604, 0
      %v757 = vsel %vm635, %v605, 0
      %v760 = vsel %vm635, %v606, 0
      %v763 = vsel %vm635, %v607, 0
      %v766 = vsel %vm635, %v608, 0
      %v769 = vsel %vm635, %v609, 0
      %v772 = vsel %vm635, %v610, 0
      %v775 = vsel %vm635, %v611, 0
      %v778 = vsel %vm635, %v612, 0
      %v781 = vsel %vm635, %v613, 0
      %v784 = vsel %vm635, %v614, 0
      %v787 = vsel %vm635, %v615, 0
      %v790 = vsel %vm635, %v616, 0
      %v793 = vsel %vm635, %v617, 0
      %v796 = vsel %vm635, %v618, 0
      %v799 = vsel %vm635, %v619, 0
      %v802 = vsel %vm635, %v620, 0
      %v805 = vsel %vm635, %v621, 0
      %v808 = vsel %vm635, %v622, 0
      %v811 = vsel %vm635, %v623, 0
      %v814 = vsel %vm635, %v624, 0
      %v817 = vsel %vm635, %v625, 0
      %v820 = vsel %vm635, %v626, 0
      %v823 = vsel %vm635, %v627, 0
      %v826 = vsel %vm635, %v628, 0
      %828 = vmatpush.bf16.msra.mxu0 0
      %829 = vmatpush.bf16.msra.mxu0 0
      %830 = vmatpush.bf16.msra.mxu0 0
      %831 = vmatpush.bf16.msra.mxu0 0
      %832 = vmatpush.bf16.msra.mxu0 0
      %833 = vmatpush.bf16.msra.mxu0 0
      %834 = vmatpush.bf16.msra.mxu0 0
      %835 = vmatpush.bf16.msra.mxu0 %v633
      %836 = vmatmul.bf16.gmra.mxu0 %v637
      %v837 = vpop.f32.mrf.mxu0
      %v838 = vadd.f32 %v307, %v837
      %v839 = vpop.f32.mrf.mxu0
      %v840 = vadd.f32 %v307, %v839
      %841 = vmatmul.bf16.gmra.mxu0 %v640
      %v842 = vpop.f32.mrf.mxu0
      %v843 = vadd.f32 %v307, %v842
      %v844 = vpop.f32.mrf.mxu0
      %v845 = vadd.f32 %v307, %v844
      %846 = vmatmul.bf16.gmra.mxu0 %v643
      %v847 = vpop.f32.mrf.mxu0
      %v848 = vadd.f32 %v307, %v847
      %v849 = vpop.f32.mrf.mxu0
      %v850 = vadd.f32 %v307, %v849
      %851 = vmatmul.bf16.gmra.mxu0 %v646
      %v852 = vpop.f32.mrf.mxu0
      %v853 = vadd.f32 %v307, %v852
      %v854 = vpop.f32.mrf.mxu0
      %v855 = vadd.f32 %v307, %v854
      %856 = vmatmul.bf16.gmra.mxu0 %v649
      %v857 = vpop.f32.mrf.mxu0
      %v858 = vadd.f32 %v307, %v857
      %v859 = vpop.f32.mrf.mxu0
      %v860 = vadd.f32 %v307, %v859
      %861 = vmatmul.bf16.gmra.mxu0 %v652
      %v862 = vpop.f32.mrf.mxu0
      %v863 = vadd.f32 %v307, %v862
      %v864 = vpop.f32.mrf.mxu0
      %v865 = vadd.f32 %v307, %v864
      %866 = vmatmul.bf16.gmra.mxu0 %v655
      %v867 = vpop.f32.mrf.mxu0
      %v868 = vadd.f32 %v307, %v867
      %v869 = vpop.f32.mrf.mxu0
      %v870 = vadd.f32 %v307, %v869
      %871 = vmatmul.bf16.gmra.mxu0 %v658
      %v872 = vpop.f32.mrf.mxu0
      %v873 = vadd.f32 %v307, %v872
      %v874 = vpop.f32.mrf.mxu0
      %v875 = vadd.f32 %v307, %v874
      %876 = vmatmul.bf16.gmra.mxu0 %v661
      %v877 = vpop.f32.mrf.mxu0
      %v878 = vadd.f32 %v307, %v877
      %v879 = vpop.f32.mrf.mxu0
      %v880 = vadd.f32 %v307, %v879
      %881 = vmatmul.bf16.gmra.mxu0 %v664
      %v882 = vpop.f32.mrf.mxu0
      %v883 = vadd.f32 %v307, %v882
      %v884 = vpop.f32.mrf.mxu0
      %v885 = vadd.f32 %v307, %v884
      %886 = vmatmul.bf16.gmra.mxu0 %v667
      %v887 = vpop.f32.mrf.mxu0
      %v888 = vadd.f32 %v307, %v887
      %v889 = vpop.f32.mrf.mxu0
      %v890 = vadd.f32 %v307, %v889
      %891 = vmatmul.bf16.gmra.mxu0 %v670
      %v892 = vpop.f32.mrf.mxu0
      %v893 = vadd.f32 %v307, %v892
      %v894 = vpop.f32.mrf.mxu0
      %v895 = vadd.f32 %v307, %v894
      %896 = vmatmul.bf16.gmra.mxu0 %v673
      %v897 = vpop.f32.mrf.mxu0
      %v898 = vadd.f32 %v307, %v897
      %v899 = vpop.f32.mrf.mxu0
      %v900 = vadd.f32 %v307, %v899
      %901 = vmatmul.bf16.gmra.mxu0 %v676
      %v902 = vpop.f32.mrf.mxu0
      %v903 = vadd.f32 %v307, %v902
      %v904 = vpop.f32.mrf.mxu0
      %v905 = vadd.f32 %v307, %v904
      %906 = vmatmul.bf16.gmra.mxu0 %v679
      %v907 = vpop.f32.mrf.mxu0
      %v908 = vadd.f32 %v307, %v907
      %v909 = vpop.f32.mrf.mxu0
      %v910 = vadd.f32 %v307, %v909
      %911 = vmatmul.bf16.gmra.mxu0 %v682
      %v912 = vpop.f32.mrf.mxu0
      %v913 = vadd.f32 %v307, %v912
      %v914 = vpop.f32.mrf.mxu0
      %v915 = vadd.f32 %v307, %v914
      %916 = vmatmul.bf16.gmra.mxu0 %v685
      %v917 = vpop.f32.mrf.mxu0
      %v918 = vadd.f32 %v307, %v917
      %v919 = vpop.f32.mrf.mxu0
      %v920 = vadd.f32 %v307, %v919
      %921 = vmatmul.bf16.gmra.mxu0 %v688
      %v922 = vpop.f32.mrf.mxu0
      %v923 = vadd.f32 %v307, %v922
      %v924 = vpop.f32.mrf.mxu0
      %v925 = vadd.f32 %v307, %v924
      %926 = vmatmul.bf16.gmra.mxu0 %v691
      %v927 = vpop.f32.mrf.mxu0
      %v928 = vadd.f32 %v307, %v927
      %v929 = vpop.f32.mrf.mxu0
      %v930 = vadd.f32 %v307, %v929
      %931 = vmatmul.bf16.gmra.mxu0 %v694
      %v932 = vpop.f32.mrf.mxu0
      %v933 = vadd.f32 %v307, %v932
      %v934 = vpop.f32.mrf.mxu0
      %v935 = vadd.f32 %v307, %v934
      %936 = vmatmul.bf16.gmra.mxu0 %v697
      %v937 = vpop.f32.mrf.mxu0
      %v938 = vadd.f32 %v307, %v937
      %v939 = vpop.f32.mrf.mxu0
      %v940 = vadd.f32 %v307, %v939
      %941 = vmatmul.bf16.gmra.mxu0 %v700
      %v942 = vpop.f32.mrf.mxu0
      %v943 = vadd.f32 %v307, %v942
      %v944 = vpop.f32.mrf.mxu0
      %v945 = vadd.f32 %v307, %v944
      %946 = vmatmul.bf16.gmra.mxu0 %v703
      %v947 = vpop.f32.mrf.mxu0
      %v948 = vadd.f32 %v307, %v947
      %v949 = vpop.f32.mrf.mxu0
      %v950 = vadd.f32 %v307, %v949
      %951 = vmatmul.bf16.gmra.mxu0 %v706
      %v952 = vpop.f32.mrf.mxu0
      %v953 = vadd.f32 %v307, %v952
      %v954 = vpop.f32.mrf.mxu0
      %v955 = vadd.f32 %v307, %v954
      %956 = vmatmul.bf16.gmra.mxu0 %v709
      %v957 = vpop.f32.mrf.mxu0
      %v958 = vadd.f32 %v307, %v957
      %v959 = vpop.f32.mrf.mxu0
      %v960 = vadd.f32 %v307, %v959
      %961 = vmatmul.bf16.gmra.mxu0 %v712
      %v962 = vpop.f32.mrf.mxu0
      %v963 = vadd.f32 %v307, %v962
      %v964 = vpop.f32.mrf.mxu0
      %v965 = vadd.f32 %v307, %v964
      %966 = vmatmul.bf16.gmra.mxu0 %v715
      %v967 = vpop.f32.mrf.mxu0
      %v968 = vadd.f32 %v307, %v967
      %v969 = vpop.f32.mrf.mxu0
      %v970 = vadd.f32 %v307, %v969
      %971 = vmatmul.bf16.gmra.mxu0 %v718
      %v972 = vpop.f32.mrf.mxu0
      %v973 = vadd.f32 %v307, %v972
      %v974 = vpop.f32.mrf.mxu0
      %v975 = vadd.f32 %v307, %v974
      %976 = vmatmul.bf16.gmra.mxu0 %v721
      %v977 = vpop.f32.mrf.mxu0
      %v978 = vadd.f32 %v307, %v977
      %v979 = vpop.f32.mrf.mxu0
      %v980 = vadd.f32 %v307, %v979
      %981 = vmatmul.bf16.gmra.mxu0 %v724
      %v982 = vpop.f32.mrf.mxu0
      %v983 = vadd.f32 %v307, %v982
      %v984 = vpop.f32.mrf.mxu0
      %v985 = vadd.f32 %v307, %v984
      %986 = vmatmul.bf16.gmra.mxu0 %v727
      %v987 = vpop.f32.mrf.mxu0
      %v988 = vadd.f32 %v307, %v987
      %v989 = vpop.f32.mrf.mxu0
      %v990 = vadd.f32 %v307, %v989
      %991 = vmatmul.bf16.gmra.mxu0 %v730
      %v992 = vpop.f32.mrf.mxu0
      %v993 = vadd.f32 %v307, %v992
      %v994 = vpop.f32.mrf.mxu0
      %v995 = vadd.f32 %v307, %v994
      %996 = vmatmul.bf16.gmra.mxu0 %v733
      %v997 = vpop.f32.mrf.mxu0
      %v998 = vadd.f32 %v307, %v997
      %v999 = vpop.f32.mrf.mxu0
      %v1000 = vadd.f32 %v307, %v999
      %1001 = vmatmul.bf16.gmra.mxu0 %v736
      %v1002 = vpop.f32.mrf.mxu0
      %v1003 = vadd.f32 %v307, %v1002
      %v1004 = vpop.f32.mrf.mxu0
      %v1005 = vadd.f32 %v307, %v1004
      %1006 = vmatmul.bf16.gmra.mxu0 %v739
      %v1007 = vpop.f32.mrf.mxu0
      %v1008 = vadd.f32 %v307, %v1007
      %v1009 = vpop.f32.mrf.mxu0
      %v1010 = vadd.f32 %v307, %v1009
      %1011 = vmatmul.bf16.gmra.mxu0 %v742
      %v1012 = vpop.f32.mrf.mxu0
      %v1013 = vadd.f32 %v307, %v1012
      %v1014 = vpop.f32.mrf.mxu0
      %v1015 = vadd.f32 %v307, %v1014
      %1016 = vmatmul.bf16.gmra.mxu0 %v745
      %v1017 = vpop.f32.mrf.mxu0
      %v1018 = vadd.f32 %v307, %v1017
      %v1019 = vpop.f32.mrf.mxu0
      %v1020 = vadd.f32 %v307, %v1019
      %1021 = vmatmul.bf16.gmra.mxu0 %v748
      %v1022 = vpop.f32.mrf.mxu0
      %v1023 = vadd.f32 %v307, %v1022
      %v1024 = vpop.f32.mrf.mxu0
      %v1025 = vadd.f32 %v307, %v1024
      %1026 = vmatmul.bf16.gmra.mxu0 %v751
      %v1027 = vpop.f32.mrf.mxu0
      %v1028 = vadd.f32 %v307, %v1027
      %v1029 = vpop.f32.mrf.mxu0
      %v1030 = vadd.f32 %v307, %v1029
      %1031 = vmatmul.bf16.gmra.mxu0 %v754
      %v1032 = vpop.f32.mrf.mxu0
      %v1033 = vadd.f32 %v307, %v1032
      %v1034 = vpop.f32.mrf.mxu0
      %v1035 = vadd.f32 %v307, %v1034
      %1036 = vmatmul.bf16.gmra.mxu0 %v757
      %v1037 = vpop.f32.mrf.mxu0
      %v1038 = vadd.f32 %v307, %v1037
      %v1039 = vpop.f32.mrf.mxu0
      %v1040 = vadd.f32 %v307, %v1039
      %1041 = vmatmul.bf16.gmra.mxu0 %v760
      %v1042 = vpop.f32.mrf.mxu0
      %v1043 = vadd.f32 %v307, %v1042
      %v1044 = vpop.f32.mrf.mxu0
      %v1045 = vadd.f32 %v307, %v1044
      %1046 = vmatmul.bf16.gmra.mxu0 %v763
      %v1047 = vpop.f32.mrf.mxu0
      %v1048 = vadd.f32 %v307, %v1047
      %v1049 = vpop.f32.mrf.mxu0
      %v1050 = vadd.f32 %v307, %v1049
      %1051 = vmatmul.bf16.gmra.mxu0 %v766
      %v1052 = vpop.f32.mrf.mxu0
      %v1053 = vadd.f32 %v307, %v1052
      %v1054 = vpop.f32.mrf.mxu0
      %v1055 = vadd.f32 %v307, %v1054
      %1056 = vmatmul.bf16.gmra.mxu0 %v769
      %v1057 = vpop.f32.mrf.mxu0
      %v1058 = vadd.f32 %v307, %v1057
      %v1059 = vpop.f32.mrf.mxu0
      %v1060 = vadd.f32 %v307, %v1059
      %1061 = vmatmul.bf16.gmra.mxu0 %v772
      %v1062 = vpop.f32.mrf.mxu0
      %v1063 = vadd.f32 %v307, %v1062
      %v1064 = vpop.f32.mrf.mxu0
      %v1065 = vadd.f32 %v307, %v1064
      %1066 = vmatmul.bf16.gmra.mxu0 %v775
      %v1067 = vpop.f32.mrf.mxu0
      %v1068 = vadd.f32 %v307, %v1067
      %v1069 = vpop.f32.mrf.mxu0
      %v1070 = vadd.f32 %v307, %v1069
      %1071 = vmatmul.bf16.gmra.mxu0 %v778
      %v1072 = vpop.f32.mrf.mxu0
      %v1073 = vadd.f32 %v307, %v1072
      %v1074 = vpop.f32.mrf.mxu0
      %v1075 = vadd.f32 %v307, %v1074
      %1076 = vmatmul.bf16.gmra.mxu0 %v781
      %v1077 = vpop.f32.mrf.mxu0
      %v1078 = vadd.f32 %v307, %v1077
      %v1079 = vpop.f32.mrf.mxu0
      %v1080 = vadd.f32 %v307, %v1079
      %1081 = vmatmul.bf16.gmra.mxu0 %v784
      %v1082 = vpop.f32.mrf.mxu0
      %v1083 = vadd.f32 %v307, %v1082
      %v1084 = vpop.f32.mrf.mxu0
      %v1085 = vadd.f32 %v307, %v1084
      %1086 = vmatmul.bf16.gmra.mxu0 %v787
      %v1087 = vpop.f32.mrf.mxu0
      %v1088 = vadd.f32 %v307, %v1087
      %v1089 = vpop.f32.mrf.mxu0
      %v1090 = vadd.f32 %v307, %v1089
      %1091 = vmatmul.bf16.gmra.mxu0 %v790
      %v1092 = vpop.f32.mrf.mxu0
      %v1093 = vadd.f32 %v307, %v1092
      %v1094 = vpop.f32.mrf.mxu0
      %v1095 = vadd.f32 %v307, %v1094
      %1096 = vmatmul.bf16.gmra.mxu0 %v793
      %v1097 = vpop.f32.mrf.mxu0
      %v1098 = vadd.f32 %v307, %v1097
      %v1099 = vpop.f32.mrf.mxu0
      %v1100 = vadd.f32 %v307, %v1099
      %1101 = vmatmul.bf16.gmra.mxu0 %v796
      %v1102 = vpop.f32.mrf.mxu0
      %v1103 = vadd.f32 %v307, %v1102
      %v1104 = vpop.f32.mrf.mxu0
      %v1105 = vadd.f32 %v307, %v1104
      %1106 = vmatmul.bf16.gmra.mxu0 %v799
      %v1107 = vpop.f32.mrf.mxu0
      %v1108 = vadd.f32 %v307, %v1107
      %v1109 = vpop.f32.mrf.mxu0
      %v1110 = vadd.f32 %v307, %v1109
      %1111 = vmatmul.bf16.gmra.mxu0 %v802
      %v1112 = vpop.f32.mrf.mxu0
      %v1113 = vadd.f32 %v307, %v1112
      %v1114 = vpop.f32.mrf.mxu0
      %v1115 = vadd.f32 %v307, %v1114
      %1116 = vmatmul.bf16.gmra.mxu0 %v805
      %v1117 = vpop.f32.mrf.mxu0
      %v1118 = vadd.f32 %v307, %v1117
      %v1119 = vpop.f32.mrf.mxu0
      %v1120 = vadd.f32 %v307, %v1119
      %1121 = vmatmul.bf16.gmra.mxu0 %v808
      %v1122 = vpop.f32.mrf.mxu0
      %v1123 = vadd.f32 %v307, %v1122
      %v1124 = vpop.f32.mrf.mxu0
      %v1125 = vadd.f32 %v307, %v1124
      %1126 = vmatmul.bf16.gmra.mxu0 %v811
      %v1127 = vpop.f32.mrf.mxu0
      %v1128 = vadd.f32 %v307, %v1127
      %v1129 = vpop.f32.mrf.mxu0
      %v1130 = vadd.f32 %v307, %v1129
      %1131 = vmatmul.bf16.gmra.mxu0 %v814
      %v1132 = vpop.f32.mrf.mxu0
      %v1133 = vadd.f32 %v307, %v1132
      %v1134 = vpop.f32.mrf.mxu0
      %v1135 = vadd.f32 %v307, %v1134
      %1136 = vmatmul.bf16.gmra.mxu0 %v817
      %v1137 = vpop.f32.mrf.mxu0
      %v1138 = vadd.f32 %v307, %v1137
      %v1139 = vpop.f32.mrf.mxu0
      %v1140 = vadd.f32 %v307, %v1139
      %1141 = vmatmul.bf16.gmra.mxu0 %v820
      %v1142 = vpop.f32.mrf.mxu0
      %v1143 = vadd.f32 %v307, %v1142
      %v1144 = vpop.f32.mrf.mxu0
      %v1145 = vadd.f32 %v307, %v1144
      %1146 = vmatmul.bf16.gmra.mxu0 %v823
      %v1147 = vpop.f32.mrf.mxu0
      %v1148 = vadd.f32 %v307, %v1147
      %v1149 = vpop.f32.mrf.mxu0
      %v1150 = vadd.f32 %v307, %v1149
      %1151 = vmatmul.bf16.gmra.mxu0 %v826
      %v1152 = vpop.f32.mrf.mxu0
      %v1153 = vadd.f32 %v307, %v1152
      %v1154 = vpop.f32.mrf.mxu0
      %v1155 = vadd.f32 %v307, %v1154
      %1156 = vdwg.mxu0
      %vm1157 = vcmp.ge.f32.partialorder %v838, 0.0
      %vm1158 = vcmp.ge.f32.partialorder %v840, 0.0
      %vm1159 = vcmp.ge.f32.partialorder %v843, 0.0
      %vm1160 = vcmp.ge.f32.partialorder %v845, 0.0
      %vm1161 = vcmp.ge.f32.partialorder %v848, 0.0
      %vm1162 = vcmp.ge.f32.partialorder %v850, 0.0
      %vm1163 = vcmp.ge.f32.partialorder %v853, 0.0
      %vm1164 = vcmp.ge.f32.partialorder %v855, 0.0
      %vm1165 = vcmp.ge.f32.partialorder %v858, 0.0
      %vm1166 = vcmp.ge.f32.partialorder %v860, 0.0
      %vm1167 = vcmp.ge.f32.partialorder %v863, 0.0
      %vm1168 = vcmp.ge.f32.partialorder %v865, 0.0
      %vm1169 = vcmp.ge.f32.partialorder %v868, 0.0
      %vm1170 = vcmp.ge.f32.partialorder %v870, 0.0
      %vm1171 = vcmp.ge.f32.partialorder %v873, 0.0
      %vm1172 = vcmp.ge.f32.partialorder %v875, 0.0
      %vm1173 = vcmp.ge.f32.partialorder %v878, 0.0
      %vm1174 = vcmp.ge.f32.partialorder %v880, 0.0
      %vm1175 = vcmp.ge.f32.partialorder %v883, 0.0
      %vm1176 = vcmp.ge.f32.partialorder %v885, 0.0
      %vm1177 = vcmp.ge.f32.partialorder %v888, 0.0
      %vm1178 = vcmp.ge.f32.partialorder %v890, 0.0
      %vm1179 = vcmp.ge.f32.partialorder %v893, 0.0
      %vm1180 = vcmp.ge.f32.partialorder %v895, 0.0
      %vm1181 = vcmp.ge.f32.partialorder %v898, 0.0
      %vm1182 = vcmp.ge.f32.partialorder %v900, 0.0
      %vm1183 = vcmp.ge.f32.partialorder %v903, 0.0
      %vm1184 = vcmp.ge.f32.partialorder %v905, 0.0
      %vm1185 = vcmp.ge.f32.partialorder %v908, 0.0
      %vm1186 = vcmp.ge.f32.partialorder %v910, 0.0
      %vm1187 = vcmp.ge.f32.partialorder %v913, 0.0
      %vm1188 = vcmp.ge.f32.partialorder %v915, 0.0
      %vm1189 = vcmp.ge.f32.partialorder %v918, 0.0
      %vm1190 = vcmp.ge.f32.partialorder %v920, 0.0
      %vm1191 = vcmp.ge.f32.partialorder %v923, 0.0
      %vm1192 = vcmp.ge.f32.partialorder %v925, 0.0
      %vm1193 = vcmp.ge.f32.partialorder %v928, 0.0
      %vm1194 = vcmp.ge.f32.partialorder %v930, 0.0
      %vm1195 = vcmp.ge.f32.partialorder %v933, 0.0
      %vm1196 = vcmp.ge.f32.partialorder %v935, 0.0
      %vm1197 = vcmp.ge.f32.partialorder %v938, 0.0
      %vm1198 = vcmp.ge.f32.partialorder %v940, 0.0
      %vm1199 = vcmp.ge.f32.partialorder %v943, 0.0
      %vm1200 = vcmp.ge.f32.partialorder %v945, 0.0
      %vm1201 = vcmp.ge.f32.partialorder %v948, 0.0
      %vm1202 = vcmp.ge.f32.partialorder %v950, 0.0
      %vm1203 = vcmp.ge.f32.partialorder %v953, 0.0
      %vm1204 = vcmp.ge.f32.partialorder %v955, 0.0
      %vm1205 = vcmp.ge.f32.partialorder %v958, 0.0
      %vm1206 = vcmp.ge.f32.partialorder %v960, 0.0
      %vm1207 = vcmp.ge.f32.partialorder %v963, 0.0
      %vm1208 = vcmp.ge.f32.partialorder %v965, 0.0
      %vm1209 = vcmp.ge.f32.partialorder %v968, 0.0
      %vm1210 = vcmp.ge.f32.partialorder %v970, 0.0
      %vm1211 = vcmp.ge.f32.partialorder %v973, 0.0
      %vm1212 = vcmp.ge.f32.partialorder %v975, 0.0
      %vm1213 = vcmp.ge.f32.partialorder %v978, 0.0
      %vm1214 = vcmp.ge.f32.partialorder %v980, 0.0
      %vm1215 = vcmp.ge.f32.partialorder %v983, 0.0
      %vm1216 = vcmp.ge.f32.partialorder %v985, 0.0
      %vm1217 = vcmp.ge.f32.partialorder %v988, 0.0
      %vm1218 = vcmp.ge.f32.partialorder %v990, 0.0
      %vm1219 = vcmp.ge.f32.partialorder %v993, 0.0
      %vm1220 = vcmp.ge.f32.partialorder %v995, 0.0
      %vm1221 = vcmp.ge.f32.partialorder %v998, 0.0
      %vm1222 = vcmp.ge.f32.partialorder %v1000, 0.0
      %vm1223 = vcmp.ge.f32.partialorder %v1003, 0.0
      %vm1224 = vcmp.ge.f32.partialorder %v1005, 0.0
      %vm1225 = vcmp.ge.f32.partialorder %v1008, 0.0
      %vm1226 = vcmp.ge.f32.partialorder %v1010, 0.0
      %vm1227 = vcmp.ge.f32.partialorder %v1013, 0.0
      %vm1228 = vcmp.ge.f32.partialorder %v1015, 0.0
      %vm1229 = vcmp.ge.f32.partialorder %v1018, 0.0
      %vm1230 = vcmp.ge.f32.partialorder %v1020, 0.0
      %vm1231 = vcmp.ge.f32.partialorder %v1023, 0.0
      %vm1232 = vcmp.ge.f32.partialorder %v1025, 0.0
      %vm1233 = vcmp.ge.f32.partialorder %v1028, 0.0
      %vm1234 = vcmp.ge.f32.partialorder %v1030, 0.0
      %vm1235 = vcmp.ge.f32.partialorder %v1033, 0.0
      %vm1236 = vcmp.ge.f32.partialorder %v1035, 0.0
      %vm1237 = vcmp.ge.f32.partialorder %v1038, 0.0
      %vm1238 = vcmp.ge.f32.partialorder %v1040, 0.0
      %vm1239 = vcmp.ge.f32.partialorder %v1043, 0.0
      %vm1240 = vcmp.ge.f32.partialorder %v1045, 0.0
      %vm1241 = vcmp.ge.f32.partialorder %v1048, 0.0
      %vm1242 = vcmp.ge.f32.partialorder %v1050, 0.0
      %vm1243 = vcmp.ge.f32.partialorder %v1053, 0.0
      %vm1244 = vcmp.ge.f32.partialorder %v1055, 0.0
      %vm1245 = vcmp.ge.f32.partialorder %v1058, 0.0
      %vm1246 = vcmp.ge.f32.partialorder %v1060, 0.0
      %vm1247 = vcmp.ge.f32.partialorder %v1063, 0.0
      %vm1248 = vcmp.ge.f32.partialorder %v1065, 0.0
      %vm1249 = vcmp.ge.f32.partialorder %v1068, 0.0
      %vm1250 = vcmp.ge.f32.partialorder %v1070, 0.0
      %vm1251 = vcmp.ge.f32.partialorder %v1073, 0.0
      %vm1252 = vcmp.ge.f32.partialorder %v1075, 0.0
      %vm1253 = vcmp.ge.f32.partialorder %v1078, 0.0
      %vm1254 = vcmp.ge.f32.partialorder %v1080, 0.0
      %vm1255 = vcmp.ge.f32.partialorder %v1083, 0.0
      %vm1256 = vcmp.ge.f32.partialorder %v1085, 0.0
      %vm1257 = vcmp.ge.f32.partialorder %v1088, 0.0
      %vm1258 = vcmp.ge.f32.partialorder %v1090, 0.0
      %vm1259 = vcmp.ge.f32.partialorder %v1093, 0.0
      %vm1260 = vcmp.ge.f32.partialorder %v1095, 0.0
      %vm1261 = vcmp.ge.f32.partialorder %v1098, 0.0
      %vm1262 = vcmp.ge.f32.partialorder %v1100, 0.0
      %vm1263 = vcmp.ge.f32.partialorder %v1103, 0.0
      %vm1264 = vcmp.ge.f32.partialorder %v1105, 0.0
      %vm1265 = vcmp.ge.f32.partialorder %v1108, 0.0
      %vm1266 = vcmp.ge.f32.partialorder %v1110, 0.0
      %vm1267 = vcmp.ge.f32.partialorder %v1113, 0.0
      %vm1268 = vcmp.ge.f32.partialorder %v1115, 0.0
      %vm1269 = vcmp.ge.f32.partialorder %v1118, 0.0
      %vm1270 = vcmp.ge.f32.partialorder %v1120, 0.0
      %vm1271 = vcmp.ge.f32.partialorder %v1123, 0.0
      %vm1272 = vcmp.ge.f32.partialorder %v1125, 0.0
      %vm1273 = vcmp.ge.f32.partialorder %v1128, 0.0
      %vm1274 = vcmp.ge.f32.partialorder %v1130, 0.0
      %vm1275 = vcmp.ge.f32.partialorder %v1133, 0.0
      %vm1276 = vcmp.ge.f32.partialorder %v1135, 0.0
      %vm1277 = vcmp.ge.f32.partialorder %v1138, 0.0
      %vm1278 = vcmp.ge.f32.partialorder %v1140, 0.0
      %vm1279 = vcmp.ge.f32.partialorder %v1143, 0.0
      %vm1280 = vcmp.ge.f32.partialorder %v1145, 0.0
      %vm1281 = vcmp.ge.f32.partialorder %v1148, 0.0
      %vm1282 = vcmp.ge.f32.partialorder %v1150, 0.0
      %vm1283 = vcmp.ge.f32.partialorder %v1153, 0.0
      %vm1284 = vcmp.ge.f32.partialorder %v1155, 0.0
      %v1285 = vmul.f32 %v838, 0.1
      %v1286 = vmul.f32 %v840, 0.1
      %v1287 = vmul.f32 %v843, 0.1
      %v1288 = vmul.f32 %v845, 0.1
      %v1289 = vmul.f32 %v848, 0.1
      %v1290 = vmul.f32 %v850, 0.1
      %v1291 = vmul.f32 %v853, 0.1
      %v1292 = vmul.f32 %v855, 0.1
      %v1293 = vmul.f32 %v858, 0.1
      %v1294 = vmul.f32 %v860, 0.1
      %v1295 = vmul.f32 %v863, 0.1
      %v1296 = vmul.f32 %v865, 0.1
      %v1297 = vmul.f32 %v868, 0.1
      %v1298 = vmul.f32 %v870, 0.1
      %v1299 = vmul.f32 %v873, 0.1
      %v1300 = vmul.f32 %v875, 0.1
      %v1301 = vmul.f32 %v878, 0.1
      %v1302 = vmul.f32 %v880, 0.1
      %v1303 = vmul.f32 %v883, 0.1
      %v1304 = vmul.f32 %v885, 0.1
      %v1305 = vmul.f32 %v888, 0.1
      %v1306 = vmul.f32 %v890, 0.1
      %v1307 = vmul.f32 %v893, 0.1
      %v1308 = vmul.f32 %v895, 0.1
      %v1309 = vmul.f32 %v898, 0.1
      %v1310 = vmul.f32 %v900, 0.1
      %v1311 = vmul.f32 %v903, 0.1
      %v1312 = vmul.f32 %v905, 0.1
      %v1313 = vmul.f32 %v908, 0.1
      %v1314 = vmul.f32 %v910, 0.1
      %v1315 = vmul.f32 %v913, 0.1
      %v1316 = vmul.f32 %v915, 0.1
      %v1317 = vmul.f32 %v918, 0.1
      %v1318 = vmul.f32 %v920, 0.1
      %v1319 = vmul.f32 %v923, 0.1
      %v1320 = vmul.f32 %v925, 0.1
      %v1321 = vmul.f32 %v928, 0.1
      %v1322 = vmul.f32 %v930, 0.1
      %v1323 = vmul.f32 %v933, 0.1
      %v1324 = vmul.f32 %v935, 0.1
      %v1325 = vmul.f32 %v938, 0.1
      %v1326 = vmul.f32 %v940, 0.1
      %v1327 = vmul.f32 %v943, 0.1
      %v1328 = vmul.f32 %v945, 0.1
      %v1329 = vmul.f32 %v948, 0.1
      %v1330 = vmul.f32 %v950, 0.1
      %v1331 = vmul.f32 %v953, 0.1
      %v1332 = vmul.f32 %v955, 0.1
      %v1333 = vmul.f32 %v958, 0.1
      %v1334 = vmul.f32 %v960, 0.1
      %v1335 = vmul.f32 %v963, 0.1
      %v1336 = vmul.f32 %v965, 0.1
      %v1337 = vmul.f32 %v968, 0.1
      %v1338 = vmul.f32 %v970, 0.1
      %v1339 = vmul.f32 %v973, 0.1
      %v1340 = vmul.f32 %v975, 0.1
      %v1341 = vmul.f32 %v978, 0.1
      %v1342 = vmul.f32 %v980, 0.1
      %v1343 = vmul.f32 %v983, 0.1
      %v1344 = vmul.f32 %v985, 0.1
      %v1345 = vmul.f32 %v988, 0.1
      %v1346 = vmul.f32 %v990, 0.1
      %v1347 = vmul.f32 %v993, 0.1
      %v1348 = vmul.f32 %v995, 0.1
      %v1349 = vmul.f32 %v998, 0.1
      %v1350 = vmul.f32 %v1000, 0.1
      %v1351 = vmul.f32 %v1003, 0.1
      %v1352 = vmul.f32 %v1005, 0.1
      %v1353 = vmul.f32 %v1008, 0.1
      %v1354 = vmul.f32 %v1010, 0.1
      %v1355 = vmul.f32 %v1013, 0.1
      %v1356 = vmul.f32 %v1015, 0.1
      %v1357 = vmul.f32 %v1018, 0.1
      %v1358 = vmul.f32 %v1020, 0.1
      %v1359 = vmul.f32 %v1023, 0.1
      %v1360 = vmul.f32 %v1025, 0.1
      %v1361 = vmul.f32 %v1028, 0.1
      %v1362 = vmul.f32 %v1030, 0.1
      %v1363 = vmul.f32 %v1033, 0.1
      %v1364 = vmul.f32 %v1035, 0.1
      %v1365 = vmul.f32 %v1038, 0.1
      %v1366 = vmul.f32 %v1040, 0.1
      %v1367 = vmul.f32 %v1043, 0.1
      %v1368 = vmul.f32 %v1045, 0.1
      %v1369 = vmul.f32 %v1048, 0.1
      %v1370 = vmul.f32 %v1050, 0.1
      %v1371 = vmul.f32 %v1053, 0.1
      %v1372 = vmul.f32 %v1055, 0.1
      %v1373 = vmul.f32 %v1058, 0.1
      %v1374 = vmul.f32 %v1060, 0.1
      %v1375 = vmul.f32 %v1063, 0.1
      %v1376 = vmul.f32 %v1065, 0.1
      %v1377 = vmul.f32 %v1068, 0.1
      %v1378 = vmul.f32 %v1070, 0.1
      %v1379 = vmul.f32 %v1073, 0.1
      %v1380 = vmul.f32 %v1075, 0.1
      %v1381 = vmul.f32 %v1078, 0.1
      %v1382 = vmul.f32 %v1080, 0.1
      %v1383 = vmul.f32 %v1083, 0.1
      %v1384 = vmul.f32 %v1085, 0.1
      %v1385 = vmul.f32 %v1088, 0.1
      %v1386 = vmul.f32 %v1090, 0.1
      %v1387 = vmul.f32 %v1093, 0.1
      %v1388 = vmul.f32 %v1095, 0.1
      %v1389 = vmul.f32 %v1098, 0.1
      %v1390 = vmul.f32 %v1100, 0.1
      %v1391 = vmul.f32 %v1103, 0.1
      %v1392 = vmul.f32 %v1105, 0.1
      %v1393 = vmul.f32 %v1108, 0.1
      %v1394 = vmul.f32 %v1110, 0.1
      %v1395 = vmul.f32 %v1113, 0.1
      %v1396 = vmul.f32 %v1115, 0.1
      %v1397 = vmul.f32 %v1118, 0.1
      %v1398 = vmul.f32 %v1120, 0.1
      %v1399 = vmul.f32 %v1123, 0.1
      %v1400 = vmul.f32 %v1125, 0.1
      %v1401 = vmul.f32 %v1128, 0.1
      %v1402 = vmul.f32 %v1130, 0.1
      %v1403 = vmul.f32 %v1133, 0.1
      %v1404 = vmul.f32 %v1135, 0.1
      %v1405 = vmul.f32 %v1138, 0.1
      %v1406 = vmul.f32 %v1140, 0.1
      %v1407 = vmul.f32 %v1143, 0.1
      %v1408 = vmul.f32 %v1145, 0.1
      %v1409 = vmul.f32 %v1148, 0.1
      %v1410 = vmul.f32 %v1150, 0.1
      %v1411 = vmul.f32 %v1153, 0.1
      %v1412 = vmul.f32 %v1155, 0.1
      %v1413 = vsel %vm1157, %v838, %v1285
      %v1414 = vsel %vm1158, %v840, %v1286
      %v1415 = vsel %vm1159, %v843, %v1287
      %v1416 = vsel %vm1160, %v845, %v1288
      %v1417 = vsel %vm1161, %v848, %v1289
      %v1418 = vsel %vm1162, %v850, %v1290
      %v1419 = vsel %vm1163, %v853, %v1291
      %v1420 = vsel %vm1164, %v855, %v1292
      %v1421 = vsel %vm1165, %v858, %v1293
      %v1422 = vsel %vm1166, %v860, %v1294
      %v1423 = vsel %vm1167, %v863, %v1295
      %v1424 = vsel %vm1168, %v865, %v1296
      %v1425 = vsel %vm1169, %v868, %v1297
      %v1426 = vsel %vm1170, %v870, %v1298
      %v1427 = vsel %vm1171, %v873, %v1299
      %v1428 = vsel %vm1172, %v875, %v1300
      %v1429 = vsel %vm1173, %v878, %v1301
      %v1430 = vsel %vm1174, %v880, %v1302
      %v1431 = vsel %vm1175, %v883, %v1303
      %v1432 = vsel %vm1176, %v885, %v1304
      %v1433 = vsel %vm1177, %v888, %v1305
      %v1434 = vsel %vm1178, %v890, %v1306
      %v1435 = vsel %vm1179, %v893, %v1307
      %v1436 = vsel %vm1180, %v895, %v1308
      %v1437 = vsel %vm1181, %v898, %v1309
      %v1438 = vsel %vm1182, %v900, %v1310
      %v1439 = vsel %vm1183, %v903, %v1311
      %v1440 = vsel %vm1184, %v905, %v1312
      %v1441 = vsel %vm1185, %v908, %v1313
      %v1442 = vsel %vm1186, %v910, %v1314
      %v1443 = vsel %vm1187, %v913, %v1315
      %v1444 = vsel %vm1188, %v915, %v1316
      %v1445 = vsel %vm1189, %v918, %v1317
      %v1446 = vsel %vm1190, %v920, %v1318
      %v1447 = vsel %vm1191, %v923, %v1319
      %v1448 = vsel %vm1192, %v925, %v1320
      %v1449 = vsel %vm1193, %v928, %v1321
      %v1450 = vsel %vm1194, %v930, %v1322
      %v1451 = vsel %vm1195, %v933, %v1323
      %v1452 = vsel %vm1196, %v935, %v1324
      %v1453 = vsel %vm1197, %v938, %v1325
      %v1454 = vsel %vm1198, %v940, %v1326
      %v1455 = vsel %vm1199, %v943, %v1327
      %v1456 = vsel %vm1200, %v945, %v1328
      %v1457 = vsel %vm1201, %v948, %v1329
      %v1458 = vsel %vm1202, %v950, %v1330
      %v1459 = vsel %vm1203, %v953, %v1331
      %v1460 = vsel %vm1204, %v955, %v1332
      %v1461 = vsel %vm1205, %v958, %v1333
      %v1462 = vsel %vm1206, %v960, %v1334
      %v1463 = vsel %vm1207, %v963, %v1335
      %v1464 = vsel %vm1208, %v965, %v1336
      %v1465 = vsel %vm1209, %v968, %v1337
      %v1466 = vsel %vm1210, %v970, %v1338
      %v1467 = vsel %vm1211, %v973, %v1339
      %v1468 = vsel %vm1212, %v975, %v1340
      %v1469 = vsel %vm1213, %v978, %v1341
      %v1470 = vsel %vm1214, %v980, %v1342
      %v1471 = vsel %vm1215, %v983, %v1343
      %v1472 = vsel %vm1216, %v985, %v1344
      %v1473 = vsel %vm1217, %v988, %v1345
      %v1474 = vsel %vm1218, %v990, %v1346
      %v1475 = vsel %vm1219, %v993, %v1347
      %v1476 = vsel %vm1220, %v995, %v1348
      %v1477 = vsel %vm1221, %v998, %v1349
      %v1478 = vsel %vm1222, %v1000, %v1350
      %v1479 = vsel %vm1223, %v1003, %v1351
      %v1480 = vsel %vm1224, %v1005, %v1352
      %v1481 = vsel %vm1225, %v1008, %v1353
      %v1482 = vsel %vm1226, %v1010, %v1354
      %v1483 = vsel %vm1227, %v1013, %v1355
      %v1484 = vsel %vm1228, %v1015, %v1356
      %v1485 = vsel %vm1229, %v1018, %v1357
      %v1486 = vsel %vm1230, %v1020, %v1358
      %v1487 = vsel %vm1231, %v1023, %v1359
      %v1488 = vsel %vm1232, %v1025, %v1360
      %v1489 = vsel %vm1233, %v1028, %v1361
      %v1490 = vsel %vm1234, %v1030, %v1362
      %v1491 = vsel %vm1235, %v1033, %v1363
      %v1492 = vsel %vm1236, %v1035, %v1364
      %v1493 = vsel %vm1237, %v1038, %v1365
      %v1494 = vsel %vm1238, %v1040, %v1366
      %v1495 = vsel %vm1239, %v1043, %v1367
      %v1496 = vsel %vm1240, %v1045, %v1368
      %v1497 = vsel %vm1241, %v1048, %v1369
      %v1498 = vsel %vm1242, %v1050, %v1370
      %v1499 = vsel %vm1243, %v1053, %v1371
      %v1500 = vsel %vm1244, %v1055, %v1372
      %v1501 = vsel %vm1245, %v1058, %v1373
      %v1502 = vsel %vm1246, %v1060, %v1374
      %v1503 = vsel %vm1247, %v1063, %v1375
      %v1504 = vsel %vm1248, %v1065, %v1376
      %v1505 = vsel %vm1249, %v1068, %v1377
      %v1506 = vsel %vm1250, %v1070, %v1378
      %v1507 = vsel %vm1251, %v1073, %v1379
      %v1508 = vsel %vm1252, %v1075, %v1380
      %v1509 = vsel %vm1253, %v1078, %v1381
      %v1510 = vsel %vm1254, %v1080, %v1382
      %v1511 = vsel %vm1255, %v1083, %v1383
      %v1512 = vsel %vm1256, %v1085, %v1384
      %v1513 = vsel %vm1257, %v1088, %v1385
      %v1514 = vsel %vm1258, %v1090, %v1386
      %v1515 = vsel %vm1259, %v1093, %v1387
      %v1516 = vsel %vm1260, %v1095, %v1388
      %v1517 = vsel %vm1261, %v1098, %v1389
      %v1518 = vsel %vm1262, %v1100, %v1390
      %v1519 = vsel %vm1263, %v1103, %v1391
      %v1520 = vsel %vm1264, %v1105, %v1392
      %v1521 = vsel %vm1265, %v1108, %v1393
      %v1522 = vsel %vm1266, %v1110, %v1394
      %v1523 = vsel %vm1267, %v1113, %v1395
      %v1524 = vsel %vm1268, %v1115, %v1396
      %v1525 = vsel %vm1269, %v1118, %v1397
      %v1526 = vsel %vm1270, %v1120, %v1398
      %v1527 = vsel %vm1271, %v1123, %v1399
      %v1528 = vsel %vm1272, %v1125, %v1400
      %v1529 = vsel %vm1273, %v1128, %v1401
      %v1530 = vsel %vm1274, %v1130, %v1402
      %v1531 = vsel %vm1275, %v1133, %v1403
      %v1532 = vsel %vm1276, %v1135, %v1404
      %v1533 = vsel %vm1277, %v1138, %v1405
      %v1534 = vsel %vm1278, %v1140, %v1406
      %v1535 = vsel %vm1279, %v1143, %v1407
      %v1536 = vsel %vm1280, %v1145, %v1408
      %v1537 = vsel %vm1281, %v1148, %v1409
      %v1538 = vsel %vm1282, %v1150, %v1410
      %v1539 = vsel %vm1283, %v1153, %v1411
      %v1540 = vsel %vm1284, %v1155, %v1412
      %v1541 = vpack.c.bf16 %v1413, %v1413
      %v1542 = vpack.c.bf16 %v1414, %v1414
      %v1543 = vpack.c.bf16 %v1415, %v1415
      %v1544 = vpack.c.bf16 %v1416, %v1416
      %v1545 = vpack.c.bf16 %v1417, %v1417
      %v1546 = vpack.c.bf16 %v1418, %v1418
      %v1547 = vpack.c.bf16 %v1419, %v1419
      %v1548 = vpack.c.bf16 %v1420, %v1420
      %v1549 = vpack.c.bf16 %v1421, %v1421
      %v1550 = vpack.c.bf16 %v1422, %v1422
      %v1551 = vpack.c.bf16 %v1423, %v1423
      %v1552 = vpack.c.bf16 %v1424, %v1424
      %v1553 = vpack.c.bf16 %v1425, %v1425
      %v1554 = vpack.c.bf16 %v1426, %v1426
      %v1555 = vpack.c.bf16 %v1427, %v1427
      %v1556 = vpack.c.bf16 %v1428, %v1428
      %v1557 = vpack.c.bf16 %v1429, %v1429
      %v1558 = vpack.c.bf16 %v1430, %v1430
      %v1559 = vpack.c.bf16 %v1431, %v1431
      %v1560 = vpack.c.bf16 %v1432, %v1432
      %v1561 = vpack.c.bf16 %v1433, %v1433
      %v1562 = vpack.c.bf16 %v1434, %v1434
      %v1563 = vpack.c.bf16 %v1435, %v1435
      %v1564 = vpack.c.bf16 %v1436, %v1436
      %v1565 = vpack.c.bf16 %v1437, %v1437
      %v1566 = vpack.c.bf16 %v1438, %v1438
      %v1567 = vpack.c.bf16 %v1439, %v1439
      %v1568 = vpack.c.bf16 %v1440, %v1440
      %v1569 = vpack.c.bf16 %v1441, %v1441
      %v1570 = vpack.c.bf16 %v1442, %v1442
      %v1571 = vpack.c.bf16 %v1443, %v1443
      %v1572 = vpack.c.bf16 %v1444, %v1444
      %v1573 = vpack.c.bf16 %v1445, %v1445
      %v1574 = vpack.c.bf16 %v1446, %v1446
      %v1575 = vpack.c.bf16 %v1447, %v1447
      %v1576 = vpack.c.bf16 %v1448, %v1448
      %v1577 = vpack.c.bf16 %v1449, %v1449
      %v1578 = vpack.c.bf16 %v1450, %v1450
      %v1579 = vpack.c.bf16 %v1451, %v1451
      %v1580 = vpack.c.bf16 %v1452, %v1452
      %v1581 = vpack.c.bf16 %v1453, %v1453
      %v1582 = vpack.c.bf16 %v1454, %v1454
      %v1583 = vpack.c.bf16 %v1455, %v1455
      %v1584 = vpack.c.bf16 %v1456, %v1456
      %v1585 = vpack.c.bf16 %v1457, %v1457
      %v1586 = vpack.c.bf16 %v1458, %v1458
      %v1587 = vpack.c.bf16 %v1459, %v1459
      %v1588 = vpack.c.bf16 %v1460, %v1460
      %v1589 = vpack.c.bf16 %v1461, %v1461
      %v1590 = vpack.c.bf16 %v1462, %v1462
      %v1591 = vpack.c.bf16 %v1463, %v1463
      %v1592 = vpack.c.bf16 %v1464, %v1464
      %v1593 = vpack.c.bf16 %v1465, %v1465
      %v1594 = vpack.c.bf16 %v1466, %v1466
      %v1595 = vpack.c.bf16 %v1467, %v1467
      %v1596 = vpack.c.bf16 %v1468, %v1468
      %v1597 = vpack.c.bf16 %v1469, %v1469
      %v1598 = vpack.c.bf16 %v1470, %v1470
      %v1599 = vpack.c.bf16 %v1471, %v1471
      %v1600 = vpack.c.bf16 %v1472, %v1472
      %v1601 = vpack.c.bf16 %v1473, %v1473
      %v1602 = vpack.c.bf16 %v1474, %v1474
      %v1603 = vpack.c.bf16 %v1475, %v1475
      %v1604 = vpack.c.bf16 %v1476, %v1476
      %v1605 = vpack.c.bf16 %v1477, %v1477
      %v1606 = vpack.c.bf16 %v1478, %v1478
      %v1607 = vpack.c.bf16 %v1479, %v1479
      %v1608 = vpack.c.bf16 %v1480, %v1480
      %v1609 = vpack.c.bf16 %v1481, %v1481
      %v1610 = vpack.c.bf16 %v1482, %v1482
      %v1611 = vpack.c.bf16 %v1483, %v1483
      %v1612 = vpack.c.bf16 %v1484, %v1484
      %v1613 = vpack.c.bf16 %v1485, %v1485
      %v1614 = vpack.c.bf16 %v1486, %v1486
      %v1615 = vpack.c.bf16 %v1487, %v1487
      %v1616 = vpack.c.bf16 %v1488, %v1488
      %v1617 = vpack.c.bf16 %v1489, %v1489
      %v1618 = vpack.c.bf16 %v1490, %v1490
      %v1619 = vpack.c.bf16 %v1491, %v1491
      %v1620 = vpack.c.bf16 %v1492, %v1492
      %v1621 = vpack.c.bf16 %v1493, %v1493
      %v1622 = vpack.c.bf16 %v1494, %v1494
      %v1623 = vpack.c.bf16 %v1495, %v1495
      %v1624 = vpack.c.bf16 %v1496, %v1496
      %v1625 = vpack.c.bf16 %v1497, %v1497
      %v1626 = vpack.c.bf16 %v1498, %v1498
      %v1627 = vpack.c.bf16 %v1499, %v1499
      %v1628 = vpack.c.bf16 %v1500, %v1500
      %v1629 = vpack.c.bf16 %v1501, %v1501
      %v1630 = vpack.c.bf16 %v1502, %v1502
      %v1631 = vpack.c.bf16 %v1503, %v1503
      %v1632 = vpack.c.bf16 %v1504, %v1504
      %v1633 = vpack.c.bf16 %v1505, %v1505
      %v1634 = vpack.c.bf16 %v1506, %v1506
      %v1635 = vpack.c.bf16 %v1507, %v1507
      %v1636 = vpack.c.bf16 %v1508, %v1508
      %v1637 = vpack.c.bf16 %v1509, %v1509
      %v1638 = vpack.c.bf16 %v1510, %v1510
      %v1639 = vpack.c.bf16 %v1511, %v1511
      %v1640 = vpack.c.bf16 %v1512, %v1512
      %v1641 = vpack.c.bf16 %v1513, %v1513
      %v1642 = vpack.c.bf16 %v1514, %v1514
      %v1643 = vpack.c.bf16 %v1515, %v1515
      %v1644 = vpack.c.bf16 %v1516, %v1516
      %v1645 = vpack.c.bf16 %v1517, %v1517
      %v1646 = vpack.c.bf16 %v1518, %v1518
      %v1647 = vpack.c.bf16 %v1519, %v1519
      %v1648 = vpack.c.bf16 %v1520, %v1520
      %v1649 = vpack.c.bf16 %v1521, %v1521
      %v1650 = vpack.c.bf16 %v1522, %v1522
      %v1651 = vpack.c.bf16 %v1523, %v1523
      %v1652 = vpack.c.bf16 %v1524, %v1524
      %v1653 = vpack.c.bf16 %v1525, %v1525
      %v1654 = vpack.c.bf16 %v1526, %v1526
      %v1655 = vpack.c.bf16 %v1527, %v1527
      %v1656 = vpack.c.bf16 %v1528, %v1528
      %v1657 = vpack.c.bf16 %v1529, %v1529
      %v1658 = vpack.c.bf16 %v1530, %v1530
      %v1659 = vpack.c.bf16 %v1531, %v1531
      %v1660 = vpack.c.bf16 %v1532, %v1532
      %v1661 = vpack.c.bf16 %v1533, %v1533
      %v1662 = vpack.c.bf16 %v1534, %v1534
      %v1663 = vpack.c.bf16 %v1535, %v1535
      %v1664 = vpack.c.bf16 %v1536, %v1536
      %v1665 = vpack.c.bf16 %v1537, %v1537
      %v1666 = vpack.c.bf16 %v1538, %v1538
      %v1667 = vpack.c.bf16 %v1539, %v1539
      %v1668 = vpack.c.bf16 %v1540, %v1540
      %vm1669 = vcmask 60416
      %1670 = vst.msk [vmem:[%s172] sm:$0xf] %vm1669, %v1541
      %1671 = vst.msk [vmem:[%s172 + $0x4] sm:$0xf] %vm1669, %v1542
      %1672 = vst.msk [vmem:[%s172 + $0x8] sm:$0xf] %vm1669, %v1543
      %1673 = vst.msk [vmem:[%s172 + $0xc] sm:$0xf] %vm1669, %v1544
      %1674 = vst.msk [vmem:[%s172 + $0x10] sm:$0xf] %vm1669, %v1545
      %1675 = vst.msk [vmem:[%s172 + $0x14] sm:$0xf] %vm1669, %v1546
      %1676 = vst.msk [vmem:[%s172 + $0x18] sm:$0xf] %vm1669, %v1547
      %1677 = vst.msk [vmem:[%s172 + $0x1c] sm:$0xf] %vm1669, %v1548
      %1678 = vst.msk [vmem:[%s172 + $0x20] sm:$0xf] %vm1669, %v1549
      %1679 = vst.msk [vmem:[%s172 + $0x24] sm:$0xf] %vm1669, %v1550
      %1680 = vst.msk [vmem:[%s172 + $0x28] sm:$0xf] %vm1669, %v1551
      %1681 = vst.msk [vmem:[%s172 + $0x2c] sm:$0xf] %vm1669, %v1552
      %1682 = vst.msk [vmem:[%s172 + $0x30] sm:$0xf] %vm1669, %v1553
      %1683 = vst.msk [vmem:[%s172 + $0x34] sm:$0xf] %vm1669, %v1554
      %1684 = vst.msk [vmem:[%s172 + $0x38] sm:$0xf] %vm1669, %v1555
      %1685 = vst.msk [vmem:[%s172 + $0x3c] sm:$0xf] %vm1669, %v1556
      %1686 = vst.msk [vmem:[%s172 + $0x40] sm:$0xf] %vm1669, %v1557
      %1687 = vst.msk [vmem:[%s172 + $0x44] sm:$0xf] %vm1669, %v1558
      %1688 = vst.msk [vmem:[%s172 + $0x48] sm:$0xf] %vm1669, %v1559
      %1689 = vst.msk [vmem:[%s172 + $0x4c] sm:$0xf] %vm1669, %v1560
      %1690 = vst.msk [vmem:[%s172 + $0x50] sm:$0xf] %vm1669, %v1561
      %1691 = vst.msk [vmem:[%s172 + $0x54] sm:$0xf] %vm1669, %v1562
      %1692 = vst.msk [vmem:[%s172 + $0x58] sm:$0xf] %vm1669, %v1563
      %1693 = vst.msk [vmem:[%s172 + $0x5c] sm:$0xf] %vm1669, %v1564
      %1694 = vst.msk [vmem:[%s172 + $0x60] sm:$0xf] %vm1669, %v1565
      %1695 = vst.msk [vmem:[%s172 + $0x64] sm:$0xf] %vm1669, %v1566
      %1696 = vst.msk [vmem:[%s172 + $0x68] sm:$0xf] %vm1669, %v1567
      %1697 = vst.msk [vmem:[%s172 + $0x6c] sm:$0xf] %vm1669, %v1568
      %1698 = vst.msk [vmem:[%s172 + $0x70] sm:$0xf] %vm1669, %v1569
      %1699 = vst.msk [vmem:[%s172 + $0x74] sm:$0xf] %vm1669, %v1570
      %1700 = vst.msk [vmem:[%s172 + $0x78] sm:$0xf] %vm1669, %v1571
      %1701 = vst.msk [vmem:[%s172 + $0x7c] sm:$0xf] %vm1669, %v1572
      %1702 = vst.msk [vmem:[%s172 + $0x80] sm:$0xf] %vm1669, %v1573
      %1703 = vst.msk [vmem:[%s172 + $0x84] sm:$0xf] %vm1669, %v1574
      %1704 = vst.msk [vmem:[%s172 + $0x88] sm:$0xf] %vm1669, %v1575
      %1705 = vst.msk [vmem:[%s172 + $0x8c] sm:$0xf] %vm1669, %v1576
      %1706 = vst.msk [vmem:[%s172 + $0x90] sm:$0xf] %vm1669, %v1577
      %1707 = vst.msk [vmem:[%s172 + $0x94] sm:$0xf] %vm1669, %v1578
      %1708 = vst.msk [vmem:[%s172 + $0x98] sm:$0xf] %vm1669, %v1579
      %1709 = vst.msk [vmem:[%s172 + $0x9c] sm:$0xf] %vm1669, %v1580
      %1710 = vst.msk [vmem:[%s172 + $0xa0] sm:$0xf] %vm1669, %v1581
      %1711 = vst.msk [vmem:[%s172 + $0xa4] sm:$0xf] %vm1669, %v1582
      %1712 = vst.msk [vmem:[%s172 + $0xa8] sm:$0xf] %vm1669, %v1583
      %1713 = vst.msk [vmem:[%s172 + $0xac] sm:$0xf] %vm1669, %v1584
      %1714 = vst.msk [vmem:[%s172 + $0xb0] sm:$0xf] %vm1669, %v1585
      %1715 = vst.msk [vmem:[%s172 + $0xb4] sm:$0xf] %vm1669, %v1586
      %1716 = vst.msk [vmem:[%s172 + $0xb8] sm:$0xf] %vm1669, %v1587
      %1717 = vst.msk [vmem:[%s172 + $0xbc] sm:$0xf] %vm1669, %v1588
      %1718 = vst.msk [vmem:[%s172 + $0xc0] sm:$0xf] %vm1669, %v1589
      %1719 = vst.msk [vmem:[%s172 + $0xc4] sm:$0xf] %vm1669, %v1590
      %1720 = vst.msk [vmem:[%s172 + $0xc8] sm:$0xf] %vm1669, %v1591
      %1721 = vst.msk [vmem:[%s172 + $0xcc] sm:$0xf] %vm1669, %v1592
      %1722 = vst.msk [vmem:[%s172 + $0xd0] sm:$0xf] %vm1669, %v1593
      %1723 = vst.msk [vmem:[%s172 + $0xd4] sm:$0xf] %vm1669, %v1594
      %1724 = vst.msk [vmem:[%s172 + $0xd8] sm:$0xf] %vm1669, %v1595
      %1725 = vst.msk [vmem:[%s172 + $0xdc] sm:$0xf] %vm1669, %v1596
      %1726 = vst.msk [vmem:[%s172 + $0xe0] sm:$0xf] %vm1669, %v1597
      %1727 = vst.msk [vmem:[%s172 + $0xe4] sm:$0xf] %vm1669, %v1598
      %1728 = vst.msk [vmem:[%s172 + $0xe8] sm:$0xf] %vm1669, %v1599
      %1729 = vst.msk [vmem:[%s172 + $0xec] sm:$0xf] %vm1669, %v1600
      %1730 = vst.msk [vmem:[%s172 + $0xf0] sm:$0xf] %vm1669, %v1601
      %1731 = vst.msk [vmem:[%s172 + $0xf4] sm:$0xf] %vm1669, %v1602
      %1732 = vst.msk [vmem:[%s172 + $0xf8] sm:$0xf] %vm1669, %v1603
      %1733 = vst.msk [vmem:[%s172 + $0xfc] sm:$0xf] %vm1669, %v1604
      %1734 = vst.msk [vmem:[%s172 + $0x100] sm:$0xf] %vm1669, %v1605
      %1735 = vst.msk [vmem:[%s172 + $0x104] sm:$0xf] %vm1669, %v1606
      %1736 = vst.msk [vmem:[%s172 + $0x108] sm:$0xf] %vm1669, %v1607
      %1737 = vst.msk [vmem:[%s172 + $0x10c] sm:$0xf] %vm1669, %v1608
      %1738 = vst.msk [vmem:[%s172 + $0x110] sm:$0xf] %vm1669, %v1609
      %1739 = vst.msk [vmem:[%s172 + $0x114] sm:$0xf] %vm1669, %v1610
      %1740 = vst.msk [vmem:[%s172 + $0x118] sm:$0xf] %vm1669, %v1611
      %1741 = vst.msk [vmem:[%s172 + $0x11c] sm:$0xf] %vm1669, %v1612
      %1742 = vst.msk [vmem:[%s172 + $0x120] sm:$0xf] %vm1669, %v1613
      %1743 = vst.msk [vmem:[%s172 + $0x124] sm:$0xf] %vm1669, %v1614
      %1744 = vst.msk [vmem:[%s172 + $0x128] sm:$0xf] %vm1669, %v1615
      %1745 = vst.msk [vmem:[%s172 + $0x12c] sm:$0xf] %vm1669, %v1616
      %1746 = vst.msk [vmem:[%s172 + $0x130] sm:$0xf] %vm1669, %v1617
      %1747 = vst.msk [vmem:[%s172 + $0x134] sm:$0xf] %vm1669, %v1618
      %1748 = vst.msk [vmem:[%s172 + $0x138] sm:$0xf] %vm1669, %v1619
      %1749 = vst.msk [vmem:[%s172 + $0x13c] sm:$0xf] %vm1669, %v1620
      %1750 = vst.msk [vmem:[%s172 + $0x140] sm:$0xf] %vm1669, %v1621
      %1751 = vst.msk [vmem:[%s172 + $0x144] sm:$0xf] %vm1669, %v1622
      %1752 = vst.msk [vmem:[%s172 + $0x148] sm:$0xf] %vm1669, %v1623
      %1753 = vst.msk [vmem:[%s172 + $0x14c] sm:$0xf] %vm1669, %v1624
      %1754 = vst.msk [vmem:[%s172 + $0x150] sm:$0xf] %vm1669, %v1625
      %1755 = vst.msk [vmem:[%s172 + $0x154] sm:$0xf] %vm1669, %v1626
      %1756 = vst.msk [vmem:[%s172 + $0x158] sm:$0xf] %vm1669, %v1627
      %1757 = vst.msk [vmem:[%s172 + $0x15c] sm:$0xf] %vm1669, %v1628
      %1758 = vst.msk [vmem:[%s172 + $0x160] sm:$0xf] %vm1669, %v1629
      %1759 = vst.msk [vmem:[%s172 + $0x164] sm:$0xf] %vm1669, %v1630
      %1760 = vst.msk [vmem:[%s172 + $0x168] sm:$0xf] %vm1669, %v1631
      %1761 = vst.msk [vmem:[%s172 + $0x16c] sm:$0xf] %vm1669, %v1632
      %1762 = vst.msk [vmem:[%s172 + $0x170] sm:$0xf] %vm1669, %v1633
      %1763 = vst.msk [vmem:[%s172 + $0x174] sm:$0xf] %vm1669, %v1634
      %1764 = vst.msk [vmem:[%s172 + $0x178] sm:$0xf] %vm1669, %v1635
      %1765 = vst.msk [vmem:[%s172 + $0x17c] sm:$0xf] %vm1669, %v1636
      %1766 = vst.msk [vmem:[%s172 + $0x180] sm:$0xf] %vm1669, %v1637
      %1767 = vst.msk [vmem:[%s172 + $0x184] sm:$0xf] %vm1669, %v1638
      %1768 = vst.msk [vmem:[%s172 + $0x188] sm:$0xf] %vm1669, %v1639
      %1769 = vst.msk [vmem:[%s172 + $0x18c] sm:$0xf] %vm1669, %v1640
      %1770 = vst.msk [vmem:[%s172 + $0x190] sm:$0xf] %vm1669, %v1641
      %1771 = vst.msk [vmem:[%s172 + $0x194] sm:$0xf] %vm1669, %v1642
      %1772 = vst.msk [vmem:[%s172 + $0x198] sm:$0xf] %vm1669, %v1643
      %1773 = vst.msk [vmem:[%s172 + $0x19c] sm:$0xf] %vm1669, %v1644
      %1774 = vst.msk [vmem:[%s172 + $0x1a0] sm:$0xf] %vm1669, %v1645
      %1775 = vst.msk [vmem:[%s172 + $0x1a4] sm:$0xf] %vm1669, %v1646
      %1776 = vst.msk [vmem:[%s172 + $0x1a8] sm:$0xf] %vm1669, %v1647
      %1777 = vst.msk [vmem:[%s172 + $0x1ac] sm:$0xf] %vm1669, %v1648
      %1778 = vst.msk [vmem:[%s172 + $0x1b0] sm:$0xf] %vm1669, %v1649
      %1779 = vst.msk [vmem:[%s172 + $0x1b4] sm:$0xf] %vm1669, %v1650
      %1780 = vst.msk [vmem:[%s172 + $0x1b8] sm:$0xf] %vm1669, %v1651
      %1781 = vst.msk [vmem:[%s172 + $0x1bc] sm:$0xf] %vm1669, %v1652
      %1782 = vst.msk [vmem:[%s172 + $0x1c0] sm:$0xf] %vm1669, %v1653
      %1783 = vst.msk [vmem:[%s172 + $0x1c4] sm:$0xf] %vm1669, %v1654
      %1784 = vst.msk [vmem:[%s172 + $0x1c8] sm:$0xf] %vm1669, %v1655
      %1785 = vst.msk [vmem:[%s172 + $0x1cc] sm:$0xf] %vm1669, %v1656
      %1786 = vst.msk [vmem:[%s172 + $0x1d0] sm:$0xf] %vm1669, %v1657
      %1787 = vst.msk [vmem:[%s172 + $0x1d4] sm:$0xf] %vm1669, %v1658
      %1788 = vst.msk [vmem:[%s172 + $0x1d8] sm:$0xf] %vm1669, %v1659
      %1789 = vst.msk [vmem:[%s172 + $0x1dc] sm:$0xf] %vm1669, %v1660
      %1790 = vst.msk [vmem:[%s172 + $0x1e0] sm:$0xf] %vm1669, %v1661
      %1791 = vst.msk [vmem:[%s172 + $0x1e4] sm:$0xf] %vm1669, %v1662
      %1792 = vst.msk [vmem:[%s172 + $0x1e8] sm:$0xf] %vm1669, %v1663
      %1793 = vst.msk [vmem:[%s172 + $0x1ec] sm:$0xf] %vm1669, %v1664
      %1794 = vst.msk [vmem:[%s172 + $0x1f0] sm:$0xf] %vm1669, %v1665
      %1795 = vst.msk [vmem:[%s172 + $0x1f4] sm:$0xf] %vm1669, %v1666
      %1796 = vst.msk [vmem:[%s172 + $0x1f8] sm:$0xf] %vm1669, %v1667
      %1797 = vst.msk [vmem:[%s172 + $0x1fc] sm:$0xf] %vm1669, %v1668
      %s1798 = smul.u32 128, %s14
      %p1799 = scmp.lt.s32.totalorder %s1798, 255
      %s1800 = scalar_select %p1799, %s1798, 255
      %s1801 = smul.addr %s1800, 4
      %s1802 = scalar_lea.vmem %s3, %s1801
      // Predicated region
      $region33: #{discriminator_forward.6} parent=31 // pred_check
        %p1803 = pneg %p100
      $region34: #{discriminator_forward.6} parent=31 // pred_check_branch
        %1805 = sbr.rel (%p1803) target = $region36
      $region35: #{discriminator_forward.6} parent=31 // pred_region
        %s1806 = smul.u32 128, %s14
      $region36: #{discriminator_forward.6} parent=31 // pred_fallthru
        _
    $region32: #{discriminator_forward.6} parent=5 // pred_fallthru
      _
    %p1807 = scmp.le.s32.totalorder 2, %s9
    // Predicated region
    $region37: #{discriminator_forward.6} parent=5 // pred_check
      %p1808 = pneg %p1807
    $region38: #{discriminator_forward.6} parent=5 // pred_check_branch
      %1810 = sbr.rel (%p1808) target = $region40
    $region39: #{discriminator_forward.6} parent=5 // pred_region
      %s1811 = ssub.s32 %s9, 2
      // Predicated region
      $region41: #{discriminator_forward.6} parent=39 // pred_check
        %p1812 = pneg %p106
      $region42: #{discriminator_forward.6} parent=39 // pred_check_branch
        %1814 = sbr.rel (%p1812) target = $region44
      $region43: #{discriminator_forward.6} parent=39 // pred_region
        %s1815 = smul.u32 128, %s15
        %p1816 = scmp.lt.s32.totalorder %s1815, 255
        %s1817 = scalar_select %p1816, %s1815, 255
        %s1818 = smul.addr %s1817, 4
        %s1819 = scalar_lea.vmem %s3, %s1818
      $region44: #{discriminator_forward.6} parent=39 // pred_fallthru
        _
    $region40: #{discriminator_forward.6} parent=5 // pred_fallthru
      _
  $region6: #{discriminator_forward.6} parent=0 // loop_footer
    %s13 = sadd.s32 1, %s9
  $region7: #{discriminator_forward.6} parent=0 // loop_footer_branch
    %8 = sbr.rel target = $region3
  $region8: #{discriminator_forward.6} parent=0 // loop_exit
    _

// kernel: discriminator_forward.7
$region0: #{discriminator_forward.7}
  #allocation0 [shape = 'u32[]', space=smem, size = 0x4, offset = 0x4, fixed_abs, tag = 'smem constant byte address 0x4 - core index']
  #allocation1 [shape = 'u32[72,128]{1,0:T(1,128)}', space=vmem, size = 0x9000, scoped, tag = 'internal scratch']
  %s0 = inlined_call_operand.vmem [shape: bf16[512,128], index: 0, kind: input, shape index: {}]
  %s1 = inlined_call_operand.vmem [shape: bf16[128,16], index: 1, kind: input, shape index: {}]
  %s2 = inlined_call_operand.vmem [shape: f32[1,16], index: 2, kind: input, shape index: {}]
  %s3 = inlined_call_operand.vmem [shape: bf16[512,16], index: 3, kind: output, shape index: {}]
  %s4 = sld [smem:[#allocation0]]
  $region22: #{discriminator_forward.7} parent=0
    _
  %s6 = ssub.s32 1, %s4
  %s7 = scalar_select 0, %s6, %s4
  // Predicated region
  $region2: #{discriminator_forward.7} parent=0 // pred_check
    _
  $region3: #{discriminator_forward.7} parent=0 // pred_check_branch
    %9 = sbr.rel (0) target = $region5
  $region4: #{discriminator_forward.7} parent=0 // pred_region
    _
  $region5: #{discriminator_forward.7} parent=0 // pred_fallthru
    _
  // Predicated region
  $region6: #{discriminator_forward.7} parent=0 // pred_check
    _
  $region7: #{discriminator_forward.7} parent=0 // pred_check_branch
    %11 = sbr.rel (0) target = $region9
  $region8: #{discriminator_forward.7} parent=0 // pred_region
    _
  $region9: #{discriminator_forward.7} parent=0 // pred_fallthru
    _
  // Predicated region
  $region10: #{discriminator_forward.7} parent=0 // pred_check
    _
  $region11: #{discriminator_forward.7} parent=0 // pred_check_branch
    %13 = sbr.rel (0) target = $region13
  $region12: #{discriminator_forward.7} parent=0 // pred_region
    _
  $region13: #{discriminator_forward.7} parent=0 // pred_fallthru
    _
  %v14 = vld [vmem:[%s0] sm:$0xf]
  %v15 = vld [vmem:[%s0 + $0x4] sm:$0xf]
  %v16 = vld [vmem:[%s0 + $0x8] sm:$0xf]
  %v17 = vld [vmem:[%s0 + $0xc] sm:$0xf]
  %v18 = vld [vmem:[%s0 + $0x10] sm:$0xf]
  %v19 = vld [vmem:[%s0 + $0x14] sm:$0xf]
  %v20 = vld [vmem:[%s0 + $0x18] sm:$0xf]
  %v21 = vld [vmem:[%s0 + $0x1c] sm:$0xf]
  %v22 = vld [vmem:[%s0 + $0x20] sm:$0xf]
  %v23 = vld [vmem:[%s0 + $0x24] sm:$0xf]
  %v24 = vld [vmem:[%s0 + $0x28] sm:$0xf]
  %v25 = vld [vmem:[%s0 + $0x2c] sm:$0xf]
  %v26 = vld [vmem:[%s0 + $0x30] sm:$0xf]
  %v27 = vld [vmem:[%s0 + $0x34] sm:$0xf]
  %v28 = vld [vmem:[%s0 + $0x38] sm:$0xf]
  %v29 = vld [vmem:[%s0 + $0x3c] sm:$0xf]
  %v30 = vld [vmem:[%s0 + $0x40] sm:$0xf]
  %v31 = vld [vmem:[%s0 + $0x44] sm:$0xf]
  %v32 = vld [vmem:[%s0 + $0x48] sm:$0xf]
  %v33 = vld [vmem:[%s0 + $0x4c] sm:$0xf]
  %v34 = vld [vmem:[%s0 + $0x50] sm:$0xf]
  %v35 = vld [vmem:[%s0 + $0x54] sm:$0xf]
  %v36 = vld [vmem:[%s0 + $0x58] sm:$0xf]
  %v37 = vld [vmem:[%s0 + $0x5c] sm:$0xf]
  %v38 = vld [vmem:[%s0 + $0x60] sm:$0xf]
  %v39 = vld [vmem:[%s0 + $0x64] sm:$0xf]
  %v40 = vld [vmem:[%s0 + $0x68] sm:$0xf]
  %v41 = vld [vmem:[%s0 + $0x6c] sm:$0xf]
  %v42 = vld [vmem:[%s0 + $0x70] sm:$0xf]
  %v43 = vld [vmem:[%s0 + $0x74] sm:$0xf]
  %v44 = vld [vmem:[%s0 + $0x78] sm:$0xf]
  %v45 = vld [vmem:[%s0 + $0x7c] sm:$0xf]
  %v46 = vld [vmem:[%s0 + $0x80] sm:$0xf]
  %v47 = vld [vmem:[%s0 + $0x84] sm:$0xf]
  %v48 = vld [vmem:[%s0 + $0x88] sm:$0xf]
  %v49 = vld [vmem:[%s0 + $0x8c] sm:$0xf]
  %v50 = vld [vmem:[%s0 + $0x90] sm:$0xf]
  %v51 = vld [vmem:[%s0 + $0x94] sm:$0xf]
  %v52 = vld [vmem:[%s0 + $0x98] sm:$0xf]
  %v53 = vld [vmem:[%s0 + $0x9c] sm:$0xf]
  %v54 = vld [vmem:[%s0 + $0xa0] sm:$0xf]
  %v55 = vld [vmem:[%s0 + $0xa4] sm:$0xf]
  %v56 = vld [vmem:[%s0 + $0xa8] sm:$0xf]
  %v57 = vld [vmem:[%s0 + $0xac] sm:$0xf]
  %v58 = vld [vmem:[%s0 + $0xb0] sm:$0xf]
  %v59 = vld [vmem:[%s0 + $0xb4] sm:$0xf]
  %v60 = vld [vmem:[%s0 + $0xb8] sm:$0xf]
  %v61 = vld [vmem:[%s0 + $0xbc] sm:$0xf]
  %v62 = vld [vmem:[%s0 + $0xc0] sm:$0xf]
  %v63 = vld [vmem:[%s0 + $0xc4] sm:$0xf]
  %v64 = vld [vmem:[%s0 + $0xc8] sm:$0xf]
  %v65 = vld [vmem:[%s0 + $0xcc] sm:$0xf]
  %v66 = vld [vmem:[%s0 + $0xd0] sm:$0xf]
  %v67 = vld [vmem:[%s0 + $0xd4] sm:$0xf]
  %v68 = vld [vmem:[%s0 + $0xd8] sm:$0xf]
  %v69 = vld [vmem:[%s0 + $0xdc] sm:$0xf]
  %v70 = vld [vmem:[%s0 + $0xe0] sm:$0xf]
  %v71 = vld [vmem:[%s0 + $0xe4] sm:$0xf]
  %v72 = vld [vmem:[%s0 + $0xe8] sm:$0xf]
  %v73 = vld [vmem:[%s0 + $0xec] sm:$0xf]
  %v74 = vld [vmem:[%s0 + $0xf0] sm:$0xf]
  %v75 = vld [vmem:[%s0 + $0xf4] sm:$0xf]
  %v76 = vld [vmem:[%s0 + $0xf8] sm:$0xf]
  %v77 = vld [vmem:[%s0 + $0xfc] sm:$0xf]
  %v78 = vld [vmem:[%s1] sm:$0xf]
  %v79 = vld [vmem:[%s1 + $0x4] sm:$0xf]
  %v80 = vld [vmem:[%s1 + $0x8] sm:$0xf]
  %v81 = vld [vmem:[%s1 + $0xc] sm:$0xf]
  %v82 = vld [vmem:[%s1 + $0x10] sm:$0xf]
  %v83 = vld [vmem:[%s1 + $0x14] sm:$0xf]
  %v84 = vld [vmem:[%s1 + $0x18] sm:$0xf]
  %v85 = vld [vmem:[%s1 + $0x1c] sm:$0xf]
  %v86 = vld [vmem:[%s1 + $0x20] sm:$0xf]
  %v87 = vld [vmem:[%s1 + $0x24] sm:$0xf]
  %v88 = vld [vmem:[%s1 + $0x28] sm:$0xf]
  %v89 = vld [vmem:[%s1 + $0x2c] sm:$0xf]
  %v90 = vld [vmem:[%s1 + $0x30] sm:$0xf]
  %v91 = vld [vmem:[%s1 + $0x34] sm:$0xf]
  %v92 = vld [vmem:[%s1 + $0x38] sm:$0xf]
  %v93 = vld [vmem:[%s1 + $0x3c] sm:$0xf]
  %v94 = vld [vmem:[%s2] sm:$0x1]
  %v96 = vperm.slane %v94, 0
  %v162 = vunpack.c.l.b16 %v14
  %v163 = vunpack.c.l.b16 %v15
  %v164 = vunpack.c.l.b16 %v16
  %v165 = vunpack.c.l.b16 %v17
  %v166 = vunpack.c.l.b16 %v18
  %v167 = vunpack.c.l.b16 %v19
  %v168 = vunpack.c.l.b16 %v20
  %v169 = vunpack.c.l.b16 %v21
  %v170 = vunpack.c.l.b16 %v22
  %v171 = vunpack.c.l.b16 %v23
  %v172 = vunpack.c.l.b16 %v24
  %v173 = vunpack.c.l.b16 %v25
  %v174 = vunpack.c.l.b16 %v26
  %v175 = vunpack.c.l.b16 %v27
  %v176 = vunpack.c.l.b16 %v28
  %v177 = vunpack.c.l.b16 %v29
  %v178 = vunpack.c.l.b16 %v30
  %v179 = vunpack.c.l.b16 %v31
  %v180 = vunpack.c.l.b16 %v32
  %v181 = vunpack.c.l.b16 %v33
  %v182 = vunpack.c.l.b16 %v34
  %v183 = vunpack.c.l.b16 %v35
  %v184 = vunpack.c.l.b16 %v36
  %v185 = vunpack.c.l.b16 %v37
  %v186 = vunpack.c.l.b16 %v38
  %v187 = vunpack.c.l.b16 %v39
  %v188 = vunpack.c.l.b16 %v40
  %v189 = vunpack.c.l.b16 %v41
  %v190 = vunpack.c.l.b16 %v42
  %v191 = vunpack.c.l.b16 %v43
  %v192 = vunpack.c.l.b16 %v44
  %v193 = vunpack.c.l.b16 %v45
  %v194 = vunpack.c.l.b16 %v46
  %v195 = vunpack.c.l.b16 %v47
  %v196 = vunpack.c.l.b16 %v48
  %v197 = vunpack.c.l.b16 %v49
  %v198 = vunpack.c.l.b16 %v50
  %v199 = vunpack.c.l.b16 %v51
  %v200 = vunpack.c.l.b16 %v52
  %v201 = vunpack.c.l.b16 %v53
  %v202 = vunpack.c.l.b16 %v54
  %v203 = vunpack.c.l.b16 %v55
  %v204 = vunpack.c.l.b16 %v56
  %v205 = vunpack.c.l.b16 %v57
  %v206 = vunpack.c.l.b16 %v58
  %v207 = vunpack.c.l.b16 %v59
  %v208 = vunpack.c.l.b16 %v60
  %v209 = vunpack.c.l.b16 %v61
  %v210 = vunpack.c.l.b16 %v62
  %v211 = vunpack.c.l.b16 %v63
  %v212 = vunpack.c.l.b16 %v64
  %v213 = vunpack.c.l.b16 %v65
  %v214 = vunpack.c.l.b16 %v66
  %v215 = vunpack.c.l.b16 %v67
  %v216 = vunpack.c.l.b16 %v68
  %v217 = vunpack.c.l.b16 %v69
  %v218 = vunpack.c.l.b16 %v70
  %v219 = vunpack.c.l.b16 %v71
  %v220 = vunpack.c.l.b16 %v72
  %v221 = vunpack.c.l.b16 %v73
  %v222 = vunpack.c.l.b16 %v74
  %v223 = vunpack.c.l.b16 %v75
  %v224 = vunpack.c.l.b16 %v76
  %v225 = vunpack.c.l.b16 %v77
  %v226 = vpack.c.b16 %v163, %v162
  %v227 = vpack.c.b16 %v165, %v164
  %v228 = vpack.c.b16 %v167, %v166
  %v229 = vpack.c.b16 %v169, %v168
  %v230 = vpack.c.b16 %v171, %v170
  %v231 = vpack.c.b16 %v173, %v172
  %v232 = vpack.c.b16 %v175, %v174
  %v233 = vpack.c.b16 %v177, %v176
  %v234 = vpack.c.b16 %v179, %v178
  %v235 = vpack.c.b16 %v181, %v180
  %v236 = vpack.c.b16 %v183, %v182
  %v237 = vpack.c.b16 %v185, %v184
  %v238 = vpack.c.b16 %v187, %v186
  %v239 = vpack.c.b16 %v189, %v188
  %v240 = vpack.c.b16 %v191, %v190
  %v241 = vpack.c.b16 %v193, %v192
  %v242 = vpack.c.b16 %v195, %v194
  %v243 = vpack.c.b16 %v197, %v196
  %v244 = vpack.c.b16 %v199, %v198
  %v245 = vpack.c.b16 %v201, %v200
  %v246 = vpack.c.b16 %v203, %v202
  %v247 = vpack.c.b16 %v205, %v204
  %v248 = vpack.c.b16 %v207, %v206
  %v249 = vpack.c.b16 %v209, %v208
  %v250 = vpack.c.b16 %v211, %v210
  %v251 = vpack.c.b16 %v213, %v212
  %v252 = vpack.c.b16 %v215, %v214
  %v253 = vpack.c.b16 %v217, %v216
  %v254 = vpack.c.b16 %v219, %v218
  %v255 = vpack.c.b16 %v221, %v220
  %v256 = vpack.c.b16 %v223, %v222
  %v257 = vpack.c.b16 %v225, %v224
  %v306 = vunpack.c.l.b16 %v78
  %v307 = vunpack.c.l.b16 %v79
  %v308 = vunpack.c.l.b16 %v80
  %v309 = vunpack.c.l.b16 %v81
  %v310 = vunpack.c.l.b16 %v82
  %v311 = vunpack.c.l.b16 %v83
  %v312 = vunpack.c.l.b16 %v84
  %v313 = vunpack.c.l.b16 %v85
  %v314 = vunpack.c.l.b16 %v86
  %v315 = vunpack.c.l.b16 %v87
  %v316 = vunpack.c.l.b16 %v88
  %v317 = vunpack.c.l.b16 %v89
  %v318 = vunpack.c.l.b16 %v90
  %v319 = vunpack.c.l.b16 %v91
  %v320 = vunpack.c.l.b16 %v92
  %v321 = vunpack.c.l.b16 %v93
  %v322 = vpack.c.b16 %v307, %v306
  %v323 = vpack.c.b16 %v309, %v308
  %v324 = vpack.c.b16 %v311, %v310
  %v325 = vpack.c.b16 %v313, %v312
  %v326 = vpack.c.b16 %v315, %v314
  %v327 = vpack.c.b16 %v317, %v316
  %v328 = vpack.c.b16 %v319, %v318
  %v329 = vpack.c.b16 %v321, %v320
  %338 = vmatpush.bf16.msra.mxu0 %v329
  %339 = vmatpush.bf16.msra.mxu0 %v328
  %340 = vmatpush.bf16.msra.mxu0 %v327
  %341 = vmatpush.bf16.msra.mxu0 %v326
  %342 = vmatpush.bf16.msra.mxu0 %v325
  %343 = vmatpush.bf16.msra.mxu0 %v324
  %344 = vmatpush.bf16.msra.mxu0 %v323
  %345 = vmatpush.bf16.msra.mxu0 %v322
  %346 = vmatmul.bf16.gmra.mxu0 %v226
  %v347 = vpop.f32.mrf.mxu0
  %v348 = vadd.f32 %v96, %v347
  %v349 = vpop.f32.mrf.mxu0
  %v350 = vadd.f32 %v96, %v349
  %351 = vmatmul.bf16.gmra.mxu0 %v227
  %v352 = vpop.f32.mrf.mxu0
  %v353 = vadd.f32 %v96, %v352
  %v354 = vpop.f32.mrf.mxu0
  %v355 = vadd.f32 %v96, %v354
  %356 = vmatmul.bf16.gmra.mxu0 %v228
  %v357 = vpop.f32.mrf.mxu0
  %v358 = vadd.f32 %v96, %v357
  %v359 = vpop.f32.mrf.mxu0
  %v360 = vadd.f32 %v96, %v359
  %361 = vmatmul.bf16.gmra.mxu0 %v229
  %v362 = vpop.f32.mrf.mxu0
  %v363 = vadd.f32 %v96, %v362
  %v364 = vpop.f32.mrf.mxu0
  %v365 = vadd.f32 %v96, %v364
  %366 = vmatmul.bf16.gmra.mxu0 %v230
  %v367 = vpop.f32.mrf.mxu0
  %v368 = vadd.f32 %v96, %v367
  %v369 = vpop.f32.mrf.mxu0
  %v370 = vadd.f32 %v96, %v369
  %371 = vmatmul.bf16.gmra.mxu0 %v231
  %v372 = vpop.f32.mrf.mxu0
  %v373 = vadd.f32 %v96, %v372
  %v374 = vpop.f32.mrf.mxu0
  %v375 = vadd.f32 %v96, %v374
  %376 = vmatmul.bf16.gmra.mxu0 %v232
  %v377 = vpop.f32.mrf.mxu0
  %v378 = vadd.f32 %v96, %v377
  %v379 = vpop.f32.mrf.mxu0
  %v380 = vadd.f32 %v96, %v379
  %381 = vmatmul.bf16.gmra.mxu0 %v233
  %v382 = vpop.f32.mrf.mxu0
  %v383 = vadd.f32 %v96, %v382
  %v384 = vpop.f32.mrf.mxu0
  %v385 = vadd.f32 %v96, %v384
  %386 = vmatmul.bf16.gmra.mxu0 %v234
  %v387 = vpop.f32.mrf.mxu0
  %v388 = vadd.f32 %v96, %v387
  %v389 = vpop.f32.mrf.mxu0
  %v390 = vadd.f32 %v96, %v389
  %391 = vmatmul.bf16.gmra.mxu0 %v235
  %v392 = vpop.f32.mrf.mxu0
  %v393 = vadd.f32 %v96, %v392
  %v394 = vpop.f32.mrf.mxu0
  %v395 = vadd.f32 %v96, %v394
  %396 = vmatmul.bf16.gmra.mxu0 %v236
  %v397 = vpop.f32.mrf.mxu0
  %v398 = vadd.f32 %v96, %v397
  %v399 = vpop.f32.mrf.mxu0
  %v400 = vadd.f32 %v96, %v399
  %401 = vmatmul.bf16.gmra.mxu0 %v237
  %v402 = vpop.f32.mrf.mxu0
  %v403 = vadd.f32 %v96, %v402
  %v404 = vpop.f32.mrf.mxu0
  %v405 = vadd.f32 %v96, %v404
  %406 = vmatmul.bf16.gmra.mxu0 %v238
  %v407 = vpop.f32.mrf.mxu0
  %v408 = vadd.f32 %v96, %v407
  %v409 = vpop.f32.mrf.mxu0
  %v410 = vadd.f32 %v96, %v409
  %411 = vmatmul.bf16.gmra.mxu0 %v239
  %v412 = vpop.f32.mrf.mxu0
  %v413 = vadd.f32 %v96, %v412
  %v414 = vpop.f32.mrf.mxu0
  %v415 = vadd.f32 %v96, %v414
  %416 = vmatmul.bf16.gmra.mxu0 %v240
  %v417 = vpop.f32.mrf.mxu0
  %v418 = vadd.f32 %v96, %v417
  %v419 = vpop.f32.mrf.mxu0
  %v420 = vadd.f32 %v96, %v419
  %421 = vmatmul.bf16.gmra.mxu0 %v241
  %v422 = vpop.f32.mrf.mxu0
  %v423 = vadd.f32 %v96, %v422
  %v424 = vpop.f32.mrf.mxu0
  %v425 = vadd.f32 %v96, %v424
  %426 = vmatmul.bf16.gmra.mxu0 %v242
  %v427 = vpop.f32.mrf.mxu0
  %v428 = vadd.f32 %v96, %v427
  %v429 = vpop.f32.mrf.mxu0
  %v430 = vadd.f32 %v96, %v429
  %431 = vmatmul.bf16.gmra.mxu0 %v243
  %v432 = vpop.f32.mrf.mxu0
  %v433 = vadd.f32 %v96, %v432
  %v434 = vpop.f32.mrf.mxu0
  %v435 = vadd.f32 %v96, %v434
  %436 = vmatmul.bf16.gmra.mxu0 %v244
  %v437 = vpop.f32.mrf.mxu0
  %v438 = vadd.f32 %v96, %v437
  %v439 = vpop.f32.mrf.mxu0
  %v440 = vadd.f32 %v96, %v439
  %441 = vmatmul.bf16.gmra.mxu0 %v245
  %v442 = vpop.f32.mrf.mxu0
  %v443 = vadd.f32 %v96, %v442
  %v444 = vpop.f32.mrf.mxu0
  %v445 = vadd.f32 %v96, %v444
  %446 = vmatmul.bf16.gmra.mxu0 %v246
  %v447 = vpop.f32.mrf.mxu0
  %v448 = vadd.f32 %v96, %v447
  %v449 = vpop.f32.mrf.mxu0
  %v450 = vadd.f32 %v96, %v449
  %451 = vmatmul.bf16.gmra.mxu0 %v247
  %v452 = vpop.f32.mrf.mxu0
  %v453 = vadd.f32 %v96, %v452
  %v454 = vpop.f32.mrf.mxu0
  %v455 = vadd.f32 %v96, %v454
  %456 = vmatmul.bf16.gmra.mxu0 %v248
  %v457 = vpop.f32.mrf.mxu0
  %v458 = vadd.f32 %v96, %v457
  %v459 = vpop.f32.mrf.mxu0
  %v460 = vadd.f32 %v96, %v459
  %461 = vmatmul.bf16.gmra.mxu0 %v249
  %v462 = vpop.f32.mrf.mxu0
  %v463 = vadd.f32 %v96, %v462
  %v464 = vpop.f32.mrf.mxu0
  %v465 = vadd.f32 %v96, %v464
  %466 = vmatmul.bf16.gmra.mxu0 %v250
  %v467 = vpop.f32.mrf.mxu0
  %v468 = vadd.f32 %v96, %v467
  %v469 = vpop.f32.mrf.mxu0
  %v470 = vadd.f32 %v96, %v469
  %471 = vmatmul.bf16.gmra.mxu0 %v251
  %v472 = vpop.f32.mrf.mxu0
  %v473 = vadd.f32 %v96, %v472
  %v474 = vpop.f32.mrf.mxu0
  %v475 = vadd.f32 %v96, %v474
  %476 = vmatmul.bf16.gmra.mxu0 %v252
  %v477 = vpop.f32.mrf.mxu0
  %v478 = vadd.f32 %v96, %v477
  %v479 = vpop.f32.mrf.mxu0
  %v480 = vadd.f32 %v96, %v479
  %481 = vmatmul.bf16.gmra.mxu0 %v253
  %v482 = vpop.f32.mrf.mxu0
  %v483 = vadd.f32 %v96, %v482
  %v484 = vpop.f32.mrf.mxu0
  %v485 = vadd.f32 %v96, %v484
  %486 = vmatmul.bf16.gmra.mxu0 %v254
  %v487 = vpop.f32.mrf.mxu0
  %v488 = vadd.f32 %v96, %v487
  %v489 = vpop.f32.mrf.mxu0
  %v490 = vadd.f32 %v96, %v489
  %491 = vmatmul.bf16.gmra.mxu0 %v255
  %v492 = vpop.f32.mrf.mxu0
  %v493 = vadd.f32 %v96, %v492
  %v494 = vpop.f32.mrf.mxu0
  %v495 = vadd.f32 %v96, %v494
  %496 = vmatmul.bf16.gmra.mxu0 %v256
  %v497 = vpop.f32.mrf.mxu0
  %v498 = vadd.f32 %v96, %v497
  %v499 = vpop.f32.mrf.mxu0
  %v500 = vadd.f32 %v96, %v499
  %501 = vmatmul.bf16.gmra.mxu0 %v257
  %v502 = vpop.f32.mrf.mxu0
  %v503 = vadd.f32 %v96, %v502
  %v504 = vpop.f32.mrf.mxu0
  %v505 = vadd.f32 %v96, %v504
  %506 = vdwg.mxu0
  %vm507 = vcmp.ge.f32.partialorder %v348, 0.0
  %vm508 = vcmp.ge.f32.partialorder %v350, 0.0
  %vm509 = vcmp.ge.f32.partialorder %v353, 0.0
  %vm510 = vcmp.ge.f32.partialorder %v355, 0.0
  %vm511 = vcmp.ge.f32.partialorder %v358, 0.0
  %vm512 = vcmp.ge.f32.partialorder %v360, 0.0
  %vm513 = vcmp.ge.f32.partialorder %v363, 0.0
  %vm514 = vcmp.ge.f32.partialorder %v365, 0.0
  %vm515 = vcmp.ge.f32.partialorder %v368, 0.0
  %vm516 = vcmp.ge.f32.partialorder %v370, 0.0
  %vm517 = vcmp.ge.f32.partialorder %v373, 0.0
  %vm518 = vcmp.ge.f32.partialorder %v375, 0.0
  %vm519 = vcmp.ge.f32.partialorder %v378, 0.0
  %vm520 = vcmp.ge.f32.partialorder %v380, 0.0
  %vm521 = vcmp.ge.f32.partialorder %v383, 0.0
  %vm522 = vcmp.ge.f32.partialorder %v385, 0.0
  %vm523 = vcmp.ge.f32.partialorder %v388, 0.0
  %vm524 = vcmp.ge.f32.partialorder %v390, 0.0
  %vm525 = vcmp.ge.f32.partialorder %v393, 0.0
  %vm526 = vcmp.ge.f32.partialorder %v395, 0.0
  %vm527 = vcmp.ge.f32.partialorder %v398, 0.0
  %vm528 = vcmp.ge.f32.partialorder %v400, 0.0
  %vm529 = vcmp.ge.f32.partialorder %v403, 0.0
  %vm530 = vcmp.ge.f32.partialorder %v405, 0.0
  %vm531 = vcmp.ge.f32.partialorder %v408, 0.0
  %vm532 = vcmp.ge.f32.partialorder %v410, 0.0
  %vm533 = vcmp.ge.f32.partialorder %v413, 0.0
  %vm534 = vcmp.ge.f32.partialorder %v415, 0.0
  %vm535 = vcmp.ge.f32.partialorder %v418, 0.0
  %vm536 = vcmp.ge.f32.partialorder %v420, 0.0
  %vm537 = vcmp.ge.f32.partialorder %v423, 0.0
  %vm538 = vcmp.ge.f32.partialorder %v425, 0.0
  %vm539 = vcmp.ge.f32.partialorder %v428, 0.0
  %vm540 = vcmp.ge.f32.partialorder %v430, 0.0
  %vm541 = vcmp.ge.f32.partialorder %v433, 0.0
  %vm542 = vcmp.ge.f32.partialorder %v435, 0.0
  %vm543 = vcmp.ge.f32.partialorder %v438, 0.0
  %vm544 = vcmp.ge.f32.partialorder %v440, 0.0
  %vm545 = vcmp.ge.f32.partialorder %v443, 0.0
  %vm546 = vcmp.ge.f32.partialorder %v445, 0.0
  %vm547 = vcmp.ge.f32.partialorder %v448, 0.0
  %vm548 = vcmp.ge.f32.partialorder %v450, 0.0
  %vm549 = vcmp.ge.f32.partialorder %v453, 0.0
  %vm550 = vcmp.ge.f32.partialorder %v455, 0.0
  %vm551 = vcmp.ge.f32.partialorder %v458, 0.0
  %vm552 = vcmp.ge.f32.partialorder %v460, 0.0
  %vm553 = vcmp.ge.f32.partialorder %v463, 0.0
  %vm554 = vcmp.ge.f32.partialorder %v465, 0.0
  %vm555 = vcmp.ge.f32.partialorder %v468, 0.0
  %vm556 = vcmp.ge.f32.partialorder %v470, 0.0
  %vm557 = vcmp.ge.f32.partialorder %v473, 0.0
  %vm558 = vcmp.ge.f32.partialorder %v475, 0.0
  %vm559 = vcmp.ge.f32.partialorder %v478, 0.0
  %vm560 = vcmp.ge.f32.partialorder %v480, 0.0
  %vm561 = vcmp.ge.f32.partialorder %v483, 0.0
  %vm562 = vcmp.ge.f32.partialorder %v485, 0.0
  %vm563 = vcmp.ge.f32.partialorder %v488, 0.0
  %vm564 = vcmp.ge.f32.partialorder %v490, 0.0
  %vm565 = vcmp.ge.f32.partialorder %v493, 0.0
  %vm566 = vcmp.ge.f32.partialorder %v495, 0.0
  %vm567 = vcmp.ge.f32.partialorder %v498, 0.0
  %vm568 = vcmp.ge.f32.partialorder %v500, 0.0
  %vm569 = vcmp.ge.f32.partialorder %v503, 0.0
  %vm570 = vcmp.ge.f32.partialorder %v505, 0.0
  %v571 = vmul.f32 %v348, 0.1
  %v572 = vmul.f32 %v350, 0.1
  %v573 = vmul.f32 %v353, 0.1
  %v574 = vmul.f32 %v355, 0.1
  %v575 = vmul.f32 %v358, 0.1
  %v576 = vmul.f32 %v360, 0.1
  %v577 = vmul.f32 %v363, 0.1
  %v578 = vmul.f32 %v365, 0.1
  %v579 = vmul.f32 %v368, 0.1
  %v580 = vmul.f32 %v370, 0.1
  %v581 = vmul.f32 %v373, 0.1
  %v582 = vmul.f32 %v375, 0.1
  %v583 = vmul.f32 %v378, 0.1
  %v584 = vmul.f32 %v380, 0.1
  %v585 = vmul.f32 %v383, 0.1
  %v586 = vmul.f32 %v385, 0.1
  %v587 = vmul.f32 %v388, 0.1
  %v588 = vmul.f32 %v390, 0.1
  %v589 = vmul.f32 %v393, 0.1
  %v590 = vmul.f32 %v395, 0.1
  %v591 = vmul.f32 %v398, 0.1
  %v592 = vmul.f32 %v400, 0.1
  %v593 = vmul.f32 %v403, 0.1
  %v594 = vmul.f32 %v405, 0.1
  %v595 = vmul.f32 %v408, 0.1
  %v596 = vmul.f32 %v410, 0.1
  %v597 = vmul.f32 %v413, 0.1
  %v598 = vmul.f32 %v415, 0.1
  %v599 = vmul.f32 %v418, 0.1
  %v600 = vmul.f32 %v420, 0.1
  %v601 = vmul.f32 %v423, 0.1
  %v602 = vmul.f32 %v425, 0.1
  %v603 = vmul.f32 %v428, 0.1
  %v604 = vmul.f32 %v430, 0.1
  %v605 = vmul.f32 %v433, 0.1
  %v606 = vmul.f32 %v435, 0.1
  %v607 = vmul.f32 %v438, 0.1
  %v608 = vmul.f32 %v440, 0.1
  %v609 = vmul.f32 %v443, 0.1
  %v610 = vmul.f32 %v445, 0.1
  %v611 = vmul.f32 %v448, 0.1
  %v612 = vmul.f32 %v450, 0.1
  %v613 = vmul.f32 %v453, 0.1
  %v614 = vmul.f32 %v455, 0.1
  %v615 = vmul.f32 %v458, 0.1
  %v616 = vmul.f32 %v460, 0.1
  %v617 = vmul.f32 %v463, 0.1
  %v618 = vmul.f32 %v465, 0.1
  %v619 = vmul.f32 %v468, 0.1
  %v620 = vmul.f32 %v470, 0.1
  %v621 = vmul.f32 %v473, 0.1
  %v622 = vmul.f32 %v475, 0.1
  %v623 = vmul.f32 %v478, 0.1
  %v624 = vmul.f32 %v480, 0.1
  %v625 = vmul.f32 %v483, 0.1
  %v626 = vmul.f32 %v485, 0.1
  %v627 = vmul.f32 %v488, 0.1
  %v628 = vmul.f32 %v490, 0.1
  %v629 = vmul.f32 %v493, 0.1
  %v630 = vmul.f32 %v495, 0.1
  %v631 = vmul.f32 %v498, 0.1
  %v632 = vmul.f32 %v500, 0.1
  %v633 = vmul.f32 %v503, 0.1
  %v634 = vmul.f32 %v505, 0.1
  %v635 = vsel %vm507, %v348, %v571
  %v636 = vsel %vm508, %v350, %v572
  %v637 = vsel %vm509, %v353, %v573
  %v638 = vsel %vm510, %v355, %v574
  %v639 = vsel %vm511, %v358, %v575
  %v640 = vsel %vm512, %v360, %v576
  %v641 = vsel %vm513, %v363, %v577
  %v642 = vsel %vm514, %v365, %v578
  %v643 = vsel %vm515, %v368, %v579
  %v644 = vsel %vm516, %v370, %v580
  %v645 = vsel %vm517, %v373, %v581
  %v646 = vsel %vm518, %v375, %v582
  %v647 = vsel %vm519, %v378, %v583
  %v648 = vsel %vm520, %v380, %v584
  %v649 = vsel %vm521, %v383, %v585
  %v650 = vsel %vm522, %v385, %v586
  %v651 = vsel %vm523, %v388, %v587
  %v652 = vsel %vm524, %v390, %v588
  %v653 = vsel %vm525, %v393, %v589
  %v654 = vsel %vm526, %v395, %v590
  %v655 = vsel %vm527, %v398, %v591
  %v656 = vsel %vm528, %v400, %v592
  %v657 = vsel %vm529, %v403, %v593
  %v658 = vsel %vm530, %v405, %v594
  %v659 = vsel %vm531, %v408, %v595
  %v660 = vsel %vm532, %v410, %v596
  %v661 = vsel %vm533, %v413, %v597
  %v662 = vsel %vm534, %v415, %v598
  %v663 = vsel %vm535, %v418, %v599
  %v664 = vsel %vm536, %v420, %v600
  %v665 = vsel %vm537, %v423, %v601
  %v666 = vsel %vm538, %v425, %v602
  %v667 = vsel %vm539, %v428, %v603
  %v668 = vsel %vm540, %v430, %v604
  %v669 = vsel %vm541, %v433, %v605
  %v670 = vsel %vm542, %v435, %v606
  %v671 = vsel %vm543, %v438, %v607
  %v672 = vsel %vm544, %v440, %v608
  %v673 = vsel %vm545, %v443, %v609
  %v674 = vsel %vm546, %v445, %v610
  %v675 = vsel %vm547, %v448, %v611
  %v676 = vsel %vm548, %v450, %v612
  %v677 = vsel %vm549, %v453, %v613
  %v678 = vsel %vm550, %v455, %v614
  %v679 = vsel %vm551, %v458, %v615
  %v680 = vsel %vm552, %v460, %v616
  %v681 = vsel %vm553, %v463, %v617
  %v682 = vsel %vm554, %v465, %v618
  %v683 = vsel %vm555, %v468, %v619
  %v684 = vsel %vm556, %v470, %v620
  %v685 = vsel %vm557, %v473, %v621
  %v686 = vsel %vm558, %v475, %v622
  %v687 = vsel %vm559, %v478, %v623
  %v688 = vsel %vm560, %v480, %v624
  %v689 = vsel %vm561, %v483, %v625
  %v690 = vsel %vm562, %v485, %v626
  %v691 = vsel %vm563, %v488, %v627
  %v692 = vsel %vm564, %v490, %v628
  %v693 = vsel %vm565, %v493, %v629
  %v694 = vsel %vm566, %v495, %v630
  %v695 = vsel %vm567, %v498, %v631
  %v696 = vsel %vm568, %v500, %v632
  %v697 = vsel %vm569, %v503, %v633
  %v698 = vsel %vm570, %v505, %v634
  %v699 = vpack.c.bf16 %v635, %v635
  %v700 = vpack.c.bf16 %v636, %v636
  %v701 = vpack.c.bf16 %v637, %v637
  %v702 = vpack.c.bf16 %v638, %v638
  %v703 = vpack.c.bf16 %v639, %v639
  %v704 = vpack.c.bf16 %v640, %v640
  %v705 = vpack.c.bf16 %v641, %v641
  %v706 = vpack.c.bf16 %v642, %v642
  %v707 = vpack.c.bf16 %v643, %v643
  %v708 = vpack.c.bf16 %v644, %v644
  %v709 = vpack.c.bf16 %v645, %v645
  %v710 = vpack.c.bf16 %v646, %v646
  %v711 = vpack.c.bf16 %v647, %v647
  %v712 = vpack.c.bf16 %v648, %v648
  %v713 = vpack.c.bf16 %v649, %v649
  %v714 = vpack.c.bf16 %v650, %v650
  %v715 = vpack.c.bf16 %v651, %v651
  %v716 = vpack.c.bf16 %v652, %v652
  %v717 = vpack.c.bf16 %v653, %v653
  %v718 = vpack.c.bf16 %v654, %v654
  %v719 = vpack.c.bf16 %v655, %v655
  %v720 = vpack.c.bf16 %v656, %v656
  %v721 = vpack.c.bf16 %v657, %v657
  %v722 = vpack.c.bf16 %v658, %v658
  %v723 = vpack.c.bf16 %v659, %v659
  %v724 = vpack.c.bf16 %v660, %v660
  %v725 = vpack.c.bf16 %v661, %v661
  %v726 = vpack.c.bf16 %v662, %v662
  %v727 = vpack.c.bf16 %v663, %v663
  %v728 = vpack.c.bf16 %v664, %v664
  %v729 = vpack.c.bf16 %v665, %v665
  %v730 = vpack.c.bf16 %v666, %v666
  %v731 = vpack.c.bf16 %v667, %v667
  %v732 = vpack.c.bf16 %v668, %v668
  %v733 = vpack.c.bf16 %v669, %v669
  %v734 = vpack.c.bf16 %v670, %v670
  %v735 = vpack.c.bf16 %v671, %v671
  %v736 = vpack.c.bf16 %v672, %v672
  %v737 = vpack.c.bf16 %v673, %v673
  %v738 = vpack.c.bf16 %v674, %v674
  %v739 = vpack.c.bf16 %v675, %v675
  %v740 = vpack.c.bf16 %v676, %v676
  %v741 = vpack.c.bf16 %v677, %v677
  %v742 = vpack.c.bf16 %v678, %v678
  %v743 = vpack.c.bf16 %v679, %v679
  %v744 = vpack.c.bf16 %v680, %v680
  %v745 = vpack.c.bf16 %v681, %v681
  %v746 = vpack.c.bf16 %v682, %v682
  %v747 = vpack.c.bf16 %v683, %v683
  %v748 = vpack.c.bf16 %v684, %v684
  %v749 = vpack.c.bf16 %v685, %v685
  %v750 = vpack.c.bf16 %v686, %v686
  %v751 = vpack.c.bf16 %v687, %v687
  %v752 = vpack.c.bf16 %v688, %v688
  %v753 = vpack.c.bf16 %v689, %v689
  %v754 = vpack.c.bf16 %v690, %v690
  %v755 = vpack.c.bf16 %v691, %v691
  %v756 = vpack.c.bf16 %v692, %v692
  %v757 = vpack.c.bf16 %v693, %v693
  %v758 = vpack.c.bf16 %v694, %v694
  %v759 = vpack.c.bf16 %v695, %v695
  %v760 = vpack.c.bf16 %v696, %v696
  %v761 = vpack.c.bf16 %v697, %v697
  %v762 = vpack.c.bf16 %v698, %v698
  %vm763 = vcmask 125952
  %764 = vst.msk [vmem:[%s3] sm:$0xf] %vm763, %v699
  %765 = vst.msk [vmem:[%s3 + $0x4] sm:$0xf] %vm763, %v700
  %766 = vst.msk [vmem:[%s3 + $0x8] sm:$0xf] %vm763, %v701
  %767 = vst.msk [vmem:[%s3 + $0xc] sm:$0xf] %vm763, %v702
  %768 = vst.msk [vmem:[%s3 + $0x10] sm:$0xf] %vm763, %v703
  %769 = vst.msk [vmem:[%s3 + $0x14] sm:$0xf] %vm763, %v704
  %770 = vst.msk [vmem:[%s3 + $0x18] sm:$0xf] %vm763, %v705
  %771 = vst.msk [vmem:[%s3 + $0x1c] sm:$0xf] %vm763, %v706
  %772 = vst.msk [vmem:[%s3 + $0x20] sm:$0xf] %vm763, %v707
  %773 = vst.msk [vmem:[%s3 + $0x24] sm:$0xf] %vm763, %v708
  %774 = vst.msk [vmem:[%s3 + $0x28] sm:$0xf] %vm763, %v709
  %775 = vst.msk [vmem:[%s3 + $0x2c] sm:$0xf] %vm763, %v710
  %776 = vst.msk [vmem:[%s3 + $0x30] sm:$0xf] %vm763, %v711
  %777 = vst.msk [vmem:[%s3 + $0x34] sm:$0xf] %vm763, %v712
  %778 = vst.msk [vmem:[%s3 + $0x38] sm:$0xf] %vm763, %v713
  %779 = vst.msk [vmem:[%s3 + $0x3c] sm:$0xf] %vm763, %v714
  %780 = vst.msk [vmem:[%s3 + $0x40] sm:$0xf] %vm763, %v715
  %781 = vst.msk [vmem:[%s3 + $0x44] sm:$0xf] %vm763, %v716
  %782 = vst.msk [vmem:[%s3 + $0x48] sm:$0xf] %vm763, %v717
  %783 = vst.msk [vmem:[%s3 + $0x4c] sm:$0xf] %vm763, %v718
  %784 = vst.msk [vmem:[%s3 + $0x50] sm:$0xf] %vm763, %v719
  %785 = vst.msk [vmem:[%s3 + $0x54] sm:$0xf] %vm763, %v720
  %786 = vst.msk [vmem:[%s3 + $0x58] sm:$0xf] %vm763, %v721
  %787 = vst.msk [vmem:[%s3 + $0x5c] sm:$0xf] %vm763, %v722
  %788 = vst.msk [vmem:[%s3 + $0x60] sm:$0xf] %vm763, %v723
  %789 = vst.msk [vmem:[%s3 + $0x64] sm:$0xf] %vm763, %v724
  %790 = vst.msk [vmem:[%s3 + $0x68] sm:$0xf] %vm763, %v725
  %791 = vst.msk [vmem:[%s3 + $0x6c] sm:$0xf] %vm763, %v726
  %792 = vst.msk [vmem:[%s3 + $0x70] sm:$0xf] %vm763, %v727
  %793 = vst.msk [vmem:[%s3 + $0x74] sm:$0xf] %vm763, %v728
  %794 = vst.msk [vmem:[%s3 + $0x78] sm:$0xf] %vm763, %v729
  %795 = vst.msk [vmem:[%s3 + $0x7c] sm:$0xf] %vm763, %v730
  %796 = vst.msk [vmem:[%s3 + $0x80] sm:$0xf] %vm763, %v731
  %797 = vst.msk [vmem:[%s3 + $0x84] sm:$0xf] %vm763, %v732
  %798 = vst.msk [vmem:[%s3 + $0x88] sm:$0xf] %vm763, %v733
  %799 = vst.msk [vmem:[%s3 + $0x8c] sm:$0xf] %vm763, %v734
  %800 = vst.msk [vmem:[%s3 + $0x90] sm:$0xf] %vm763, %v735
  %801 = vst.msk [vmem:[%s3 + $0x94] sm:$0xf] %vm763, %v736
  %802 = vst.msk [vmem:[%s3 + $0x98] sm:$0xf] %vm763, %v737
  %803 = vst.msk [vmem:[%s3 + $0x9c] sm:$0xf] %vm763, %v738
  %804 = vst.msk [vmem:[%s3 + $0xa0] sm:$0xf] %vm763, %v739
  %805 = vst.msk [vmem:[%s3 + $0xa4] sm:$0xf] %vm763, %v740
  %806 = vst.msk [vmem:[%s3 + $0xa8] sm:$0xf] %vm763, %v741
  %807 = vst.msk [vmem:[%s3 + $0xac] sm:$0xf] %vm763, %v742
  %808 = vst.msk [vmem:[%s3 + $0xb0] sm:$0xf] %vm763, %v743
  %809 = vst.msk [vmem:[%s3 + $0xb4] sm:$0xf] %vm763, %v744
  %810 = vst.msk [vmem:[%s3 + $0xb8] sm:$0xf] %vm763, %v745
  %811 = vst.msk [vmem:[%s3 + $0xbc] sm:$0xf] %vm763, %v746
  %812 = vst.msk [vmem:[%s3 + $0xc0] sm:$0xf] %vm763, %v747
  %813 = vst.msk [vmem:[%s3 + $0xc4] sm:$0xf] %vm763, %v748
  %814 = vst.msk [vmem:[%s3 + $0xc8] sm:$0xf] %vm763, %v749
  %815 = vst.msk [vmem:[%s3 + $0xcc] sm:$0xf] %vm763, %v750
  %816 = vst.msk [vmem:[%s3 + $0xd0] sm:$0xf] %vm763, %v751
  %817 = vst.msk [vmem:[%s3 + $0xd4] sm:$0xf] %vm763, %v752
  %818 = vst.msk [vmem:[%s3 + $0xd8] sm:$0xf] %vm763, %v753
  %819 = vst.msk [vmem:[%s3 + $0xdc] sm:$0xf] %vm763, %v754
  %820 = vst.msk [vmem:[%s3 + $0xe0] sm:$0xf] %vm763, %v755
  %821 = vst.msk [vmem:[%s3 + $0xe4] sm:$0xf] %vm763, %v756
  %822 = vst.msk [vmem:[%s3 + $0xe8] sm:$0xf] %vm763, %v757
  %823 = vst.msk [vmem:[%s3 + $0xec] sm:$0xf] %vm763, %v758
  %824 = vst.msk [vmem:[%s3 + $0xf0] sm:$0xf] %vm763, %v759
  %825 = vst.msk [vmem:[%s3 + $0xf4] sm:$0xf] %vm763, %v760
  %826 = vst.msk [vmem:[%s3 + $0xf8] sm:$0xf] %vm763, %v761
  %827 = vst.msk [vmem:[%s3 + $0xfc] sm:$0xf] %vm763, %v762
  // Predicated region
  $region14: #{discriminator_forward.7} parent=0 // pred_check
    _
  $region15: #{discriminator_forward.7} parent=0 // pred_check_branch
    %829 = sbr.rel (0) target = $region17
  $region16: #{discriminator_forward.7} parent=0 // pred_region
    _
  $region17: #{discriminator_forward.7} parent=0 // pred_fallthru
    _
  // Predicated region
  $region18: #{discriminator_forward.7} parent=0 // pred_check
    _
  $region19: #{discriminator_forward.7} parent=0 // pred_check_branch
    %831 = sbr.rel (0) target = $region21
  $region20: #{discriminator_forward.7} parent=0 // pred_region
    _
  $region21: #{discriminator_forward.7} parent=0 // pred_fallthru
    _

// kernel: discriminator_forward.8
$region0: #{discriminator_forward.8}
  #allocation0 [shape = 'u32[]', space=smem, size = 0x4, offset = 0x4, fixed_abs, tag = 'smem constant byte address 0x4 - core index']
  #allocation1 [shape = 'u32[72,128]{1,0:T(1,128)}', space=vmem, size = 0x9000, scoped, tag = 'internal scratch']
  %s0 = inlined_call_operand.vmem [shape: bf16[128,256], index: 0, kind: input, shape index: {}]
  %s1 = inlined_call_operand.vmem [shape: bf16[256,32], index: 1, kind: input, shape index: {}]
  %s2 = inlined_call_operand.vmem [shape: f32[1,32], index: 2, kind: input, shape index: {}]
  %s3 = inlined_call_operand.vmem [shape: bf16[128,32], index: 3, kind: output, shape index: {}]
  %s4 = sld [smem:[#allocation0]]
  $region22: #{discriminator_forward.8} parent=0
    _
  %s6 = ssub.s32 1, %s4
  %s7 = scalar_select 0, %s6, %s4
  // Predicated region
  $region2: #{discriminator_forward.8} parent=0 // pred_check
    _
  $region3: #{discriminator_forward.8} parent=0 // pred_check_branch
    %9 = sbr.rel (0) target = $region5
  $region4: #{discriminator_forward.8} parent=0 // pred_region
    _
  $region5: #{discriminator_forward.8} parent=0 // pred_fallthru
    _
  // Predicated region
  $region6: #{discriminator_forward.8} parent=0 // pred_check
    _
  $region7: #{discriminator_forward.8} parent=0 // pred_check_branch
    %11 = sbr.rel (0) target = $region9
  $region8: #{discriminator_forward.8} parent=0 // pred_region
    _
  $region9: #{discriminator_forward.8} parent=0 // pred_fallthru
    _
  // Predicated region
  $region10: #{discriminator_forward.8} parent=0 // pred_check
    _
  $region11: #{discriminator_forward.8} parent=0 // pred_check_branch
    %13 = sbr.rel (0) target = $region13
  $region12: #{discriminator_forward.8} parent=0 // pred_region
    _
  $region13: #{discriminator_forward.8} parent=0 // pred_fallthru
    _
  %v14 = vld [vmem:[%s0] sm:$0xff]
  %v15 = vld [vmem:[%s0 + $0x8] sm:$0xff]
  %v16 = vld [vmem:[%s0 + $0x10] sm:$0xff]
  %v17 = vld [vmem:[%s0 + $0x18] sm:$0xff]
  %v18 = vld [vmem:[%s0 + $0x20] sm:$0xff]
  %v19 = vld [vmem:[%s0 + $0x28] sm:$0xff]
  %v20 = vld [vmem:[%s0 + $0x30] sm:$0xff]
  %v21 = vld [vmem:[%s0 + $0x38] sm:$0xff]
  %v22 = vld [vmem:[%s0 + $0x40] sm:$0xff]
  %v23 = vld [vmem:[%s0 + $0x48] sm:$0xff]
  %v24 = vld [vmem:[%s0 + $0x50] sm:$0xff]
  %v25 = vld [vmem:[%s0 + $0x58] sm:$0xff]
  %v26 = vld [vmem:[%s0 + $0x60] sm:$0xff]
  %v27 = vld [vmem:[%s0 + $0x68] sm:$0xff]
  %v28 = vld [vmem:[%s0 + $0x70] sm:$0xff]
  %v29 = vld [vmem:[%s0 + $0x78] sm:$0xff]
  %v30 = vld [vmem:[%s1] sm:$0xf]
  %v31 = vld [vmem:[%s1 + $0x4] sm:$0xf]
  %v32 = vld [vmem:[%s1 + $0x8] sm:$0xf]
  %v33 = vld [vmem:[%s1 + $0xc] sm:$0xf]
  %v34 = vld [vmem:[%s1 + $0x10] sm:$0xf]
  %v35 = vld [vmem:[%s1 + $0x14] sm:$0xf]
  %v36 = vld [vmem:[%s1 + $0x18] sm:$0xf]
  %v37 = vld [vmem:[%s1 + $0x1c] sm:$0xf]
  %v38 = vld [vmem:[%s1 + $0x20] sm:$0xf]
  %v39 = vld [vmem:[%s1 + $0x24] sm:$0xf]
  %v40 = vld [vmem:[%s1 + $0x28] sm:$0xf]
  %v41 = vld [vmem:[%s1 + $0x2c] sm:$0xf]
  %v42 = vld [vmem:[%s1 + $0x30] sm:$0xf]
  %v43 = vld [vmem:[%s1 + $0x34] sm:$0xf]
  %v44 = vld [vmem:[%s1 + $0x38] sm:$0xf]
  %v45 = vld [vmem:[%s1 + $0x3c] sm:$0xf]
  %v46 = vld [vmem:[%s1 + $0x40] sm:$0xf]
  %v47 = vld [vmem:[%s1 + $0x44] sm:$0xf]
  %v48 = vld [vmem:[%s1 + $0x48] sm:$0xf]
  %v49 = vld [vmem:[%s1 + $0x4c] sm:$0xf]
  %v50 = vld [vmem:[%s1 + $0x50] sm:$0xf]
  %v51 = vld [vmem:[%s1 + $0x54] sm:$0xf]
  %v52 = vld [vmem:[%s1 + $0x58] sm:$0xf]
  %v53 = vld [vmem:[%s1 + $0x5c] sm:$0xf]
  %v54 = vld [vmem:[%s1 + $0x60] sm:$0xf]
  %v55 = vld [vmem:[%s1 + $0x64] sm:$0xf]
  %v56 = vld [vmem:[%s1 + $0x68] sm:$0xf]
  %v57 = vld [vmem:[%s1 + $0x6c] sm:$0xf]
  %v58 = vld [vmem:[%s1 + $0x70] sm:$0xf]
  %v59 = vld [vmem:[%s1 + $0x74] sm:$0xf]
  %v60 = vld [vmem:[%s1 + $0x78] sm:$0xf]
  %v61 = vld [vmem:[%s1 + $0x7c] sm:$0xf]
  %v62 = vld [vmem:[%s2] sm:$0x1]
  %v64 = vperm.slane %v62, 0
  %v82 = vunpack.c.l.b16 %v14
  %v83 = vunpack.c.h.b16 %v14
  %v84 = vunpack.c.l.b16 %v15
  %v85 = vunpack.c.h.b16 %v15
  %v86 = vunpack.c.l.b16 %v16
  %v87 = vunpack.c.h.b16 %v16
  %v88 = vunpack.c.l.b16 %v17
  %v89 = vunpack.c.h.b16 %v17
  %v90 = vunpack.c.l.b16 %v18
  %v91 = vunpack.c.h.b16 %v18
  %v92 = vunpack.c.l.b16 %v19
  %v93 = vunpack.c.h.b16 %v19
  %v94 = vunpack.c.l.b16 %v20
  %v95 = vunpack.c.h.b16 %v20
  %v96 = vunpack.c.l.b16 %v21
  %v97 = vunpack.c.h.b16 %v21
  %v98 = vunpack.c.l.b16 %v22
  %v99 = vunpack.c.h.b16 %v22
  %v100 = vunpack.c.l.b16 %v23
  %v101 = vunpack.c.h.b16 %v23
  %v102 = vunpack.c.l.b16 %v24
  %v103 = vunpack.c.h.b16 %v24
  %v104 = vunpack.c.l.b16 %v25
  %v105 = vunpack.c.h.b16 %v25
  %v106 = vunpack.c.l.b16 %v26
  %v107 = vunpack.c.h.b16 %v26
  %v108 = vunpack.c.l.b16 %v27
  %v109 = vunpack.c.h.b16 %v27
  %v110 = vunpack.c.l.b16 %v28
  %v111 = vunpack.c.h.b16 %v28
  %v112 = vunpack.c.l.b16 %v29
  %v113 = vunpack.c.h.b16 %v29
  %v114 = vpack.c.b16 %v84, %v82
  %v115 = vpack.c.b16 %v85, %v83
  %v116 = vpack.c.b16 %v88, %v86
  %v117 = vpack.c.b16 %v89, %v87
  %v118 = vpack.c.b16 %v92, %v90
  %v119 = vpack.c.b16 %v93, %v91
  %v120 = vpack.c.b16 %v96, %v94
  %v121 = vpack.c.b16 %v97, %v95
  %v122 = vpack.c.b16 %v100, %v98
  %v123 = vpack.c.b16 %v101, %v99
  %v124 = vpack.c.b16 %v104, %v102
  %v125 = vpack.c.b16 %v105, %v103
  %v126 = vpack.c.b16 %v108, %v106
  %v127 = vpack.c.b16 %v109, %v107
  %v128 = vpack.c.b16 %v112, %v110
  %v129 = vpack.c.b16 %v113, %v111
  %v178 = vunpack.c.l.b16 %v30
  %v179 = vunpack.c.l.b16 %v31
  %v180 = vunpack.c.l.b16 %v32
  %v181 = vunpack.c.l.b16 %v33
  %v182 = vunpack.c.l.b16 %v34
  %v183 = vunpack.c.l.b16 %v35
  %v184 = vunpack.c.l.b16 %v36
  %v185 = vunpack.c.l.b16 %v37
  %v186 = vunpack.c.l.b16 %v38
  %v187 = vunpack.c.l.b16 %v39
  %v188 = vunpack.c.l.b16 %v40
  %v189 = vunpack.c.l.b16 %v41
  %v190 = vunpack.c.l.b16 %v42
  %v191 = vunpack.c.l.b16 %v43
  %v192 = vunpack.c.l.b16 %v44
  %v193 = vunpack.c.l.b16 %v45
  %v194 = vunpack.c.l.b16 %v46
  %v195 = vunpack.c.l.b16 %v47
  %v196 = vunpack.c.l.b16 %v48
  %v197 = vunpack.c.l.b16 %v49
  %v198 = vunpack.c.l.b16 %v50
  %v199 = vunpack.c.l.b16 %v51
  %v200 = vunpack.c.l.b16 %v52
  %v201 = vunpack.c.l.b16 %v53
  %v202 = vunpack.c.l.b16 %v54
  %v203 = vunpack.c.l.b16 %v55
  %v204 = vunpack.c.l.b16 %v56
  %v205 = vunpack.c.l.b16 %v57
  %v206 = vunpack.c.l.b16 %v58
  %v207 = vunpack.c.l.b16 %v59
  %v208 = vunpack.c.l.b16 %v60
  %v209 = vunpack.c.l.b16 %v61
  %v210 = vpack.c.b16 %v179, %v178
  %v211 = vpack.c.b16 %v181, %v180
  %v212 = vpack.c.b16 %v183, %v182
  %v213 = vpack.c.b16 %v185, %v184
  %v214 = vpack.c.b16 %v187, %v186
  %v215 = vpack.c.b16 %v189, %v188
  %v216 = vpack.c.b16 %v191, %v190
  %v217 = vpack.c.b16 %v193, %v192
  %v218 = vpack.c.b16 %v195, %v194
  %v219 = vpack.c.b16 %v197, %v196
  %v220 = vpack.c.b16 %v199, %v198
  %v221 = vpack.c.b16 %v201, %v200
  %v222 = vpack.c.b16 %v203, %v202
  %v223 = vpack.c.b16 %v205, %v204
  %v224 = vpack.c.b16 %v207, %v206
  %v225 = vpack.c.b16 %v209, %v208
  %242 = vmatpush.bf16.msra.mxu0 %v217
  %243 = vmatpush.bf16.msra.mxu0 %v216
  %244 = vmatpush.bf16.msra.mxu0 %v215
  %245 = vmatpush.bf16.msra.mxu0 %v214
  %246 = vmatpush.bf16.msra.mxu0 %v213
  %247 = vmatpush.bf16.msra.mxu0 %v212
  %248 = vmatpush.bf16.msra.mxu0 %v211
  %249 = vmatpush.bf16.msra.mxu0 %v210
  %250 = vmatmul.bf16.gmra.mxu0 %v114
  %v251 = vpop.f32.mrf.mxu0
  %v252 = vadd.f32 %v64, %v251
  %v253 = vpop.f32.mrf.mxu0
  %v254 = vadd.f32 %v64, %v253
  %255 = vmatmul.bf16.gmra.mxu0 %v116
  %v256 = vpop.f32.mrf.mxu0
  %v257 = vadd.f32 %v64, %v256
  %v258 = vpop.f32.mrf.mxu0
  %v259 = vadd.f32 %v64, %v258
  %260 = vmatmul.bf16.gmra.mxu0 %v118
  %v261 = vpop.f32.mrf.mxu0
  %v262 = vadd.f32 %v64, %v261
  %v263 = vpop.f32.mrf.mxu0
  %v264 = vadd.f32 %v64, %v263
  %265 = vmatmul.bf16.gmra.mxu0 %v120
  %v266 = vpop.f32.mrf.mxu0
  %v267 = vadd.f32 %v64, %v266
  %v268 = vpop.f32.mrf.mxu0
  %v269 = vadd.f32 %v64, %v268
  %270 = vmatmul.bf16.gmra.mxu0 %v122
  %v271 = vpop.f32.mrf.mxu0
  %v272 = vadd.f32 %v64, %v271
  %v273 = vpop.f32.mrf.mxu0
  %v274 = vadd.f32 %v64, %v273
  %275 = vmatmul.bf16.gmra.mxu0 %v124
  %v276 = vpop.f32.mrf.mxu0
  %v277 = vadd.f32 %v64, %v276
  %v278 = vpop.f32.mrf.mxu0
  %v279 = vadd.f32 %v64, %v278
  %280 = vmatmul.bf16.gmra.mxu0 %v126
  %v281 = vpop.f32.mrf.mxu0
  %v282 = vadd.f32 %v64, %v281
  %v283 = vpop.f32.mrf.mxu0
  %v284 = vadd.f32 %v64, %v283
  %285 = vmatmul.bf16.gmra.mxu0 %v128
  %v286 = vpop.f32.mrf.mxu0
  %v287 = vadd.f32 %v64, %v286
  %v288 = vpop.f32.mrf.mxu0
  %v289 = vadd.f32 %v64, %v288
  %290 = vdwg.mxu0
  %291 = vmatpush.bf16.msra.mxu0 %v225
  %292 = vmatpush.bf16.msra.mxu0 %v224
  %293 = vmatpush.bf16.msra.mxu0 %v223
  %294 = vmatpush.bf16.msra.mxu0 %v222
  %295 = vmatpush.bf16.msra.mxu0 %v221
  %296 = vmatpush.bf16.msra.mxu0 %v220
  %297 = vmatpush.bf16.msra.mxu0 %v219
  %298 = vmatpush.bf16.msra.mxu0 %v218
  %299 = vmatmul.bf16.gmra.mxu0 %v115
  %v300 = vpop.f32.mrf.mxu0
  %v301 = vadd.f32 %v252, %v300
  %v302 = vpop.f32.mrf.mxu0
  %v303 = vadd.f32 %v254, %v302
  %304 = vmatmul.bf16.gmra.mxu0 %v117
  %v305 = vpop.f32.mrf.mxu0
  %v306 = vadd.f32 %v257, %v305
  %v307 = vpop.f32.mrf.mxu0
  %v308 = vadd.f32 %v259, %v307
  %309 = vmatmul.bf16.gmra.mxu0 %v119
  %v310 = vpop.f32.mrf.mxu0
  %v311 = vadd.f32 %v262, %v310
  %v312 = vpop.f32.mrf.mxu0
  %v313 = vadd.f32 %v264, %v312
  %314 = vmatmul.bf16.gmra.mxu0 %v121
  %v315 = vpop.f32.mrf.mxu0
  %v316 = vadd.f32 %v267, %v315
  %v317 = vpop.f32.mrf.mxu0
  %v318 = vadd.f32 %v269, %v317
  %319 = vmatmul.bf16.gmra.mxu0 %v123
  %v320 = vpop.f32.mrf.mxu0
  %v321 = vadd.f32 %v272, %v320
  %v322 = vpop.f32.mrf.mxu0
  %v323 = vadd.f32 %v274, %v322
  %324 = vmatmul.bf16.gmra.mxu0 %v125
  %v325 = vpop.f32.mrf.mxu0
  %v326 = vadd.f32 %v277, %v325
  %v327 = vpop.f32.mrf.mxu0
  %v328 = vadd.f32 %v279, %v327
  %329 = vmatmul.bf16.gmra.mxu0 %v127
  %v330 = vpop.f32.mrf.mxu0
  %v331 = vadd.f32 %v282, %v330
  %v332 = vpop.f32.mrf.mxu0
  %v333 = vadd.f32 %v284, %v332
  %334 = vmatmul.bf16.gmra.mxu0 %v129
  %v335 = vpop.f32.mrf.mxu0
  %v336 = vadd.f32 %v287, %v335
  %v337 = vpop.f32.mrf.mxu0
  %v338 = vadd.f32 %v289, %v337
  %339 = vdwg.mxu0
  %vm340 = vcmp.ge.f32.partialorder %v301, 0.0
  %vm341 = vcmp.ge.f32.partialorder %v303, 0.0
  %vm342 = vcmp.ge.f32.partialorder %v306, 0.0
  %vm343 = vcmp.ge.f32.partialorder %v308, 0.0
  %vm344 = vcmp.ge.f32.partialorder %v311, 0.0
  %vm345 = vcmp.ge.f32.partialorder %v313, 0.0
  %vm346 = vcmp.ge.f32.partialorder %v316, 0.0
  %vm347 = vcmp.ge.f32.partialorder %v318, 0.0
  %vm348 = vcmp.ge.f32.partialorder %v321, 0.0
  %vm349 = vcmp.ge.f32.partialorder %v323, 0.0
  %vm350 = vcmp.ge.f32.partialorder %v326, 0.0
  %vm351 = vcmp.ge.f32.partialorder %v328, 0.0
  %vm352 = vcmp.ge.f32.partialorder %v331, 0.0
  %vm353 = vcmp.ge.f32.partialorder %v333, 0.0
  %vm354 = vcmp.ge.f32.partialorder %v336, 0.0
  %vm355 = vcmp.ge.f32.partialorder %v338, 0.0
  %v356 = vmul.f32 %v301, 0.1
  %v357 = vmul.f32 %v303, 0.1
  %v358 = vmul.f32 %v306, 0.1
  %v359 = vmul.f32 %v308, 0.1
  %v360 = vmul.f32 %v311, 0.1
  %v361 = vmul.f32 %v313, 0.1
  %v362 = vmul.f32 %v316, 0.1
  %v363 = vmul.f32 %v318, 0.1
  %v364 = vmul.f32 %v321, 0.1
  %v365 = vmul.f32 %v323, 0.1
  %v366 = vmul.f32 %v326, 0.1
  %v367 = vmul.f32 %v328, 0.1
  %v368 = vmul.f32 %v331, 0.1
  %v369 = vmul.f32 %v333, 0.1
  %v370 = vmul.f32 %v336, 0.1
  %v371 = vmul.f32 %v338, 0.1
  %v372 = vsel %vm340, %v301, %v356
  %v373 = vsel %vm341, %v303, %v357
  %v374 = vsel %vm342, %v306, %v358
  %v375 = vsel %vm343, %v308, %v359
  %v376 = vsel %vm344, %v311, %v360
  %v377 = vsel %vm345, %v313, %v361
  %v378 = vsel %vm346, %v316, %v362
  %v379 = vsel %vm347, %v318, %v363
  %v380 = vsel %vm348, %v321, %v364
  %v381 = vsel %vm349, %v323, %v365
  %v382 = vsel %vm350, %v326, %v366
  %v383 = vsel %vm351, %v328, %v367
  %v384 = vsel %vm352, %v331, %v368
  %v385 = vsel %vm353, %v333, %v369
  %v386 = vsel %vm354, %v336, %v370
  %v387 = vsel %vm355, %v338, %v371
  %v388 = vpack.c.bf16 %v372, %v372
  %v389 = vpack.c.bf16 %v373, %v373
  %v390 = vpack.c.bf16 %v374, %v374
  %v391 = vpack.c.bf16 %v375, %v375
  %v392 = vpack.c.bf16 %v376, %v376
  %v393 = vpack.c.bf16 %v377, %v377
  %v394 = vpack.c.bf16 %v378, %v378
  %v395 = vpack.c.bf16 %v379, %v379
  %v396 = vpack.c.bf16 %v380, %v380
  %v397 = vpack.c.bf16 %v381, %v381
  %v398 = vpack.c.bf16 %v382, %v382
  %v399 = vpack.c.bf16 %v383, %v383
  %v400 = vpack.c.bf16 %v384, %v384
  %v401 = vpack.c.bf16 %v385, %v385
  %v402 = vpack.c.bf16 %v386, %v386
  %v403 = vpack.c.bf16 %v387, %v387
  %vm404 = vcmask 257024
  %405 = vst.msk [vmem:[%s3] sm:$0xf] %vm404, %v388
  %406 = vst.msk [vmem:[%s3 + $0x4] sm:$0xf] %vm404, %v389
  %407 = vst.msk [vmem:[%s3 + $0x8] sm:$0xf] %vm404, %v390
  %408 = vst.msk [vmem:[%s3 + $0xc] sm:$0xf] %vm404, %v391
  %409 = vst.msk [vmem:[%s3 + $0x10] sm:$0xf] %vm404, %v392
  %410 = vst.msk [vmem:[%s3 + $0x14] sm:$0xf] %vm404, %v393
  %411 = vst.msk [vmem:[%s3 + $0x18] sm:$0xf] %vm404, %v394
  %412 = vst.msk [vmem:[%s3 + $0x1c] sm:$0xf] %vm404, %v395
  %413 = vst.msk [vmem:[%s3 + $0x20] sm:$0xf] %vm404, %v396
  %414 = vst.msk [vmem:[%s3 + $0x24] sm:$0xf] %vm404, %v397
  %415 = vst.msk [vmem:[%s3 + $0x28] sm:$0xf] %vm404, %v398
  %416 = vst.msk [vmem:[%s3 + $0x2c] sm:$0xf] %vm404, %v399
  %417 = vst.msk [vmem:[%s3 + $0x30] sm:$0xf] %vm404, %v400
  %418 = vst.msk [vmem:[%s3 + $0x34] sm:$0xf] %vm404, %v401
  %419 = vst.msk [vmem:[%s3 + $0x38] sm:$0xf] %vm404, %v402
  %420 = vst.msk [vmem:[%s3 + $0x3c] sm:$0xf] %vm404, %v403
  // Predicated region
  $region14: #{discriminator_forward.8} parent=0 // pred_check
    _
  $region15: #{discriminator_forward.8} parent=0 // pred_check_branch
    %422 = sbr.rel (0) target = $region17
  $region16: #{discriminator_forward.8} parent=0 // pred_region
    _
  $region17: #{discriminator_forward.8} parent=0 // pred_fallthru
    _
  // Predicated region
  $region18: #{discriminator_forward.8} parent=0 // pred_check
    _
  $region19: #{discriminator_forward.8} parent=0 // pred_check_branch
    %424 = sbr.rel (0) target = $region21
  $region20: #{discriminator_forward.8} parent=0 // pred_region
    _
  $region21: #{discriminator_forward.8} parent=0 // pred_fallthru
    _

// kernel: discriminator_forward.9
$region0: #{discriminator_forward.9}
  #allocation0 [shape = 'u32[]', space=smem, size = 0x4, offset = 0x4, fixed_abs, tag = 'smem constant byte address 0x4 - core index']
  #allocation1 [shape = 'u32[72,128]{1,0:T(1,128)}', space=vmem, size = 0x9000, scoped, tag = 'internal scratch']
  #allocation2 [shape = 'f32[1]{0:T(128)S(6)}', space=smem, size = 0x200, scoped, tag = 'scoped memory for discriminator_forward.9']
  %s0 = inlined_call_operand.vmem [shape: bf16[2,64,32], index: 0, kind: input, shape index: {}]
  %s1 = inlined_call_operand.vmem [shape: bf16[32,40], index: 1, kind: input, shape index: {}]
  %s2 = inlined_call_operand.vmem [shape: f32[1,40], index: 2, kind: input, shape index: {}]
  %s3 = inlined_call_operand.<no memory space> [shape: f32[1], index: 3, kind: input, shape index: {}]
  %s4 = inlined_call_operand.vmem [shape: bf16[2,64,32], index: 4, kind: output, shape index: {0}]
  %s5 = inlined_call_operand.hbm [shape: f32[2,64,64], index: 5, kind: output, shape index: {1}]
  %6 = xla_tuple %s4, %s5
  %s7 = sld [smem:[#allocation0]]
  $region57: #{discriminator_forward.9} parent=0
    _
  %s9 = ssub.s32 1, %s7
  %s10 = scalar_select 0, %s9, %s7
  %11 = sst [smem:[#allocation2]] %s3
  $region1: #{discriminator_forward.9} parent=0
    #allocation3 [shape = 'u8[65536]{0}', space=vmem, size = 0x10000, scoped, tag = 'output window, operand 1']
    #allocation4 [shape = 's32[2]{0}', space=sflag, size = 0x8, scoped, tag = 'scoped memory for discriminator_forward.9']
    %12 = vsyncpa [#allocation4], 0
    %s13 = scalar_lea.sflag [#allocation4], 1
    %14 = vsyncpa %s13, 0
    loop: start=0, step=1, limit=4
    $region2: #{discriminator_forward.9} parent=1 // loop_pre_header
      _
    $region3: #{discriminator_forward.9} parent=1 // loop_header
      %s16 = sphi 0, %s20
      %p17 = scmp.ge.s32.totalorder %s16, 4
      %s26 = sphi 0, %s28
      %s29 = sphi 0, %s26
      %s30 = sphi 0, %s29
      %s46 = sphi 0, %s30
      %s50 = sphi 0, %s50
      %s52 = sphi 0, %s50
      %s53 = sphi 0, %s52
      %s67 = sphi 0, %s53
      %s71 = sphi 0, %s71
      %s73 = sphi 0, %s71
      %s74 = sphi 0, %s73
      %s88 = sphi 0, %s74
      %s92 = sphi 0, %s92
      %s94 = sphi 0, %s92
      %s95 = sphi 0, %s94
      %s109 = sphi 0, %s95
      %s115 = sphi 0, %s117
      %s118 = sphi 0, %s115
      %s119 = sphi 0, %s118
      %s135 = sphi 0, %s119
      %s141 = sphi 0, %s143
      %s144 = sphi 0, %s141
      %s145 = sphi 0, %s144
      %s161 = sphi 0, %s145
    $region4: #{discriminator_forward.9} parent=1 // loop_header_branch
      %19 = sbr.rel (%p17) target = $region8
    $region5: #{discriminator_forward.9} parent=1 // loop_body
      %s21 = ssub.s32 %s16, 1
      %s22 = ssub.s32 %s16, 2
      %s23 = sadd.s32 %s16, 1
      %s24 = ssub.s32 %s16, %s23
      %p25 = scmp.eq.s32.totalorder %s24, 0
      %s27 = sadd.s32 %s26, 1
      %s28 = scalar_select %p25, %s26, %s27
      %p31 = pneg %p25
      %p32 = scmp.eq.s32.totalorder %s16, 1
      %p33 = por %p31, %p32
      %p34 = scmp.ne.s32.totalorder %s26, %s29
      %p35 = scmp.eq.s32.totalorder %s16, 0
      %p36 = por %p34, %p35
      %p37 = scmp.ne.s32.totalorder %s26, %s29
      %p38 = scmp.eq.s32.totalorder %s21, 1
      %p39 = por %p37, %p38
      %p40 = scmp.ne.s32.totalorder %s29, %s30
      %p41 = scmp.eq.s32.totalorder %s21, 0
      %p42 = por %p40, %p41
      %p43 = scmp.ne.s32.totalorder %s29, %s30
      %p44 = scmp.eq.s32.totalorder %s22, 1
      %p45 = por %p43, %p44
      %p47 = scmp.ne.s32.totalorder %s30, %s46
      %p48 = scmp.eq.s32.totalorder %s22, 0
      %p49 = por %p47, %p48
      %s51 = sadd.s32 %s50, 1
      %p54 = scmp.eq.s32.totalorder %s16, 1
      %p55 = scmp.ne.s32.totalorder %s50, %s52
      %p56 = scmp.eq.s32.totalorder %s16, 0
      %p57 = por %p55, %p56
      %p58 = scmp.ne.s32.totalorder %s50, %s52
      %p59 = scmp.eq.s32.totalorder %s21, 1
      %p60 = por %p58, %p59
      %p61 = scmp.ne.s32.totalorder %s52, %s53
      %p62 = scmp.eq.s32.totalorder %s21, 0
      %p63 = por %p61, %p62
      %p64 = scmp.ne.s32.totalorder %s52, %s53
      %p65 = scmp.eq.s32.totalorder %s22, 1
      %p66 = por %p64, %p65
      %p68 = scmp.ne.s32.totalorder %s53, %s67
      %p69 = scmp.eq.s32.totalorder %s22, 0
      %p70 = por %p68, %p69
      %s72 = sadd.s32 %s71, 1
      %p75 = scmp.eq.s32.totalorder %s16, 1
      %p76 = scmp.ne.s32.totalorder %s71, %s73
      %p77 = scmp.eq.s32.totalorder %s16, 0
      %p78 = por %p76, %p77
      %p79 = scmp.ne.s32.totalorder %s71, %s73
      %p80 = scmp.eq.s32.totalorder %s21, 1
      %p81 = por %p79, %p80
      %p82 = scmp.ne.s32.totalorder %s73, %s74
      %p83 = scmp.eq.s32.totalorder %s21, 0
      %p84 = por %p82, %p83
      %p85 = scmp.ne.s32.totalorder %s73, %s74
      %p86 = scmp.eq.s32.totalorder %s22, 1
      %p87 = por %p85, %p86
      %p89 = scmp.ne.s32.totalorder %s74, %s88
      %p90 = scmp.eq.s32.totalorder %s22, 0
      %p91 = por %p89, %p90
      %s93 = sadd.s32 %s92, 1
      %p96 = scmp.eq.s32.totalorder %s16, 1
      %p97 = scmp.ne.s32.totalorder %s92, %s94
      %p98 = scmp.eq.s32.totalorder %s16, 0
      %p99 = por %p97, %p98
      %p100 = scmp.ne.s32.totalorder %s92, %s94
      %p101 = scmp.eq.s32.totalorder %s21, 1
      %p102 = por %p100, %p101
      %p103 = scmp.ne.s32.totalorder %s94, %s95
      %p104 = scmp.eq.s32.totalorder %s21, 0
      %p105 = por %p103, %p104
      %p106 = scmp.ne.s32.totalorder %s94, %s95
      %p107 = scmp.eq.s32.totalorder %s22, 1
      %p108 = por %p106, %p107
      %p110 = scmp.ne.s32.totalorder %s95, %s109
      %p111 = scmp.eq.s32.totalorder %s22, 0
      %p112 = por %p110, %p111
      %s113 = ssub.s32 %s16, %s23
      %p114 = scmp.eq.s32.totalorder %s113, 0
      %s116 = sadd.s32 %s115, 1
      %s117 = scalar_select %p114, %s115, %s116
      %p120 = pneg %p114
      %p121 = scmp.eq.s32.totalorder %s16, 1
      %p122 = por %p120, %p121
      %p123 = scmp.ne.s32.totalorder %s115, %s118
      %p124 = scmp.eq.s32.totalorder %s16, 0
      %p125 = por %p123, %p124
      %p126 = scmp.ne.s32.totalorder %s115, %s118
      %p127 = scmp.eq.s32.totalorder %s21, 1
      %p128 = por %p126, %p127
      %p129 = scmp.ne.s32.totalorder %s118, %s119
      %p130 = scmp.eq.s32.totalorder %s21, 0
      %p131 = por %p129, %p130
      %p132 = scmp.ne.s32.totalorder %s118, %s119
      %p133 = scmp.eq.s32.totalorder %s22, 1
      %p134 = por %p132, %p133
      %p136 = scmp.ne.s32.totalorder %s119, %s135
      %p137 = scmp.eq.s32.totalorder %s22, 0
      %p138 = por %p136, %p137
      %s139 = ssub.s32 %s16, %s23
      %p140 = scmp.eq.s32.totalorder %s139, 0
      %s142 = sadd.s32 %s141, 1
      %s143 = scalar_select %p140, %s141, %s142
      %p146 = pneg %p140
      %p147 = scmp.eq.s32.totalorder %s16, 1
      %p148 = por %p146, %p147
      %p149 = scmp.ne.s32.totalorder %s141, %s144
      %p150 = scmp.eq.s32.totalorder %s16, 0
      %p151 = por %p149, %p150
      %p152 = scmp.ne.s32.totalorder %s141, %s144
      %p153 = scmp.eq.s32.totalorder %s21, 1
      %p154 = por %p152, %p153
      %p155 = scmp.ne.s32.totalorder %s144, %s145
      %p156 = scmp.eq.s32.totalorder %s21, 0
      %p157 = por %p155, %p156
      %p158 = scmp.ne.s32.totalorder %s144, %s145
      %p159 = scmp.eq.s32.totalorder %s22, 1
      %p160 = por %p158, %p159
      %p162 = scmp.ne.s32.totalorder %s145, %s161
      %p163 = scmp.eq.s32.totalorder %s22, 0
      %p164 = por %p162, %p163
      %p165 = scmp.le.s32.totalorder 1, %s16
      %p166 = scmp.lt.s32.totalorder %s16, 3
      %p167 = pnand %p165, %p166
      %p168 = pneg %p167
      // Predicated region
      $region9: #{discriminator_forward.9} parent=5 // pred_check
        _
      $region10: #{discriminator_forward.9} parent=5 // pred_check_branch
        %170 = sbr.rel (%p167) target = $region12
      $region11: #{discriminator_forward.9} parent=5 // pred_region
        %s171 = ssub.s32 %s16, 1
        // Predicated region
        $region13: #{discriminator_forward.9} parent=11 // pred_check
          %p172 = pneg %p63
        $region14: #{discriminator_forward.9} parent=11 // pred_check_branch
          %174 = sbr.rel (%p172) target = $region16
        $region15: #{discriminator_forward.9} parent=11 // pred_region
          _
        $region16: #{discriminator_forward.9} parent=11 // pred_fallthru
          _
        // Predicated region
        $region17: #{discriminator_forward.9} parent=11 // pred_check
          %p175 = pneg %p84
        $region18: #{discriminator_forward.9} parent=11 // pred_check_branch
          %177 = sbr.rel (%p175) target = $region20
        $region19: #{discriminator_forward.9} parent=11 // pred_region
          _
        $region20: #{discriminator_forward.9} parent=11 // pred_fallthru
          _
        // Predicated region
        $region21: #{discriminator_forward.9} parent=11 // pred_check
          %p178 = pneg %p105
        $region22: #{discriminator_forward.9} parent=11 // pred_check_branch
          %180 = sbr.rel (%p178) target = $region24
        $region23: #{discriminator_forward.9} parent=11 // pred_region
          _
        $region24: #{discriminator_forward.9} parent=11 // pred_fallthru
          _
      $region12: #{discriminator_forward.9} parent=5 // pred_fallthru
        _
      %p181 = scmp.lt.s32.totalorder %s16, 2
      // Predicated region
      $region25: #{discriminator_forward.9} parent=5 // pred_check
        %p182 = pneg %p181
      $region26: #{discriminator_forward.9} parent=5 // pred_check_branch
        %184 = sbr.rel (%p182) target = $region28
      $region27: #{discriminator_forward.9} parent=5 // pred_region
        // Predicated region
        $region29: #{discriminator_forward.9} parent=27 // pred_check
          %p185 = pneg %p36
        $region30: #{discriminator_forward.9} parent=27 // pred_check_branch
          %187 = sbr.rel (%p185) target = $region32
        $region31: #{discriminator_forward.9} parent=27 // pred_region
          %p188 = scmp.lt.s32.totalorder %s16, 1
          %s189 = scalar_select %p188, %s16, 1
          %s190 = smul.addr %s189, 8
          %s191 = smul.addr %s190, 4
          %s192 = scalar_lea.vmem %s0, %s191
        $region32: #{discriminator_forward.9} parent=27 // pred_fallthru
          _
      $region28: #{discriminator_forward.9} parent=5 // pred_fallthru
        _
      %p193 = scmp.le.s32.totalorder 1, %s16
      %p194 = scmp.lt.s32.totalorder %s16, 3
      %p195 = pnand %p193, %p194
      %p196 = pneg %p195
      // Predicated region
      $region33: #{discriminator_forward.9} parent=5 // pred_check
        _
      $region34: #{discriminator_forward.9} parent=5 // pred_check_branch
        %198 = sbr.rel (%p195) target = $region36
      $region35: #{discriminator_forward.9} parent=5 // pred_region
        %s199 = ssub.s32 %s16, 1
        %p200 = scmp.lt.s32.totalorder %s21, 1
        %s201 = scalar_select %p200, %s21, 1
        %s202 = smul.addr %s201, 8
        %s203 = smul.addr %s202, 4
        %s204 = scalar_lea.vmem %s0, %s203
        %p205 = pneg %p42
        %p206 = pneg %p39
        %p207 = pneg %p63
        %p208 = pneg %p60
        %p209 = pneg %p84
        %p210 = pneg %p81
        %p211 = pneg %p105
        %p212 = pneg %p102
        %p213 = pneg %p131
        %p214 = pneg %p128
        %p215 = scmp.lt.s32.totalorder %s21, 1
        %s216 = scalar_select %p215, %s21, 1
        %s217 = smul.addr %s216, 8
        %s218 = smul.addr %s217, 4
        %s219 = scalar_lea.vmem %s4, %s218
        %p220 = pneg %p157
        %p221 = pneg %p154
        %s222 = sand.u32 %s144, 1
        %s223 = scalar_lea.sflag [#allocation4], %s222
        %s224 = sand.u32 %s144, 1
        %s225 = smul.addr %s224, 64
        %s226 = scalar_lea.vmem [#allocation3], %s225
        %p227 = scmp.lt.s32.totalorder %s21, 1
        %s228 = scalar_select %p227, %s21, 1
        %s229 = smul.addr %s228, 8
        %s230 = smul.addr %s229, 4
        %s231 = scalar_lea.vmem %s0, %s230
        %p232 = scmp.lt.s32.totalorder %s21, 1
        %s233 = scalar_select %p232, %s21, 1
        %s234 = smul.addr %s233, 8
        %s235 = smul.addr %s234, 4
        %s236 = scalar_lea.vmem %s4, %s235
        %v238 = vld [vmem:[%s231] sm:$0xf]
        %v239 = vld [vmem:[%s231 + $0x4] sm:$0xf]
        %v240 = vld [vmem:[%s231 + $0x8] sm:$0xf]
        %v241 = vld [vmem:[%s231 + $0xc] sm:$0xf]
        %v242 = vld [vmem:[%s231 + $0x10] sm:$0xf]
        %v243 = vld [vmem:[%s231 + $0x14] sm:$0xf]
        %v244 = vld [vmem:[%s231 + $0x18] sm:$0xf]
        %v245 = vld [vmem:[%s231 + $0x1c] sm:$0xf]
        %v246 = vld [vmem:[%s1] sm:$0xf]
        %v247 = vld [vmem:[%s1 + $0x4] sm:$0xf]
        %v248 = vld [vmem:[%s1 + $0x8] sm:$0xf]
        %v249 = vld [vmem:[%s1 + $0xc] sm:$0xf]
        %v250 = vld [vmem:[%s2] sm:$0x1]
        %v252 = vperm.slane %v250, 0
        %v262 = vunpack.c.l.b16 %v238
        %v263 = vunpack.c.l.b16 %v239
        %v264 = vunpack.c.l.b16 %v240
        %v265 = vunpack.c.l.b16 %v241
        %v266 = vunpack.c.l.b16 %v242
        %v267 = vunpack.c.l.b16 %v243
        %v268 = vunpack.c.l.b16 %v244
        %v269 = vunpack.c.l.b16 %v245
        %v270 = vpack.c.b16 %v263, %v262
        %v271 = vpack.c.b16 %v265, %v264
        %v272 = vpack.c.b16 %v267, %v266
        %v273 = vpack.c.b16 %v269, %v268
        %v278 = vunpack.c.l.b16 %v246
        %v279 = vunpack.c.l.b16 %v247
        %v280 = vunpack.c.l.b16 %v248
        %v281 = vunpack.c.l.b16 %v249
        %v282 = vpack.c.b16 %v279, %v278
        %v283 = vpack.c.b16 %v281, %v280
        %vm286 = vcmask 261120
        %v288 = vsel %vm286, %v270, 0
        %v291 = vsel %vm286, %v271, 0
        %v294 = vsel %vm286, %v272, 0
        %v297 = vsel %vm286, %v273, 0
        %299 = vmatpush.bf16.msra.mxu0 0
        %300 = vmatpush.bf16.msra.mxu0 0
        %301 = vmatpush.bf16.msra.mxu0 0
        %302 = vmatpush.bf16.msra.mxu0 0
        %303 = vmatpush.bf16.msra.mxu0 0
        %304 = vmatpush.bf16.msra.mxu0 0
        %305 = vmatpush.bf16.msra.mxu0 %v283
        %306 = vmatpush.bf16.msra.mxu0 %v282
        %307 = vmatmul.bf16.gmra.mxu0 %v288
        %v308 = vpop.f32.mrf.mxu0
        %v309 = vadd.f32 %v252, %v308
        %v310 = vpop.f32.mrf.mxu0
        %v311 = vadd.f32 %v252, %v310
        %312 = vmatmul.bf16.gmra.mxu0 %v291
        %v313 = vpop.f32.mrf.mxu0
        %v314 = vadd.f32 %v252, %v313
        %v315 = vpop.f32.mrf.mxu0
        %v316 = vadd.f32 %v252, %v315
        %317 = vmatmul.bf16.gmra.mxu0 %v294
        %v318 = vpop.f32.mrf.mxu0
        %v319 = vadd.f32 %v252, %v318
        %v320 = vpop.f32.mrf.mxu0
        %v321 = vadd.f32 %v252, %v320
        %322 = vmatmul.bf16.gmra.mxu0 %v297
        %v323 = vpop.f32.mrf.mxu0
        %v324 = vadd.f32 %v252, %v323
        %v325 = vpop.f32.mrf.mxu0
        %v326 = vadd.f32 %v252, %v325
        %327 = vdwg.mxu0
        %v328 = vpack.c.bf16 %v311, %v309
        %v329 = vpack.c.bf16 %v316, %v314
        %v330 = vpack.c.bf16 %v321, %v319
        %v331 = vpack.c.bf16 %v326, %v324
        %336 = vrot.lane.b32.xlu0 %v328, 124
        %v337 = vpop.permute.xlu0 %336
        %338 = vrot.lane.b32.xlu0 %v329, 124
        %v339 = vpop.permute.xlu0 %338
        %340 = vrot.lane.b32.xlu0 %v330, 124
        %v341 = vpop.permute.xlu0 %340
        %342 = vrot.lane.b32.xlu0 %v331, 124
        %v343 = vpop.permute.xlu0 %342
        %vm344 = vcmask 31744
        %v346 = vsel %vm344, %v337, 0
        %v349 = vsel %vm344, %v339, 0
        %v352 = vsel %vm344, %v341, 0
        %v355 = vsel %vm344, %v343, 0
        %v358 = vsel %vm344, %v328, 0
        %v361 = vsel %vm344, %v329, 0
        %v364 = vsel %vm344, %v330, 0
        %v367 = vsel %vm344, %v331, 0
        %369 = vmatpush.bf16.xpose.msra.mxu0 0
        %370 = vmatpush.bf16.xpose.msra.mxu0 0
        %371 = vmatpush.bf16.xpose.msra.mxu0 0
        %372 = vmatpush.bf16.xpose.msra.mxu0 0
        %373 = vmatpush.bf16.xpose.msra.mxu0 %v367
        %374 = vmatpush.bf16.xpose.msra.mxu0 %v364
        %375 = vmatpush.bf16.xpose.msra.mxu0 %v361
        %376 = vmatpush.bf16.xpose.msra.mxu0 %v358
        %377 = vmatmul.bf16.gmra.mxu0 %v346
        %v378 = vpop.f32.mrf.mxu0
        %v379 = vadd.f32 0.0, %v378
        %v380 = vpop.f32.mrf.mxu0
        %v381 = vadd.f32 0.0, %v380
        %382 = vmatmul.bf16.gmra.mxu0 %v349
        %v383 = vpop.f32.mrf.mxu0
        %v384 = vadd.f32 0.0, %v383
        %v385 = vpop.f32.mrf.mxu0
        %v386 = vadd.f32 0.0, %v385
        %387 = vmatmul.bf16.gmra.mxu0 %v352
        %v388 = vpop.f32.mrf.mxu0
        %v389 = vadd.f32 0.0, %v388
        %v390 = vpop.f32.mrf.mxu0
        %v391 = vadd.f32 0.0, %v390
        %392 = vmatmul.bf16.gmra.mxu0 %v355
        %v393 = vpop.f32.mrf.mxu0
        %v394 = vadd.f32 0.0, %v393
        %v395 = vpop.f32.mrf.mxu0
        %v396 = vadd.f32 0.0, %v395
        %397 = vdwg.mxu0
        %vm398 = vcmask 523264
        %v399 = vsel %vm398, %v379, -inf
        %400 = vmax.xlane.f32.xlu0 %v399
        %v401 = vpop.xlane.xlu0 %400
        %v402 = vsel %vm398, %v381, -inf
        %403 = vmax.xlane.f32.xlu0 %v402
        %v404 = vpop.xlane.xlu0 %403
        %v405 = vsel %vm398, %v384, -inf
        %406 = vmax.xlane.f32.xlu0 %v405
        %v407 = vpop.xlane.xlu0 %406
        %v408 = vsel %vm398, %v386, -inf
        %409 = vmax.xlane.f32.xlu0 %v408
        %v410 = vpop.xlane.xlu0 %409
        %v411 = vsel %vm398, %v389, -inf
        %412 = vmax.xlane.f32.xlu0 %v411
        %v413 = vpop.xlane.xlu0 %412
        %v414 = vsel %vm398, %v391, -inf
        %415 = vmax.xlane.f32.xlu0 %v414
        %v416 = vpop.xlane.xlu0 %415
        %v417 = vsel %vm398, %v394, -inf
        %418 = vmax.xlane.f32.xlu0 %v417
        %v419 = vpop.xlane.xlu0 %418
        %v420 = vsel %vm398, %v396, -inf
        %421 = vmax.xlane.f32.xlu0 %v420
        %v422 = vpop.xlane.xlu0 %421
        %v423 = vsub.f32 %v379, %v401
        %v424 = vsub.f32 %v381, %v404
        %v425 = vsub.f32 %v384, %v407
        %v426 = vsub.f32 %v386, %v410
        %v427 = vsub.f32 %v389, %v413
        %v428 = vsub.f32 %v391, %v416
        %v429 = vsub.f32 %v394, %v419
        %v430 = vsub.f32 %v396, %v422
        %v431 = vmul.f32 %v423, 1.442695
        %v432 = vpow.pop %v431
        %v433 = vmul.f32 %v424, 1.442695
        %v434 = vpow.pop %v433
        %v435 = vmul.f32 %v425, 1.442695
        %v436 = vpow.pop %v435
        %v437 = vmul.f32 %v426, 1.442695
        %v438 = vpow.pop %v437
        %v439 = vmul.f32 %v427, 1.442695
        %v440 = vpow.pop %v439
        %v441 = vmul.f32 %v428, 1.442695
        %v442 = vpow.pop %v441
        %v443 = vmul.f32 %v429, 1.442695
        %v444 = vpow.pop %v443
        %v445 = vmul.f32 %v430, 1.442695
        %v446 = vpow.pop %v445
        %v447 = vsel %vm398, %v432, 0.0
        %448 = vadd.xlane.f32.xlu0 %v447
        %v449 = vpop.xlane.xlu0 %448
        %v450 = vsel %vm398, %v434, 0.0
        %451 = vadd.xlane.f32.xlu0 %v450
        %v452 = vpop.xlane.xlu0 %451
        %v453 = vsel %vm398, %v436, 0.0
        %454 = vadd.xlane.f32.xlu0 %v453
        %v455 = vpop.xlane.xlu0 %454
        %v456 = vsel %vm398, %v438, 0.0
        %457 = vadd.xlane.f32.xlu0 %v456
        %v458 = vpop.xlane.xlu0 %457
        %v459 = vsel %vm398, %v440, 0.0
        %460 = vadd.xlane.f32.xlu0 %v459
        %v461 = vpop.xlane.xlu0 %460
        %v462 = vsel %vm398, %v442, 0.0
        %463 = vadd.xlane.f32.xlu0 %v462
        %v464 = vpop.xlane.xlu0 %463
        %v465 = vsel %vm398, %v444, 0.0
        %466 = vadd.xlane.f32.xlu0 %v465
        %v467 = vpop.xlane.xlu0 %466
        %v468 = vsel %vm398, %v446, 0.0
        %469 = vadd.xlane.f32.xlu0 %v468
        %v470 = vpop.xlane.xlu0 %469
        %v471 = vrcp.pop %v449
        %v472 = vrcp.pop %v452
        %v473 = vrcp.pop %v455
        %v474 = vrcp.pop %v458
        %v475 = vrcp.pop %v461
        %v476 = vrcp.pop %v464
        %v477 = vrcp.pop %v467
        %v478 = vrcp.pop %v470
        %v479 = vmul.f32 %v432, %v471
        %v480 = vmul.f32 %v434, %v472
        %v481 = vmul.f32 %v436, %v473
        %v482 = vmul.f32 %v438, %v474
        %v483 = vmul.f32 %v440, %v475
        %v484 = vmul.f32 %v442, %v476
        %v485 = vmul.f32 %v444, %v477
        %v486 = vmul.f32 %v446, %v478
        %487 = vst.msk [vmem:[%s226] sm:$0xff] %vm398, %v479
        %488 = vst.msk [vmem:[%s226 + $0x8] sm:$0xff] %vm398, %v480
        %489 = vst.msk [vmem:[%s226 + $0x10] sm:$0xff] %vm398, %v481
        %490 = vst.msk [vmem:[%s226 + $0x18] sm:$0xff] %vm398, %v482
        %491 = vst.msk [vmem:[%s226 + $0x20] sm:$0xff] %vm398, %v483
        %492 = vst.msk [vmem:[%s226 + $0x28] sm:$0xff] %vm398, %v484
        %493 = vst.msk [vmem:[%s226 + $0x30] sm:$0xff] %vm398, %v485
        %494 = vst.msk [vmem:[%s226 + $0x38] sm:$0xff] %vm398, %v486
        %v495 = vpack.c.bf16 %v480, %v479
        %v496 = vpack.c.bf16 %v482, %v481
        %v497 = vpack.c.bf16 %v484, %v483
        %v498 = vpack.c.bf16 %v486, %v485
        %499 = vrot.lane.b32.xlu0 %v328, 120
        %v500 = vpop.permute.xlu0 %499
        %501 = vrot.lane.b32.xlu0 %v329, 120
        %v502 = vpop.permute.xlu0 %501
        %503 = vrot.lane.b32.xlu0 %v330, 120
        %v504 = vpop.permute.xlu0 %503
        %505 = vrot.lane.b32.xlu0 %v331, 120
        %v506 = vpop.permute.xlu0 %505
        %v512 = vsel %vm398, %v495, 0
        %v515 = vsel %vm398, %v496, 0
        %v518 = vsel %vm398, %v497, 0
        %v521 = vsel %vm398, %v498, 0
        %523 = vmatpush.bf16.msra.mxu0 0
        %524 = vmatpush.bf16.msra.mxu0 0
        %525 = vmatpush.bf16.msra.mxu0 0
        %526 = vmatpush.bf16.msra.mxu0 0
        %527 = vmatpush.bf16.msra.mxu0 %v506
        %528 = vmatpush.bf16.msra.mxu0 %v504
        %529 = vmatpush.bf16.msra.mxu0 %v502
        %530 = vmatpush.bf16.msra.mxu0 %v500
        %531 = vmatmul.bf16.gmra.mxu0 %v512
        %v532 = vpop.f32.mrf.mxu0
        %v533 = vadd.f32 0.0, %v532
        %v534 = vpop.f32.mrf.mxu0
        %v535 = vadd.f32 0.0, %v534
        %536 = vmatmul.bf16.gmra.mxu0 %v515
        %v537 = vpop.f32.mrf.mxu0
        %v538 = vadd.f32 0.0, %v537
        %v539 = vpop.f32.mrf.mxu0
        %v540 = vadd.f32 0.0, %v539
        %541 = vmatmul.bf16.gmra.mxu0 %v518
        %v542 = vpop.f32.mrf.mxu0
        %v543 = vadd.f32 0.0, %v542
        %v544 = vpop.f32.mrf.mxu0
        %v545 = vadd.f32 0.0, %v544
        %546 = vmatmul.bf16.gmra.mxu0 %v521
        %v547 = vpop.f32.mrf.mxu0
        %v548 = vadd.f32 0.0, %v547
        %v549 = vpop.f32.mrf.mxu0
        %v550 = vadd.f32 0.0, %v549
        %551 = vdwg.mxu0
        %v552 = vunpack.c.l.bf16 %v238
        %v553 = vunpack.c.l.bf16 %v239
        %v554 = vunpack.c.l.bf16 %v240
        %v555 = vunpack.c.l.bf16 %v241
        %v556 = vunpack.c.l.bf16 %v242
        %v557 = vunpack.c.l.bf16 %v243
        %v558 = vunpack.c.l.bf16 %v244
        %v559 = vunpack.c.l.bf16 %v245
        %s560 = sld [smem:[#allocation2]]
        %v561 = vstv %s560
        %v562 = vmul.f32 %v561, %v533
        %v563 = vmul.f32 %v561, %v535
        %v564 = vmul.f32 %v561, %v538
        %v565 = vmul.f32 %v561, %v540
        %v566 = vmul.f32 %v561, %v543
        %v567 = vmul.f32 %v561, %v545
        %v568 = vmul.f32 %v561, %v548
        %v569 = vmul.f32 %v561, %v550
        %v570 = vadd.f32 %v552, %v562
        %v571 = vadd.f32 %v553, %v563
        %v572 = vadd.f32 %v554, %v564
        %v573 = vadd.f32 %v555, %v565
        %v574 = vadd.f32 %v556, %v566
        %v575 = vadd.f32 %v557, %v567
        %v576 = vadd.f32 %v558, %v568
        %v577 = vadd.f32 %v559, %v569
        %v578 = vpack.c.bf16 %v570, %v570
        %v579 = vpack.c.bf16 %v571, %v571
        %v580 = vpack.c.bf16 %v572, %v572
        %v581 = vpack.c.bf16 %v573, %v573
        %v582 = vpack.c.bf16 %v574, %v574
        %v583 = vpack.c.bf16 %v575, %v575
        %v584 = vpack.c.bf16 %v576, %v576
        %v585 = vpack.c.bf16 %v577, %v577
        %vm586 = vcmask 257024
        %587 = vst.msk [vmem:[%s236] sm:$0xf] %vm586, %v578
        %588 = vst.msk [vmem:[%s236 + $0x4] sm:$0xf] %vm586, %v579
        %589 = vst.msk [vmem:[%s236 + $0x8] sm:$0xf] %vm586, %v580
        %590 = vst.msk [vmem:[%s236 + $0xc] sm:$0xf] %vm586, %v581
        %591 = vst.msk [vmem:[%s236 + $0x10] sm:$0xf] %vm586, %v582
        %592 = vst.msk [vmem:[%s236 + $0x14] sm:$0xf] %vm586, %v583
        %593 = vst.msk [vmem:[%s236 + $0x18] sm:$0xf] %vm586, %v584
        %594 = vst.msk [vmem:[%s236 + $0x1c] sm:$0xf] %vm586, %v585
        %p595 = scmp.lt.s32.totalorder %s21, 1
        %s596 = scalar_select %p595, %s21, 1
        %s597 = smul.addr %s596, 8
        %s598 = smul.addr %s597, 4
        %s599 = scalar_lea.vmem %s4, %s598
        %s600 = sand.u32 %s144, 1
        %s601 = scalar_lea.sflag [#allocation4], %s600
        %s602 = sand.u32 %s144, 1
        %s603 = smul.addr %s602, 64
        %s604 = scalar_lea.vmem [#allocation3], %s603
        // Predicated region
        $region37: #{discriminator_forward.9} parent=35 // pred_check
          %p605 = pneg %p128
        $region38: #{discriminator_forward.9} parent=35 // pred_check_branch
          %607 = sbr.rel (%p605) target = $region40
        $region39: #{discriminator_forward.9} parent=35 // pred_region
          _
        $region40: #{discriminator_forward.9} parent=35 // pred_fallthru
          _
        // Predicated region
        $region41: #{discriminator_forward.9} parent=35 // pred_check
          %p608 = pneg %p154
        $region42: #{discriminator_forward.9} parent=35 // pred_check_branch
          %610 = sbr.rel (%p608) target = $region44
        $region43: #{discriminator_forward.9} parent=35 // pred_region
          %612 = vsyncadd %s601, 0
          %s613 = smul.addr %s21, 8
          %s614 = smul.addr %s613, 8
          %s615 = scalar_lea.hbm %s5, %s614
          %s616 = sshll.u32 %s604, 4
          %s617 = int_to_ptr.vmem [resolvable:$true] %s616
          %s618 = sshll.u32 %s615, 4
          %s619 = int_to_ptr.hbm [resolvable:$true] %s618
          %624 = dma.vmem_to_hbm [thread:$0]  %s617, 1024, %s619, %s601, 128, 128, 8
        $region44: #{discriminator_forward.9} parent=35 // pred_fallthru
          _
      $region36: #{discriminator_forward.9} parent=5 // pred_fallthru
        _
      %p625 = scmp.le.s32.totalorder 2, %s16
      // Predicated region
      $region45: #{discriminator_forward.9} parent=5 // pred_check
        %p626 = pneg %p625
      $region46: #{discriminator_forward.9} parent=5 // pred_check_branch
        %628 = sbr.rel (%p626) target = $region48
      $region47: #{discriminator_forward.9} parent=5 // pred_region
        %s629 = ssub.s32 %s16, 2
        // Predicated region
        $region49: #{discriminator_forward.9} parent=47 // pred_check
          %p630 = pneg %p134
        $region50: #{discriminator_forward.9} parent=47 // pred_check_branch
          %632 = sbr.rel (%p630) target = $region52
        $region51: #{discriminator_forward.9} parent=47 // pred_region
          %p633 = scmp.lt.s32.totalorder %s22, 1
          %s634 = scalar_select %p633, %s22, 1
          %s635 = smul.addr %s634, 8
          %s636 = smul.addr %s635, 4
          %s637 = scalar_lea.vmem %s4, %s636
        $region52: #{discriminator_forward.9} parent=47 // pred_fallthru
          _
        // Predicated region
        $region53: #{discriminator_forward.9} parent=47 // pred_check
          %p638 = pneg %p160
        $region54: #{discriminator_forward.9} parent=47 // pred_check_branch
          %640 = sbr.rel (%p638) target = $region56
        $region55: #{discriminator_forward.9} parent=47 // pred_region
          %s641 = sand.u32 %s145, 1
          %s642 = scalar_lea.sflag [#allocation4], %s641
          %s643 = sand.u32 %s145, 1
          %s644 = smul.addr %s643, 64
          %s645 = scalar_lea.vmem [#allocation3], %s644
          %647 = dma.done %s642, 1024
        $region56: #{discriminator_forward.9} parent=47 // pred_fallthru
          _
      $region48: #{discriminator_forward.9} parent=5 // pred_fallthru
        _
    $region6: #{discriminator_forward.9} parent=1 // loop_footer
      %s20 = sadd.s32 1, %s16
    $region7: #{discriminator_forward.9} parent=1 // loop_footer_branch
      %15 = sbr.rel target = $region3
    $region8: #{discriminator_forward.9} parent=1 // loop_exit
      _
    %648 = vsyncpa [#allocation4], 1
    %s649 = scalar_lea.sflag [#allocation4], 1
    %650 = vsyncpa %s649, 1

// kernel: discriminator_forward.10
$region0: #{discriminator_forward.10}
  #allocation0 [shape = 'u32[]', space=smem, size = 0x4, offset = 0x4, fixed_abs, tag = 'smem constant byte address 0x4 - core index']
  #allocation1 [shape = 'u32[72,128]{1,0:T(1,128)}', space=vmem, size = 0x9000, scoped, tag = 'internal scratch']
  %s0 = inlined_call_operand.vmem [shape: bf16[32,512], index: 0, kind: input, shape index: {}]
  %s1 = inlined_call_operand.vmem [shape: bf16[512,64], index: 1, kind: input, shape index: {}]
  %s2 = inlined_call_operand.vmem [shape: f32[1,64], index: 2, kind: input, shape index: {}]
  %s3 = inlined_call_operand.vmem [shape: bf16[32,64], index: 3, kind: output, shape index: {}]
  %s4 = sld [smem:[#allocation0]]
  $region22: #{discriminator_forward.10} parent=0
    _
  %s6 = ssub.s32 1, %s4
  %s7 = scalar_select 0, %s6, %s4
  // Predicated region
  $region2: #{discriminator_forward.10} parent=0 // pred_check
    _
  $region3: #{discriminator_forward.10} parent=0 // pred_check_branch
    %9 = sbr.rel (0) target = $region5
  $region4: #{discriminator_forward.10} parent=0 // pred_region
    _
  $region5: #{discriminator_forward.10} parent=0 // pred_fallthru
    _
  // Predicated region
  $region6: #{discriminator_forward.10} parent=0 // pred_check
    _
  $region7: #{discriminator_forward.10} parent=0 // pred_check_branch
    %11 = sbr.rel (0) target = $region9
  $region8: #{discriminator_forward.10} parent=0 // pred_region
    _
  $region9: #{discriminator_forward.10} parent=0 // pred_fallthru
    _
  // Predicated region
  $region10: #{discriminator_forward.10} parent=0 // pred_check
    _
  $region11: #{discriminator_forward.10} parent=0 // pred_check_branch
    %13 = sbr.rel (0) target = $region13
  $region12: #{discriminator_forward.10} parent=0 // pred_region
    _
  $region13: #{discriminator_forward.10} parent=0 // pred_fallthru
    _
  %v14 = vld [vmem:[%s0] sm:$0xff]
  %v15 = vld [vmem:[%s0 + $0x8] sm:$0xff]
  %v16 = vld [vmem:[%s0 + $0x10] sm:$0xff]
  %v17 = vld [vmem:[%s0 + $0x18] sm:$0xff]
  %v18 = vld [vmem:[%s0 + $0x20] sm:$0xff]
  %v19 = vld [vmem:[%s0 + $0x28] sm:$0xff]
  %v20 = vld [vmem:[%s0 + $0x30] sm:$0xff]
  %v21 = vld [vmem:[%s0 + $0x38] sm:$0xff]
  %v22 = vld [vmem:[%s1] sm:$0xf]
  %v23 = vld [vmem:[%s1 + $0x4] sm:$0xf]
  %v24 = vld [vmem:[%s1 + $0x8] sm:$0xf]
  %v25 = vld [vmem:[%s1 + $0xc] sm:$0xf]
  %v26 = vld [vmem:[%s1 + $0x10] sm:$0xf]
  %v27 = vld [vmem:[%s1 + $0x14] sm:$0xf]
  %v28 = vld [vmem:[%s1 + $0x18] sm:$0xf]
  %v29 = vld [vmem:[%s1 + $0x1c] sm:$0xf]
  %v30 = vld [vmem:[%s1 + $0x20] sm:$0xf]
  %v31 = vld [vmem:[%s1 + $0x24] sm:$0xf]
  %v32 = vld [vmem:[%s1 + $0x28] sm:$0xf]
  %v33 = vld [vmem:[%s1 + $0x2c] sm:$0xf]
  %v34 = vld [vmem:[%s1 + $0x30] sm:$0xf]
  %v35 = vld [vmem:[%s1 + $0x34] sm:$0xf]
  %v36 = vld [vmem:[%s1 + $0x38] sm:$0xf]
  %v37 = vld [vmem:[%s1 + $0x3c] sm:$0xf]
  %v38 = vld [vmem:[%s1 + $0x40] sm:$0xf]
  %v39 = vld [vmem:[%s1 + $0x44] sm:$0xf]
  %v40 = vld [vmem:[%s1 + $0x48] sm:$0xf]
  %v41 = vld [vmem:[%s1 + $0x4c] sm:$0xf]
  %v42 = vld [vmem:[%s1 + $0x50] sm:$0xf]
  %v43 = vld [vmem:[%s1 + $0x54] sm:$0xf]
  %v44 = vld [vmem:[%s1 + $0x58] sm:$0xf]
  %v45 = vld [vmem:[%s1 + $0x5c] sm:$0xf]
  %v46 = vld [vmem:[%s1 + $0x60] sm:$0xf]
  %v47 = vld [vmem:[%s1 + $0x64] sm:$0xf]
  %v48 = vld [vmem:[%s1 + $0x68] sm:$0xf]
  %v49 = vld [vmem:[%s1 + $0x6c] sm:$0xf]
  %v50 = vld [vmem:[%s1 + $0x70] sm:$0xf]
  %v51 = vld [vmem:[%s1 + $0x74] sm:$0xf]
  %v52 = vld [vmem:[%s1 + $0x78] sm:$0xf]
  %v53 = vld [vmem:[%s1 + $0x7c] sm:$0xf]
  %v54 = vld [vmem:[%s1 + $0x80] sm:$0xf]
  %v55 = vld [vmem:[%s1 + $0x84] sm:$0xf]
  %v56 = vld [vmem:[%s1 + $0x88] sm:$0xf]
  %v57 = vld [vmem:[%s1 + $0x8c] sm:$0xf]
  %v58 = vld [vmem:[%s1 + $0x90] sm:$0xf]
  %v59 = vld [vmem:[%s1 + $0x94] sm:$0xf]
  %v60 = vld [vmem:[%s1 + $0x98] sm:$0xf]
  %v61 = vld [vmem:[%s1 + $0x9c] sm:$0xf]
  %v62 = vld [vmem:[%s1 + $0xa0] sm:$0xf]
  %v63 = vld [vmem:[%s1 + $0xa4] sm:$0xf]
  %v64 = vld [vmem:[%s1 + $0xa8] sm:$0xf]
  %v65 = vld [vmem:[%s1 + $0xac] sm:$0xf]
  %v66 = vld [vmem:[%s1 + $0xb0] sm:$0xf]
  %v67 = vld [vmem:[%s1 + $0xb4] sm:$0xf]
  %v68 = vld [vmem:[%s1 + $0xb8] sm:$0xf]
  %v69 = vld [vmem:[%s1 + $0xbc] sm:$0xf]
  %v70 = vld [vmem:[%s1 + $0xc0] sm:$0xf]
  %v71 = vld [vmem:[%s1 + $0xc4] sm:$0xf]
  %v72 = vld [vmem:[%s1 + $0xc8] sm:$0xf]
  %v73 = vld [vmem:[%s1 + $0xcc] sm:$0xf]
  %v74 = vld [vmem:[%s1 + $0xd0] sm:$0xf]
  %v75 = vld [vmem:[%s1 + $0xd4] sm:$0xf]
  %v76 = vld [vmem:[%s1 + $0xd8] sm:$0xf]
  %v77 = vld [vmem:[%s1 + $0xdc] sm:$0xf]
  %v78 = vld [vmem:[%s1 + $0xe0] sm:$0xf]
  %v79 = vld [vmem:[%s1 + $0xe4] sm:$0xf]
  %v80 = vld [vmem:[%s1 + $0xe8] sm:$0xf]
  %v81 = vld [vmem:[%s1 + $0xec] sm:$0xf]
  %v82 = vld [vmem:[%s1 + $0xf0] sm:$0xf]
  %v83 = vld [vmem:[%s1 + $0xf4] sm:$0xf]
  %v84 = vld [vmem:[%s1 + $0xf8] sm:$0xf]
  %v85 = vld [vmem:[%s1 + $0xfc] sm:$0xf]
  %v86 = vld [vmem:[%s2] sm:$0x1]
  %v88 = vperm.slane %v86, 0
  %v98 = vunpack.c.l.b16 %v14
  %v99 = vunpack.c.h.b16 %v14
  %v100 = vunpack.c.l.b16 %v15
  %v101 = vunpack.c.h.b16 %v15
  %v102 = vunpack.c.l.b16 %v16
  %v103 = vunpack.c.h.b16 %v16
  %v104 = vunpack.c.l.b16 %v17
  %v105 = vunpack.c.h.b16 %v17
  %v106 = vunpack.c.l.b16 %v18
  %v107 = vunpack.c.h.b16 %v18
  %v108 = vunpack.c.l.b16 %v19
  %v109 = vunpack.c.h.b16 %v19
  %v110 = vunpack.c.l.b16 %v20
  %v111 = vunpack.c.h.b16 %v20
  %v112 = vunpack.c.l.b16 %v21
  %v113 = vunpack.c.h.b16 %v21
  %v114 = vpack.c.b16 %v102, %v98
  %v115 = vpack.c.b16 %v103, %v99
  %v116 = vpack.c.b16 %v104, %v100
  %v117 = vpack.c.b16 %v105, %v101
  %v118 = vpack.c.b16 %v110, %v106
  %v119 = vpack.c.b16 %v111, %v107
  %v120 = vpack.c.b16 %v112, %v108
  %v121 = vpack.c.b16 %v113, %v109
  %v194 = vunpack.c.l.b16 %v22
  %v195 = vunpack.c.l.b16 %v23
  %v196 = vunpack.c.l.b16 %v24
  %v197 = vunpack.c.l.b16 %v25
  %v198 = vunpack.c.l.b16 %v26
  %v199 = vunpack.c.l.b16 %v27
  %v200 = vunpack.c.l.b16 %v28
  %v201 = vunpack.c.l.b16 %v29
  %v202 = vunpack.c.l.b16 %v30
  %v203 = vunpack.c.l.b16 %v31
  %v204 = vunpack.c.l.b16 %v32
  %v205 = vunpack.c.l.b16 %v33
  %v206 = vunpack.c.l.b16 %v34
  %v207 = vunpack.c.l.b16 %v35
  %v208 = vunpack.c.l.b16 %v36
  %v209 = vunpack.c.l.b16 %v37
  %v210 = vunpack.c.l.b16 %v38
  %v211 = vunpack.c.l.b16 %v39
  %v212 = vunpack.c.l.b16 %v40
  %v213 = vunpack.c.l.b16 %v41
  %v214 = vunpack.c.l.b16 %v42
  %v215 = vunpack.c.l.b16 %v43
  %v216 = vunpack.c.l.b16 %v44
  %v217 = vunpack.c.l.b16 %v45
  %v218 = vunpack.c.l.b16 %v46
  %v219 = vunpack.c.l.b16 %v47
  %v220 = vunpack.c.l.b16 %v48
  %v221 = vunpack.c.l.b16 %v49
  %v222 = vunpack.c.l.b16 %v50
  %v223 = vunpack.c.l.b16 %v51
  %v224 = vunpack.c.l.b16 %v52
  %v225 = vunpack.c.l.b16 %v53
  %v226 = vunpack.c.l.b16 %v54
  %v227 = vunpack.c.l.b16 %v55
  %v228 = vunpack.c.l.b16 %v56
  %v229 = vunpack.c.l.b16 %v57
  %v230 = vunpack.c.l.b16 %v58
  %v231 = vunpack.c.l.b16 %v59
  %v232 = vunpack.c.l.b16 %v60
  %v233 = vunpack.c.l.b16 %v61
  %v234 = vunpack.c.l.b16 %v62
  %v235 = vunpack.c.l.b16 %v63
  %v236 = vunpack.c.l.b16 %v64
  %v237 = vunpack.c.l.b16 %v65
  %v238 = vunpack.c.l.b16 %v66
  %v239 = vunpack.c.l.b16 %v67
  %v240 = vunpack.c.l.b16 %v68
  %v241 = vunpack.c.l.b16 %v69
  %v242 = vunpack.c.l.b16 %v70
  %v243 = vunpack.c.l.b16 %v71
  %v244 = vunpack.c.l.b16 %v72
  %v245 = vunpack.c.l.b16 %v73
  %v246 = vunpack.c.l.b16 %v74
  %v247 = vunpack.c.l.b16 %v75
  %v248 = vunpack.c.l.b16 %v76
  %v249 = vunpack.c.l.b16 %v77
  %v250 = vunpack.c.l.b16 %v78
  %v251 = vunpack.c.l.b16 %v79
  %v252 = vunpack.c.l.b16 %v80
  %v253 = vunpack.c.l.b16 %v81
  %v254 = vunpack.c.l.b16 %v82
  %v255 = vunpack.c.l.b16 %v83
  %v256 = vunpack.c.l.b16 %v84
  %v257 = vunpack.c.l.b16 %v85
  %v258 = vpack.c.b16 %v195, %v194
  %v259 = vpack.c.b16 %v197, %v196
  %v260 = vpack.c.b16 %v199, %v198
  %v261 = vpack.c.b16 %v201, %v200
  %v262 = vpack.c.b16 %v203, %v202
  %v263 = vpack.c.b16 %v205, %v204
  %v264 = vpack.c.b16 %v207, %v206
  %v265 = vpack.c.b16 %v209, %v208
  %v266 = vpack.c.b16 %v211, %v210
  %v267 = vpack.c.b16 %v213, %v212
  %v268 = vpack.c.b16 %v215, %v214
  %v269 = vpack.c.b16 %v217, %v216
  %v270 = vpack.c.b16 %v219, %v218
  %v271 = vpack.c.b16 %v221, %v220
  %v272 = vpack.c.b16 %v223, %v222
  %v273 = vpack.c.b16 %v225, %v224
  %v274 = vpack.c.b16 %v227, %v226
  %v275 = vpack.c.b16 %v229, %v228
  %v276 = vpack.c.b16 %v231, %v230
  %v277 = vpack.c.b16 %v233, %v232
  %v278 = vpack.c.b16 %v235, %v234
  %v279 = vpack.c.b16 %v237, %v236
  %v280 = vpack.c.b16 %v239, %v238
  %v281 = vpack.c.b16 %v241, %v240
  %v282 = vpack.c.b16 %v243, %v242
  %v283 = vpack.c.b16 %v245, %v244
  %v284 = vpack.c.b16 %v247, %v246
  %v285 = vpack.c.b16 %v249, %v248
  %v286 = vpack.c.b16 %v251, %v250
  %v287 = vpack.c.b16 %v253, %v252
  %v288 = vpack.c.b16 %v255, %v254
  %v289 = vpack.c.b16 %v257, %v256
  %322 = vmatpush.bf16.msra.mxu0 %v265
  %323 = vmatpush.bf16.msra.mxu0 %v264
  %324 = vmatpush.bf16.msra.mxu0 %v263
  %325 = vmatpush.bf16.msra.mxu0 %v262
  %326 = vmatpush.bf16.msra.mxu0 %v261
  %327 = vmatpush.bf16.msra.mxu0 %v260
  %328 = vmatpush.bf16.msra.mxu0 %v259
  %329 = vmatpush.bf16.msra.mxu0 %v258
  %330 = vmatmul.bf16.gmra.mxu0 %v114
  %v331 = vpop.f32.mrf.mxu0
  %v332 = vadd.f32 %v88, %v331
  %v333 = vpop.f32.mrf.mxu0
  %v334 = vadd.f32 %v88, %v333
  %335 = vmatmul.bf16.gmra.mxu0 %v118
  %v336 = vpop.f32.mrf.mxu0
  %v337 = vadd.f32 %v88, %v336
  %v338 = vpop.f32.mrf.mxu0
  %v339 = vadd.f32 %v88, %v338
  %340 = vdwg.mxu0
  %341 = vmatpush.bf16.msra.mxu0 %v273
  %342 = vmatpush.bf16.msra.mxu0 %v272
  %343 = vmatpush.bf16.msra.mxu0 %v271
  %344 = vmatpush.bf16.msra.mxu0 %v270
  %345 = vmatpush.bf16.msra.mxu0 %v269
  %346 = vmatpush.bf16.msra.mxu0 %v268
  %347 = vmatpush.bf16.msra.mxu0 %v267
  %348 = vmatpush.bf16.msra.mxu0 %v266
  %349 = vmatmul.bf16.gmra.mxu0 %v115
  %v350 = vpop.f32.mrf.mxu0
  %v351 = vadd.f32 %v332, %v350
  %v352 = vpop.f32.mrf.mxu0
  %v353 = vadd.f32 %v334, %v352
  %354 = vmatmul.bf16.gmra.mxu0 %v119
  %v355 = vpop.f32.mrf.mxu0
  %v356 = vadd.f32 %v337, %v355
  %v357 = vpop.f32.mrf.mxu0
  %v358 = vadd.f32 %v339, %v357
  %359 = vdwg.mxu0
  %360 = vmatpush.bf16.msra.mxu0 %v281
  %361 = vmatpush.bf16.msra.mxu0 %v280
  %362 = vmatpush.bf16.msra.mxu0 %v279
  %363 = vmatpush.bf16.msra.mxu0 %v278
  %364 = vmatpush.bf16.msra.mxu0 %v277
  %365 = vmatpush.bf16.msra.mxu0 %v276
  %366 = vmatpush.bf16.msra.mxu0 %v275
  %367 = vmatpush.bf16.msra.mxu0 %v274
  %368 = vmatmul.bf16.gmra.mxu0 %v116
  %v369 = vpop.f32.mrf.mxu0
  %v370 = vadd.f32 %v351, %v369
  %v371 = vpop.f32.mrf.mxu0
  %v372 = vadd.f32 %v353, %v371
  %373 = vmatmul.bf16.gmra.mxu0 %v120
  %v374 = vpop.f32.mrf.mxu0
  %v375 = vadd.f32 %v356, %v374
  %v376 = vpop.f32.mrf.mxu0
  %v377 = vadd.f32 %v358, %v376
  %378 = vdwg.mxu0
  %379 = vmatpush.bf16.msra.mxu0 %v289
  %380 = vmatpush.bf16.msra.mxu0 %v288
  %381 = vmatpush.bf16.msra.mxu0 %v287
  %382 = vmatpush.bf16.msra.mxu0 %v286
  %383 = vmatpush.bf16.msra.mxu0 %v285
  %384 = vmatpush.bf16.msra.mxu0 %v284
  %385 = vmatpush.bf16.msra.mxu0 %v283
  %386 = vmatpush.bf16.msra.mxu0 %v282
  %387 = vmatmul.bf16.gmra.mxu0 %v117
  %v388 = vpop.f32.mrf.mxu0
  %v389 = vadd.f32 %v370, %v388
  %v390 = vpop.f32.mrf.mxu0
  %v391 = vadd.f32 %v372, %v390
  %392 = vmatmul.bf16.gmra.mxu0 %v121
  %v393 = vpop.f32.mrf.mxu0
  %v394 = vadd.f32 %v375, %v393
  %v395 = vpop.f32.mrf.mxu0
  %v396 = vadd.f32 %v377, %v395
  %397 = vdwg.mxu0
  %vm398 = vcmp.ge.f32.partialorder %v389, 0.0
  %vm399 = vcmp.ge.f32.partialorder %v391, 0.0
  %vm400 = vcmp.ge.f32.partialorder %v394, 0.0
  %vm401 = vcmp.ge.f32.partialorder %v396, 0.0
  %v402 = vmul.f32 %v389, 0.1
  %v403 = vmul.f32 %v391, 0.1
  %v404 = vmul.f32 %v394, 0.1
  %v405 = vmul.f32 %v396, 0.1
  %v406 = vsel %vm398, %v389, %v402
  %v407 = vsel %vm399, %v391, %v403
  %v408 = vsel %vm400, %v394, %v404
  %v409 = vsel %vm401, %v396, %v405
  %v410 = vpack.c.bf16 %v406, %v406
  %v411 = vpack.c.bf16 %v407, %v407
  %v412 = vpack.c.bf16 %v408, %v408
  %v413 = vpack.c.bf16 %v409, %v409
  %vm414 = vcmask 519168
  %415 = vst.msk [vmem:[%s3] sm:$0xf] %vm414, %v410
  %416 = vst.msk [vmem:[%s3 + $0x4] sm:$0xf] %vm414, %v411
  %417 = vst.msk [vmem:[%s3 + $0x8] sm:$0xf] %vm414, %v412
  %418 = vst.msk [vmem:[%s3 + $0xc] sm:$0xf] %vm414, %v413
  // Predicated region
  $region14: #{discriminator_forward.10} parent=0 // pred_check
    _
  $region15: #{discriminator_forward.10} parent=0 // pred_check_branch
    %420 = sbr.rel (0) target = $region17
  $region16: #{discriminator_forward.10} parent=0 // pred_region
    _
  $region17: #{discriminator_forward.10} parent=0 // pred_fallthru
    _
  // Predicated region
  $region18: #{discriminator_forward.10} parent=0 // pred_check
    _
  $region19: #{discriminator_forward.10} parent=0 // pred_check_branch
    %422 = sbr.rel (0) target = $region21
  $region20: #{discriminator_forward.10} parent=0 // pred_region
    _
  $region21: #{discriminator_forward.10} parent=0 // pred_fallthru
    _

// kernel: discriminator_forward.11
$region0: #{discriminator_forward.11}
  #allocation0 [shape = 'u32[]', space=smem, size = 0x4, offset = 0x4, fixed_abs, tag = 'smem constant byte address 0x4 - core index']
  #allocation1 [shape = 'u32[72,128]{1,0:T(1,128)}', space=vmem, size = 0x9000, scoped, tag = 'internal scratch']
  #allocation2 [shape = 'f32[1]{0:T(128)S(6)}', space=smem, size = 0x200, scoped, tag = 'scoped memory for discriminator_forward.11']
  #allocation3 [shape = 'f32[1]{0:T(128)S(6)}', space=smem, size = 0x200, scoped, tag = 'scoped memory for discriminator_forward.11']
  %s0 = inlined_call_operand.vmem [shape: bf16[2,16,64], index: 0, kind: input, shape index: {}]
  %s1 = inlined_call_operand.vmem [shape: bf16[64,80], index: 1, kind: input, shape index: {}]
  %s2 = inlined_call_operand.vmem [shape: f32[1,80], index: 2, kind: input, shape index: {}]
  %s3 = inlined_call_operand.<no memory space> [shape: f32[1], index: 3, kind: input, shape index: {}]
  %s4 = inlined_call_operand.vmem [shape: bf16[16,64], index: 4, kind: input, shape index: {}]
  %s5 = inlined_call_operand.<no memory space> [shape: f32[1], index: 5, kind: input, shape index: {}]
  %s6 = inlined_call_operand.vmem [shape: f32[2,1,1], index: 6, kind: output, shape index: {0}]
  %s7 = inlined_call_operand.hbm [shape: f32[2,16,16], index: 7, kind: output, shape index: {1}]
  %8 = xla_tuple %s6, %s7
  %s9 = sld [smem:[#allocation0]]
  $region65: #{discriminator_forward.11} parent=0
    _
  %s11 = ssub.s32 1, %s9
  %s12 = scalar_select 0, %s11, %s9
  %13 = sst [smem:[#allocation2]] %s3
  %14 = sst [smem:[#allocation3]] %s5
  $region1: #{discriminator_forward.11} parent=0
    #allocation4 [shape = 'u8[16384]{0}', space=vmem, size = 0x4000, scoped, tag = 'output window, operand 1']
    #allocation5 [shape = 's32[2]{0}', space=sflag, size = 0x8, scoped, tag = 'scoped memory for discriminator_forward.11']
    %15 = vsyncpa [#allocation5], 0
    %s16 = scalar_lea.sflag [#allocation5], 1
    %17 = vsyncpa %s16, 0
    loop: start=0, step=1, limit=4
    $region2: #{discriminator_forward.11} parent=1 // loop_pre_header
      _
    $region3: #{discriminator_forward.11} parent=1 // loop_header
      %s19 = sphi 0, %s23
      %p20 = scmp.ge.s32.totalorder %s19, 4
      %s29 = sphi 0, %s31
      %s32 = sphi 0, %s29
      %s33 = sphi 0, %s32
      %s49 = sphi 0, %s33
      %s53 = sphi 0, %s53
      %s55 = sphi 0, %s53
      %s56 = sphi 0, %s55
      %s70 = sphi 0, %s56
      %s74 = sphi 0, %s74
      %s76 = sphi 0, %s74
      %s77 = sphi 0, %s76
      %s91 = sphi 0, %s77
      %s95 = sphi 0, %s95
      %s97 = sphi 0, %s95
      %s98 = sphi 0, %s97
      %s112 = sphi 0, %s98
      %s116 = sphi 0, %s116
      %s118 = sphi 0, %s116
      %s119 = sphi 0, %s118
      %s133 = sphi 0, %s119
      %s137 = sphi 0, %s137
      %s139 = sphi 0, %s137
      %s140 = sphi 0, %s139
      %s154 = sphi 0, %s140
      %s160 = sphi 0, %s162
      %s163 = sphi 0, %s160
      %s164 = sphi 0, %s163
      %s180 = sphi 0, %s164
      %s186 = sphi 0, %s188
      %s189 = sphi 0, %s186
      %s190 = sphi 0, %s189
      %s206 = sphi 0, %s190
    $region4: #{discriminator_forward.11} parent=1 // loop_header_branch
      %22 = sbr.rel (%p20) target = $region8
    $region5: #{discriminator_forward.11} parent=1 // loop_body
      %s24 = ssub.s32 %s19, 1
      %s25 = ssub.s32 %s19, 2
      %s26 = sadd.s32 %s19, 1
      %s27 = ssub.s32 %s19, %s26
      %p28 = scmp.eq.s32.totalorder %s27, 0
      %s30 = sadd.s32 %s29, 1
      %s31 = scalar_select %p28, %s29, %s30
      %p34 = pneg %p28
      %p35 = scmp.eq.s32.totalorder %s19, 1
      %p36 = por %p34, %p35
      %p37 = scmp.ne.s32.totalorder %s29, %s32
      %p38 = scmp.eq.s32.totalorder %s19, 0
      %p39 = por %p37, %p38
      %p40 = scmp.ne.s32.totalorder %s29, %s32
      %p41 = scmp.eq.s32.totalorder %s24, 1
      %p42 = por %p40, %p41
      %p43 = scmp.ne.s32.totalorder %s32, %s33
      %p44 = scmp.eq.s32.totalorder %s24, 0
      %p45 = por %p43, %p44
      %p46 = scmp.ne.s32.totalorder %s32, %s33
      %p47 = scmp.eq.s32.totalorder %s25, 1
      %p48 = por %p46, %p47
      %p50 = scmp.ne.s32.totalorder %s33, %s49
      %p51 = scmp.eq.s32.totalorder %s25, 0
      %p52 = por %p50, %p51
      %s54 = sadd.s32 %s53, 1
      %p57 = scmp.eq.s32.totalorder %s19, 1
      %p58 = scmp.ne.s32.totalorder %s53, %s55
      %p59 = scmp.eq.s32.totalorder %s19, 0
      %p60 = por %p58, %p59
      %p61 = scmp.ne.s32.totalorder %s53, %s55
      %p62 = scmp.eq.s32.totalorder %s24, 1
      %p63 = por %p61, %p62
      %p64 = scmp.ne.s32.totalorder %s55, %s56
      %p65 = scmp.eq.s32.totalorder %s24, 0
      %p66 = por %p64, %p65
      %p67 = scmp.ne.s32.totalorder %s55, %s56
      %p68 = scmp.eq.s32.totalorder %s25, 1
      %p69 = por %p67, %p68
      %p71 = scmp.ne.s32.totalorder %s56, %s70
      %p72 = scmp.eq.s32.totalorder %s25, 0
      %p73 = por %p71, %p72
      %s75 = sadd.s32 %s74, 1
      %p78 = scmp.eq.s32.totalorder %s19, 1
      %p79 = scmp.ne.s32.totalorder %s74, %s76
      %p80 = scmp.eq.s32.totalorder %s19, 0
      %p81 = por %p79, %p80
      %p82 = scmp.ne.s32.totalorder %s74, %s76
      %p83 = scmp.eq.s32.totalorder %s24, 1
      %p84 = por %p82, %p83
      %p85 = scmp.ne.s32.totalorder %s76, %s77
      %p86 = scmp.eq.s32.totalorder %s24, 0
      %p87 = por %p85, %p86
      %p88 = scmp.ne.s32.totalorder %s76, %s77
      %p89 = scmp.eq.s32.totalorder %s25, 1
      %p90 = por %p88, %p89
      %p92 = scmp.ne.s32.totalorder %s77, %s91
      %p93 = scmp.eq.s32.totalorder %s25, 0
      %p94 = por %p92, %p93
      %s96 = sadd.s32 %s95, 1
      %p99 = scmp.eq.s32.totalorder %s19, 1
      %p100 = scmp.ne.s32.totalorder %s95, %s97
      %p101 = scmp.eq.s32.totalorder %s19, 0
      %p102 = por %p100, %p101
      %p103 = scmp.ne.s32.totalorder %s95, %s97
      %p104 = scmp.eq.s32.totalorder %s24, 1
      %p105 = por %p103, %p104
      %p106 = scmp.ne.s32.totalorder %s97, %s98
      %p107 = scmp.eq.s32.totalorder %s24, 0
      %p108 = por %p106, %p107
      %p109 = scmp.ne.s32.totalorder %s97, %s98
      %p110 = scmp.eq.s32.totalorder %s25, 1
      %p111 = por %p109, %p110
      %p113 = scmp.ne.s32.totalorder %s98, %s112
      %p114 = scmp.eq.s32.totalorder %s25, 0
      %p115 = por %p113, %p114
      %s117 = sadd.s32 %s116, 1
      %p120 = scmp.eq.s32.totalorder %s19, 1
      %p121 = scmp.ne.s32.totalorder %s116, %s118
      %p122 = scmp.eq.s32.totalorder %s19, 0
      %p123 = por %p121, %p122
      %p124 = scmp.ne.s32.totalorder %s116, %s118
      %p125 = scmp.eq.s32.totalorder %s24, 1
      %p126 = por %p124, %p125
      %p127 = scmp.ne.s32.totalorder %s118, %s119
      %p128 = scmp.eq.s32.totalorder %s24, 0
      %p129 = por %p127, %p128
      %p130 = scmp.ne.s32.totalorder %s118, %s119
      %p131 = scmp.eq.s32.totalorder %s25, 1
      %p132 = por %p130, %p131
      %p134 = scmp.ne.s32.totalorder %s119, %s133
      %p135 = scmp.eq.s32.totalorder %s25, 0
      %p136 = por %p134, %p135
      %s138 = sadd.s32 %s137, 1
      %p141 = scmp.eq.s32.totalorder %s19, 1
      %p142 = scmp.ne.s32.totalorder %s137, %s139
      %p143 = scmp.eq.s32.totalorder %s19, 0
      %p144 = por %p142, %p143
      %p145 = scmp.ne.s32.totalorder %s137, %s139
      %p146 = scmp.eq.s32.totalorder %s24, 1
      %p147 = por %p145, %p146
      %p148 = scmp.ne.s32.totalorder %s139, %s140
      %p149 = scmp.eq.s32.totalorder %s24, 0
      %p150 = por %p148, %p149
      %p151 = scmp.ne.s32.totalorder %s139, %s140
      %p152 = scmp.eq.s32.totalorder %s25, 1
      %p153 = por %p151, %p152
      %p155 = scmp.ne.s32.totalorder %s140, %s154
      %p156 = scmp.eq.s32.totalorder %s25, 0
      %p157 = por %p155, %p156
      %s158 = ssub.s32 %s19, %s26
      %p159 = scmp.eq.s32.totalorder %s158, 0
      %s161 = sadd.s32 %s160, 1
      %s162 = scalar_select %p159, %s160, %s161
      %p165 = pneg %p159
      %p166 = scmp.eq.s32.totalorder %s19, 1
      %p167 = por %p165, %p166
      %p168 = scmp.ne.s32.totalorder %s160, %s163
      %p169 = scmp.eq.s32.totalorder %s19, 0
      %p170 = por %p168, %p169
      %p171 = scmp.ne.s32.totalorder %s160, %s163
      %p172 = scmp.eq.s32.totalorder %s24, 1
      %p173 = por %p171, %p172
      %p174 = scmp.ne.s32.totalorder %s163, %s164
      %p175 = scmp.eq.s32.totalorder %s24, 0
      %p176 = por %p174, %p175
      %p177 = scmp.ne.s32.totalorder %s163, %s164
      %p178 = scmp.eq.s32.totalorder %s25, 1
      %p179 = por %p177, %p178
      %p181 = scmp.ne.s32.totalorder %s164, %s180
      %p182 = scmp.eq.s32.totalorder %s25, 0
      %p183 = por %p181, %p182
      %s184 = ssub.s32 %s19, %s26
      %p185 = scmp.eq.s32.totalorder %s184, 0
      %s187 = sadd.s32 %s186, 1
      %s188 = scalar_select %p185, %s186, %s187
      %p191 = pneg %p185
      %p192 = scmp.eq.s32.totalorder %s19, 1
      %p193 = por %p191, %p192
      %p194 = scmp.ne.s32.totalorder %s186, %s189
      %p195 = scmp.eq.s32.totalorder %s19, 0
      %p196 = por %p194, %p195
      %p197 = scmp.ne.s32.totalorder %s186, %s189
      %p198 = scmp.eq.s32.totalorder %s24, 1
      %p199 = por %p197, %p198
      %p200 = scmp.ne.s32.totalorder %s189, %s190
      %p201 = scmp.eq.s32.totalorder %s24, 0
      %p202 = por %p200, %p201
      %p203 = scmp.ne.s32.totalorder %s189, %s190
      %p204 = scmp.eq.s32.totalorder %s25, 1
      %p205 = por %p203, %p204
      %p207 = scmp.ne.s32.totalorder %s190, %s206
      %p208 = scmp.eq.s32.totalorder %s25, 0
      %p209 = por %p207, %p208
      %p210 = scmp.le.s32.totalorder 1, %s19
      %p211 = scmp.lt.s32.totalorder %s19, 3
      %p212 = pnand %p210, %p211
      %p213 = pneg %p212
      // Predicated region
      $region9: #{discriminator_forward.11} parent=5 // pred_check
        _
      $region10: #{discriminator_forward.11} parent=5 // pred_check_branch
        %215 = sbr.rel (%p212) target = $region12
      $region11: #{discriminator_forward.11} parent=5 // pred_region
        %s216 = ssub.s32 %s19, 1
        // Predicated region
        $region13: #{discriminator_forward.11} parent=11 // pred_check
          %p217 = pneg %p66
        $region14: #{discriminator_forward.11} parent=11 // pred_check_branch
          %219 = sbr.rel (%p217) target = $region16
        $region15: #{discriminator_forward.11} parent=11 // pred_region
          _
        $region16: #{discriminator_forward.11} parent=11 // pred_fallthru
          _
        // Predicated region
        $region17: #{discriminator_forward.11} parent=11 // pred_check
          %p220 = pneg %p87
        $region18: #{discriminator_forward.11} parent=11 // pred_check_branch
          %222 = sbr.rel (%p220) target = $region20
        $region19: #{discriminator_forward.11} parent=11 // pred_region
          _
        $region20: #{discriminator_forward.11} parent=11 // pred_fallthru
          _
        // Predicated region
        $region21: #{discriminator_forward.11} parent=11 // pred_check
          %p223 = pneg %p108
        $region22: #{discriminator_forward.11} parent=11 // pred_check_branch
          %225 = sbr.rel (%p223) target = $region24
        $region23: #{discriminator_forward.11} parent=11 // pred_region
          _
        $region24: #{discriminator_forward.11} parent=11 // pred_fallthru
          _
        // Predicated region
        $region25: #{discriminator_forward.11} parent=11 // pred_check
          %p226 = pneg %p129
        $region26: #{discriminator_forward.11} parent=11 // pred_check_branch
          %228 = sbr.rel (%p226) target = $region28
        $region27: #{discriminator_forward.11} parent=11 // pred_region
          _
        $region28: #{discriminator_forward.11} parent=11 // pred_fallthru
          _
        // Predicated region
        $region29: #{discriminator_forward.11} parent=11 // pred_check
          %p229 = pneg %p150
        $region30: #{discriminator_forward.11} parent=11 // pred_check_branch
          %231 = sbr.rel (%p229) target = $region32
        $region31: #{discriminator_forward.11} parent=11 // pred_region
          _
        $region32: #{discriminator_forward.11} parent=11 // pred_fallthru
          _
      $region12: #{discriminator_forward.11} parent=5 // pred_fallthru
        _
      %p232 = scmp.lt.s32.totalorder %s19, 2
      // Predicated region
      $region33: #{discriminator_forward.11} parent=5 // pred_check
        %p233 = pneg %p232
      $region34: #{discriminator_forward.11} parent=5 // pred_check_branch
        %235 = sbr.rel (%p233) target = $region36
      $region35: #{discriminator_forward.11} parent=5 // pred_region
        // Predicated region
        $region37: #{discriminator_forward.11} parent=35 // pred_check
          %p236 = pneg %p39
        $region38: #{discriminator_forward.11} parent=35 // pred_check_branch
          %238 = sbr.rel (%p236) target = $region40
        $region39: #{discriminator_forward.11} parent=35 // pred_region
          %p239 = scmp.lt.s32.totalorder %s19, 1
          %s240 = scalar_select %p239, %s19, 1
          %s241 = smul.addr %s240, 2
          %s242 = smul.addr %s241, 4
          %s243 = scalar_lea.vmem %s0, %s242
        $region40: #{discriminator_forward.11} parent=35 // pred_fallthru
          _
      $region36: #{discriminator_forward.11} parent=5 // pred_fallthru
        _
      %p244 = scmp.le.s32.totalorder 1, %s19
      %p245 = scmp.lt.s32.totalorder %s19, 3
      %p246 = pnand %p244, %p245
      %p247 = pneg %p246
      // Predicated region
      $region41: #{discriminator_forward.11} parent=5 // pred_check
        _
      $region42: #{discriminator_forward.11} parent=5 // pred_check_branch
        %249 = sbr.rel (%p246) target = $region44
      $region43: #{discriminator_forward.11} parent=5 // pred_region
        %s250 = ssub.s32 %s19, 1
        %p251 = scmp.lt.s32.totalorder %s24, 1
        %s252 = scalar_select %p251, %s24, 1
        %s253 = smul.addr %s252, 2
        %s254 = smul.addr %s253, 4
        %s255 = scalar_lea.vmem %s0, %s254
        %p256 = pneg %p45
        %p257 = pneg %p42
        %p258 = pneg %p66
        %p259 = pneg %p63
        %p260 = pneg %p87
        %p261 = pneg %p84
        %p262 = pneg %p108
        %p263 = pneg %p105
        %p264 = pneg %p129
        %p265 = pneg %p126
        %p266 = pneg %p150
        %p267 = pneg %p147
        %p268 = pneg %p176
        %p269 = pneg %p173
        %p270 = scmp.lt.s32.totalorder %s24, 1
        %s271 = scalar_select %p270, %s24, 1
        %s272 = scalar_lea.vmem %s6, %s271
        %p273 = pneg %p202
        %p274 = pneg %p199
        %s275 = sand.u32 %s189, 1
        %s276 = scalar_lea.sflag [#allocation5], %s275
        %s277 = sand.u32 %s189, 1
        %s278 = smul.addr %s277, 16
        %s279 = scalar_lea.vmem [#allocation4], %s278
        %p280 = scmp.lt.s32.totalorder %s24, 1
        %s281 = scalar_select %p280, %s24, 1
        %s282 = smul.addr %s281, 2
        %s283 = smul.addr %s282, 4
        %s284 = scalar_lea.vmem %s0, %s283
        %p285 = scmp.lt.s32.totalorder %s24, 1
        %s286 = scalar_select %p285, %s24, 1
        %s287 = scalar_lea.vmem %s6, %s286
        %v289 = vld [vmem:[%s284] sm:$0xf]
        %v290 = vld [vmem:[%s284 + $0x4] sm:$0xf]
        %v291 = vld [vmem:[%s1] sm:$0xf]
        %v292 = vld [vmem:[%s1 + $0x4] sm:$0xf]
        %v293 = vld [vmem:[%s1 + $0x8] sm:$0xf]
        %v294 = vld [vmem:[%s1 + $0xc] sm:$0xf]
        %v295 = vld [vmem:[%s1 + $0x10] sm:$0xf]
        %v296 = vld [vmem:[%s1 + $0x14] sm:$0xf]
        %v297 = vld [vmem:[%s1 + $0x18] sm:$0xf]
        %v298 = vld [vmem:[%s1 + $0x1c] sm:$0xf]
        %v299 = vld [vmem:[%s2] sm:$0x1]
        %v301 = vperm.slane %v299, 0
        %v305 = vunpack.c.l.b16 %v289
        %v306 = vunpack.c.l.b16 %v290
        %v307 = vpack.c.b16 %v306, %v305
        %v316 = vunpack.c.l.b16 %v291
        %v317 = vunpack.c.l.b16 %v292
        %v318 = vunpack.c.l.b16 %v293
        %v319 = vunpack.c.l.b16 %v294
        %v320 = vunpack.c.l.b16 %v295
        %v321 = vunpack.c.l.b16 %v296
        %v322 = vunpack.c.l.b16 %v297
        %v323 = vunpack.c.l.b16 %v298
        %v324 = vpack.c.b16 %v317, %v316
        %v325 = vpack.c.b16 %v319, %v318
        %v326 = vpack.c.b16 %v321, %v320
        %v327 = vpack.c.b16 %v323, %v322
        %vm332 = vcmask 523264
        %v334 = vsel %vm332, %v307, 0
        %336 = vmatpush.bf16.msra.mxu0 0
        %337 = vmatpush.bf16.msra.mxu0 0
        %338 = vmatpush.bf16.msra.mxu0 0
        %339 = vmatpush.bf16.msra.mxu0 0
        %340 = vmatpush.bf16.msra.mxu0 %v327
        %341 = vmatpush.bf16.msra.mxu0 %v326
        %342 = vmatpush.bf16.msra.mxu0 %v325
        %343 = vmatpush.bf16.msra.mxu0 %v324
        %344 = vmatmul.bf16.gmra.mxu0 %v334
        %v345 = vpop.f32.mrf.mxu0
        %v346 = vadd.f32 %v301, %v345
        %v347 = vpop.f32.mrf.mxu0
        %v348 = vadd.f32 %v301, %v347
        %349 = vdwg.mxu0
        %v350 = vpack.c.bf16 %v348, %v346
        %352 = vrot.lane.b32.xlu0 %v350, 120
        %v353 = vpop.permute.xlu0 %352
        %vm354 = vcmask 64512
        %v356 = vsel %vm354, %v353, 0
        %v359 = vsel %vm354, %v350, 0
        %361 = vmatpush.bf16.xpose.msra.mxu0 0
        %362 = vmatpush.bf16.xpose.msra.mxu0 0
        %363 = vmatpush.bf16.xpose.msra.mxu0 0
        %364 = vmatpush.bf16.xpose.msra.mxu0 0
        %365 = vmatpush.bf16.xpose.msra.mxu0 0
        %366 = vmatpush.bf16.xpose.msra.mxu0 0
        %367 = vmatpush.bf16.xpose.msra.mxu0 0
        %368 = vmatpush.bf16.xpose.msra.mxu0 %v359
        %369 = vmatmul.bf16.gmra.mxu0 %v356
        %v370 = vpop.f32.mrf.mxu0
        %v371 = vadd.f32 0.0, %v370
        %v372 = vpop.f32.mrf.mxu0
        %v373 = vadd.f32 0.0, %v372
        %374 = vdwg.mxu0
        %vm375 = vcmask 130048
        %v376 = vsel %vm375, %v371, -inf
        %377 = vmax.xlane.f32.xlu0 %v376
        %v378 = vpop.xlane.xlu0 %377
        %v379 = vsel %vm375, %v373, -inf
        %380 = vmax.xlane.f32.xlu0 %v379
        %v381 = vpop.xlane.xlu0 %380
        %v382 = vsub.f32 %v371, %v378
        %v383 = vsub.f32 %v373, %v381
        %v384 = vmul.f32 %v382, 1.442695
        %v385 = vpow.pop %v384
        %v386 = vmul.f32 %v383, 1.442695
        %v387 = vpow.pop %v386
        %v388 = vsel %vm375, %v385, 0.0
        %389 = vadd.xlane.f32.xlu0 %v388
        %v390 = vpop.xlane.xlu0 %389
        %v391 = vsel %vm375, %v387, 0.0
        %392 = vadd.xlane.f32.xlu0 %v391
        %v393 = vpop.xlane.xlu0 %392
        %v394 = vrcp.pop %v390
        %v395 = vrcp.pop %v393
        %v396 = vmul.f32 %v385, %v394
        %v397 = vmul.f32 %v387, %v395
        %398 = vst.msk [vmem:[%s279] sm:$0xff] %vm375, %v396
        %399 = vst.msk [vmem:[%s279 + $0x8] sm:$0xff] %vm375, %v397
        %v400 = vpack.c.bf16 %v397, %v396
        %401 = vrot.lane.b32.xlu0 %v350, 112
        %v402 = vpop.permute.xlu0 %401
        %v405 = vsel %vm375, %v400, 0
        %407 = vmatpush.bf16.msra.mxu0 0
        %408 = vmatpush.bf16.msra.mxu0 0
        %409 = vmatpush.bf16.msra.mxu0 0
        %410 = vmatpush.bf16.msra.mxu0 0
        %411 = vmatpush.bf16.msra.mxu0 0
        %412 = vmatpush.bf16.msra.mxu0 0
        %413 = vmatpush.bf16.msra.mxu0 0
        %414 = vmatpush.bf16.msra.mxu0 %v402
        %415 = vmatmul.bf16.gmra.mxu0 %v405
        %v416 = vpop.f32.mrf.mxu0
        %v417 = vadd.f32 0.0, %v416
        %v418 = vpop.f32.mrf.mxu0
        %v419 = vadd.f32 0.0, %v418
        %420 = vdwg.mxu0
        %v421 = vunpack.c.l.bf16 %v289
        %v422 = vunpack.c.l.bf16 %v290
        %s423 = sld [smem:[#allocation2]]
        %v424 = vstv %s423
        %v425 = vmul.f32 %v424, %v417
        %v426 = vmul.f32 %v424, %v419
        %v427 = vadd.f32 %v421, %v425
        %v428 = vadd.f32 %v422, %v426
        %v429 = vld [vmem:[%s4] sm:$0xf]
        %v430 = vld [vmem:[%s4 + $0x4] sm:$0xf]
        %v431 = vunpack.c.l.bf16 %v429
        %v432 = vunpack.c.l.bf16 %v430
        %v433 = vmul.f32 %v427, %v431
        %v434 = vmul.f32 %v428, %v432
        %v435 = vsel %vm332, %v433, 0.0
        %436 = vadd.xlane.f32.xlu0 %v435
        %v437 = vpop.xlane.xlu0 %436
        %v438 = vsel %vm332, %v434, 0.0
        %439 = vadd.xlane.f32.xlu0 %v438
        %v440 = vpop.xlane.xlu0 %439
        %v441 = vadd.f32 %v437, %v440
        %v442 = vrot.slane %v441, 4
        %v443 = vadd.f32 %v441, %v442
        %v444 = vrot.slane %v443, 2
        %v445 = vadd.f32 %v443, %v444
        %v446 = vrot.slane %v445, 1
        %v447 = vadd.f32 %v445, %v446
        %s448 = sld [smem:[#allocation3]]
        %v449 = vstv %s448
        %v450 = vadd.f32 %v447, %v449
        %vm451 = vcmask 0
        %452 = vst.msk [vmem:[%s287] sm:$0x1] %vm451, %v450
        %p453 = scmp.lt.s32.totalorder %s24, 1
        %s454 = scalar_select %p453, %s24, 1
        %s455 = scalar_lea.vmem %s6, %s454
        %s456 = sand.u32 %s189, 1
        %s457 = scalar_lea.sflag [#allocation5], %s456
        %s458 = sand.u32 %s189, 1
        %s459 = smul.addr %s458, 16
        %s460 = scalar_lea.vmem [#allocation4], %s459
        // Predicated region
        $region45: #{discriminator_forward.11} parent=43 // pred_check
          %p461 = pneg %p173
        $region46: #{discriminator_forward.11} parent=43 // pred_check_branch
          %463 = sbr.rel (%p461) target = $region48
        $region47: #{discriminator_forward.11} parent=43 // pred_region
          _
        $region48: #{discriminator_forward.11} parent=43 // pred_fallthru
          _
        // Predicated region
        $region49: #{discriminator_forward.11} parent=43 // pred_check
          %p464 = pneg %p199
        $region50: #{discriminator_forward.11} parent=43 // pred_check_branch
          %466 = sbr.rel (%p464) target = $region52
        $region51: #{discriminator_forward.11} parent=43 // pred_region
          %468 = vsyncadd %s457, 0
          %s469 = smul.addr %s24, 2
          %s470 = smul.addr %s469, 8
          %s471 = scalar_lea.hbm %s7, %s470
          %s472 = sshll.u32 %s460, 4
          %s473 = int_to_ptr.vmem [resolvable:$true] %s472
          %s474 = sshll.u32 %s471, 4
          %s475 = int_to_ptr.hbm [resolvable:$true] %s474
          %480 = dma.vmem_to_hbm [thread:$0]  %s473, 256, %s475, %s457, 128, 128, 8
        $region52: #{discriminator_forward.11} parent=43 // pred_fallthru
          _
      $region44: #{discriminator_forward.11} parent=5 // pred_fallthru
        _
      %p481 = scmp.le.s32.totalorder 2, %s19
      // Predicated region
      $region53: #{discriminator_forward.11} parent=5 // pred_check
        %p482 = pneg %p481
      $region54: #{discriminator_forward.11} parent=5 // pred_check_branch
        %484 = sbr.rel (%p482) target = $region56
      $region55: #{discriminator_forward.11} parent=5 // pred_region
        %s485 = ssub.s32 %s19, 2
        // Predicated region
        $region57: #{discriminator_forward.11} parent=55 // pred_check
          %p486 = pneg %p179
        $region58: #{discriminator_forward.11} parent=55 // pred_check_branch
          %488 = sbr.rel (%p486) target = $region60
        $region59: #{discriminator_forward.11} parent=55 // pred_region
          %p489 = scmp.lt.s32.totalorder %s25, 1
          %s490 = scalar_select %p489, %s25, 1
          %s491 = scalar_lea.vmem %s6, %s490
        $region60: #{discriminator_forward.11} parent=55 // pred_fallthru
          _
        // Predicated region
        $region61: #{discriminator_forward.11} parent=55 // pred_check
          %p492 = pneg %p205
        $region62: #{discriminator_forward.11} parent=55 // pred_check_branch
          %494 = sbr.rel (%p492) target = $region64
        $region63: #{discriminator_forward.11} parent=55 // pred_region
          %s495 = sand.u32 %s190, 1
          %s496 = scalar_lea.sflag [#allocation5], %s495
          %s497 = sand.u32 %s190, 1
          %s498 = smul.addr %s497, 16
          %s499 = scalar_lea.vmem [#allocation4], %s498
          %501 = dma.done %s496, 256
        $region64: #{discriminator_forward.11} parent=55 // pred_fallthru
          _
      $region56: #{discriminator_forward.11} parent=5 // pred_fallthru
        _
    $region6: #{discriminator_forward.11} parent=1 // loop_footer
      %s23 = sadd.s32 1, %s19
    $region7: #{discriminator_forward.11} parent=1 // loop_footer_branch
      %18 = sbr.rel target = $region3
    $region8: #{discriminator_forward.11} parent=1 // loop_exit
      _
    %502 = vsyncpa [#allocation5], 1
    %s503 = scalar_lea.sflag [#allocation5], 1
    %504 = vsyncpa %s503, 1

</llo_original>
